<compile_context>
chip_gen: v5e
topology: v5e:2x2
jax: 0.10.0
libtpu: 0.0.40
codegen_flags: <defaults>
</compile_context>

<pallas_src>
import math
import jax
import jax.numpy as jnp
from jax import lax
from jax.experimental import pallas as pl
from jax.experimental.pallas import tpu as pltpu


# ----------------------------------------------------------------------------
# Fused LSA kernel: grid over batch, everything VMEM-resident.
# ----------------------------------------------------------------------------
def _make_lsa_kernel(num_layers, num_heads, head_dim, eps=1e-5):
    scale = 1.0 / math.sqrt(head_dim)

    def kernel(seq_len_ref,            # SMEM (B,) int32  [scalar prefetch]
               base_ref,               # (1, S, in_size)  f32
               fiw_ref,                # (in_size, D)     bf16
               fib_ref,                # (1, D)           f32
               wqkv_ref,               # (L, D, 3D)       bf16   [Wq | Wk | Wv]
               bqkv_ref,               # (L, 1, 3D)       f32
               wo_ref,                 # (L, D, D)        bf16
               bo_ref,                 # (L, 1, D)        f32
               gamma_ref, beta_ref,    # (L, 1, D)        f32
               o_ref,                  # (1, S, D)        f32
               ctx_scratch):           # VMEM (S, D)      f32
        b = pl.program_id(0)

        # ---- Linear + ReLU: one full-width matmul ----------------------------
        x0 = base_ref[0].astype(jnp.bfloat16)                         # (S, in)
        h = jnp.dot(x0, fiw_ref[...], preferred_element_type=jnp.float32)
        h = jnp.maximum(h + fib_ref[...], 0.0)                        # (S, D) f32

        S, D = h.shape
        H, hd = num_heads, head_dim
        inv_n = 1.0 / float(S * D)

        # Additive key-padding bias, built once, shared by all layers/heads:
        # key position k is valid iff k < seq_len[b].
        kpos = lax.broadcasted_iota(jnp.int32, (S, S), 1)
        mask_bias = jnp.where(kpos < seq_len_ref[b],
                              jnp.float32(0.0), jnp.float32(-1e30))   # (S, S)

        # ---- attention layers (static unroll; L is small) --------------------
        for l in range(num_layers):
            hb = h.astype(jnp.bfloat16)

            # Fused QKV projection: single (S,D)x(D,3D) MXU op, f32 accumulation.
            qkv = jnp.dot(hb, wqkv_ref[l],
                          preferred_element_type=jnp.float32) + bqkv_ref[l]

            # Per-head masked attention.  head_dim is tiny (4), so the score /
            # context matmuls are inherently small; the projections (the real
            # MXU work) are already fused above.
            for hh in range(H):
                lo = hh * hd
                q_h = qkv[:, lo:lo + hd]                               # (S, hd)
                k_h = qkv[:, D + lo:D + lo + hd]                       # (S, hd)
                v_h = qkv[:, 2 * D + lo:2 * D + lo + hd]               # (S, hd)

                s_h = lax.dot_general(
                    q_h, k_h, (((1,), (1,)), ((), ())),
                    preferred_element_type=jnp.float32) * scale        # (S, S)
                s_h = s_h + mask_bias
                s_h = s_h - jnp.max(s_h, axis=-1, keepdims=True)
                p_h = jnp.exp(s_h)
                p_h = p_h * pl.reciprocal(
                    jnp.sum(p_h, axis=-1, keepdims=True), approx=True)

                # Head slice written lane-contiguously into the (S, D) scratch.
                ctx_scratch[:, lo:lo + hd] = jnp.dot(
                    p_h, v_h, preferred_element_type=jnp.float32)

            # Fused output projection: single (S,D)x(D,D) MXU op.
            attn = jnp.dot(ctx_scratch[...].astype(jnp.bfloat16), wo_ref[l],
                           preferred_element_type=jnp.float32) + bo_ref[l]

            # Residual + LayerNorm over last 2 dims (S, D), two-pass statistics.
            y = h + attn
            mean = jnp.sum(y) * inv_n
            yc = y - mean
            var = jnp.sum(yc * yc) * inv_n
            h = yc * lax.rsqrt(var + eps) * gamma_ref[l] + beta_ref[l]

        # ---- final Tanh -------------------------------------------------------
        o_ref[0] = jnp.tanh(h).astype(o_ref.dtype)

    return kernel


# ----------------------------------------------------------------------------
# Host-side weight repacking: fuse Wq|Wk|Wv, cast MXU weights to bf16.
# Weights are stored (in_features, out_features); biases are 1-D.
# ----------------------------------------------------------------------------
def pack_lsa_params(fi_w, fi_b, layer_params):
    D = fi_w.shape[1]
    wqkv, bqkv, wo_s, bo_s, g_s, be_s = [], [], [], [], [], []
    for (wq, wk, wv, wo, bq, bk, bv, bo, gamma, beta) in layer_params:
        wqkv.append(jnp.concatenate([wq, wk, wv], axis=1))             # (D, 3D)
        bqkv.append(jnp.concatenate([bq, bk, bv]).reshape(1, 3 * D))   # (1, 3D)
        wo_s.append(wo)                                                # (D, D)
        bo_s.append(bo.reshape(1, D))
        g_s.append(gamma.reshape(1, D))
        be_s.append(beta.reshape(1, D))
    stk = lambda xs: jnp.stack(xs, axis=0)
    return (fi_w.astype(jnp.bfloat16),
            fi_b.reshape(1, D).astype(jnp.float32),
            stk(wqkv).astype(jnp.bfloat16),
            stk(bqkv).astype(jnp.float32),
            stk(wo_s).astype(jnp.bfloat16),
            stk(bo_s).astype(jnp.float32),
            stk(g_s).astype(jnp.float32),
            stk(be_s).astype(jnp.float32))


# ----------------------------------------------------------------------------
# LSA forward: Tanh(SelfAttention(ReLU(Linear(base)), seq_len)) -- one kernel.
# ----------------------------------------------------------------------------
def lsa_forward(base, seq_len, packed, num_heads):
    fiw, fib, wqkv, bqkv, wo, bo, gamma, beta = packed
    B, S, in_size = base.shape
    D = fiw.shape[1]
    L = wqkv.shape[0]
    hd = D // num_heads

    kernel = _make_lsa_kernel(L, num_heads, hd)

    def rep(shape):
        # Grid-invariant (weight-like) input: same block index every step, so
        # it stays resident (Pallas skips re-copying an unchanged block).
        return pl.BlockSpec(shape, lambda b, sl, _nd=len(shape): (0,) * _nd)

    grid_spec = pltpu.PrefetchScalarGridSpec(
        num_scalar_prefetch=1,
        grid=(B,),
        in_specs=[
            pl.BlockSpec((1, S, in_size), lambda b, sl: (b, 0, 0)),
            rep((in_size, D)), rep((1, D)),
            rep((L, D, 3 * D)), rep((L, 1, 3 * D)),
            rep((L, D, D)), rep((L, 1, D)),
            rep((L, 1, D)), rep((L, 1, D)),
        ],
        out_specs=pl.BlockSpec((1, S, D), lambda b, sl: (b, 0, 0)),
        scratch_shapes=[pltpu.VMEM((S, D), jnp.float32)],
    )
    return pl.pallas_call(
        kernel,
        out_shape=jax.ShapeDtypeStruct((B, S, D), jnp.float32),
        grid_spec=grid_spec,
        # "parallel" gives one batch element to each TensorCore on v7x; on
        # single-TC v5e/v6e the batch grid is just a short serial loop.
        compiler_params=pltpu.CompilerParams(dimension_semantics=("parallel",)),
    )(seq_len, base, fiw, fib, wqkv, bqkv, wo, bo, gamma, beta)


# ----------------------------------------------------------------------------
# Pure-JAX reference (same inferred semantics, f32) for a sanity check.
# ----------------------------------------------------------------------------
def lsa_reference(base, seq_len, fi_w, fi_b, layer_params, num_heads):
    B, S, _ = base.shape
    D = fi_w.shape[1]
    hd = D // num_heads
    h = jnp.maximum(jnp.einsum('bsi,io->bso', base, fi_w) + fi_b, 0.0)
    valid = (jnp.arange(S)[None, :] < seq_len[:, None])[:, None, None, :]  # (B,1,1,S)
    for (wq, wk, wv, wo, bq, bk, bv, bo, gamma, beta) in layer_params:
        q = (h @ wq + bq).reshape(B, S, num_heads, hd)
        k = (h @ wk + bk).reshape(B, S, num_heads, hd)
        v = (h @ wv + bv).reshape(B, S, num_heads, hd)
        scores = jnp.einsum('bqhd,bkhd->bhqk', q, k) / math.sqrt(hd)
        scores = jnp.where(valid, scores, -1e30)
        p = jax.nn.softmax(scores, axis=-1)
        ctx = jnp.einsum('bhqk,bkhd->bqhd', p, v).reshape(B, S, D)
        y = h + ctx @ wo + bo
        mean = jnp.mean(y, axis=(1, 2), keepdims=True)
        var = jnp.mean((y - mean) ** 2, axis=(1, 2), keepdims=True)
        h = (y - mean) / jnp.sqrt(var + 1e-5) * gamma + beta
    return jnp.tanh(h)


if __name__ == "__main__":
    # Small shapes consistent with the module: out_size divisible by 10 heads.
    B, S = 2, 8
    in_size, out_size = 16, 40
    num_layers, num_heads = 2, 10

    key = jax.random.PRNGKey(0)
    k_base, k_fi_w, k_fi_b, k_layers = jax.random.split(key, 4)

    base = jax.random.normal(k_base, (B, S, in_size), dtype=jnp.float32)
    seq_len = jnp.array([8, 5], dtype=jnp.int32)

    fi_w = 0.1 * jax.random.normal(k_fi_w, (in_size, out_size), dtype=jnp.float32)
    fi_b = 0.1 * jax.random.normal(k_fi_b, (out_size,), dtype=jnp.float32)

    layer_params = []
    lkeys = jax.random.split(k_layers, num_layers)
    for lk in lkeys:
        ks = jax.random.split(lk, 8)
        wq = 0.1 * jax.random.normal(ks[0], (out_size, out_size), dtype=jnp.float32)
        wk = 0.1 * jax.random.normal(ks[1], (out_size, out_size), dtype=jnp.float32)
        wv = 0.1 * jax.random.normal(ks[2], (out_size, out_size), dtype=jnp.float32)
        wo = 0.1 * jax.random.normal(ks[3], (out_size, out_size), dtype=jnp.float32)
        bq = 0.05 * jax.random.normal(ks[4], (out_size,), dtype=jnp.float32)
        bk = 0.05 * jax.random.normal(ks[5], (out_size,), dtype=jnp.float32)
        bv = 0.05 * jax.random.normal(ks[6], (out_size,), dtype=jnp.float32)
        bo = 0.05 * jax.random.normal(ks[7], (out_size,), dtype=jnp.float32)
        gamma = jnp.ones((out_size,), dtype=jnp.float32)
        beta = jnp.zeros((out_size,), dtype=jnp.float32)
        layer_params.append((wq, wk, wv, wo, bq, bk, bv, bo, gamma, beta))

    packed = pack_lsa_params(fi_w, fi_b, layer_params)

    out = lsa_forward(base, seq_len, packed, num_heads)
    out = jax.block_until_ready(out)

    assert out.shape == (B, S, out_size)
    assert bool(jnp.all(jnp.isfinite(out)))

    ref = lsa_reference(base, seq_len, fi_w, fi_b, layer_params, num_heads)
    err = float(jnp.max(jnp.abs(out - ref)))
    assert err < 5e-2, f"max abs err {err}"

    print("KERNEL_OK")
</pallas_src>

<mosaic_0001>
module attributes {stable_mosaic.version = 11 : i64} {
  func.func @kernel(%arg0: i32, %arg1: memref<2xi32, #tpu.memory_space<smem>>, %arg2: memref<1x8x16xf32, #tpu.memory_space<vmem>>, %arg3: memref<16x40xbf16, #tpu.memory_space<vmem>>, %arg4: memref<1x40xf32, #tpu.memory_space<vmem>>, %arg5: memref<2x40x120xbf16, #tpu.memory_space<vmem>>, %arg6: memref<2x1x120xf32, #tpu.memory_space<vmem>>, %arg7: memref<2x40x40xbf16, #tpu.memory_space<vmem>>, %arg8: memref<2x1x40xf32, #tpu.memory_space<vmem>>, %arg9: memref<2x1x40xf32, #tpu.memory_space<vmem>>, %arg10: memref<2x1x40xf32, #tpu.memory_space<vmem>>, %arg11: memref<1x8x40xf32, #tpu.memory_space<vmem>>, %arg12: memref<8x40xf32, #tpu.memory_space<vmem>>) attributes {dimension_semantics = [#tpu.dimension_semantics<parallel>], iteration_bounds = array<i64: 2>, scalar_prefetch = 1 : i64, scratch_operands = 1 : i64, tpu.core_type = #tpu.core_type<tc>, window_params = [{transform_indices = @transform_0, window_bounds = array<i64: 1, 8, 16>}, {pipeline_mode = #tpu.pipeline_mode<synchronous>, transform_indices = @transform_1, window_bounds = array<i64: 16, 40>}, {pipeline_mode = #tpu.pipeline_mode<synchronous>, transform_indices = @transform_2, window_bounds = array<i64: 1, 40>}, {pipeline_mode = #tpu.pipeline_mode<synchronous>, transform_indices = @transform_3, window_bounds = array<i64: 2, 40, 120>}, {pipeline_mode = #tpu.pipeline_mode<synchronous>, transform_indices = @transform_4, window_bounds = array<i64: 2, 1, 120>}, {pipeline_mode = #tpu.pipeline_mode<synchronous>, transform_indices = @transform_5, window_bounds = array<i64: 2, 40, 40>}, {pipeline_mode = #tpu.pipeline_mode<synchronous>, transform_indices = @transform_6, window_bounds = array<i64: 2, 1, 40>}, {pipeline_mode = #tpu.pipeline_mode<synchronous>, transform_indices = @transform_7, window_bounds = array<i64: 2, 1, 40>}, {pipeline_mode = #tpu.pipeline_mode<synchronous>, transform_indices = @transform_8, window_bounds = array<i64: 2, 1, 40>}, {transform_indices = @transform_9, window_bounds = array<i64: 1, 8, 40>}]} {
    %c0 = arith.constant 0 : index
    %c0_0 = arith.constant 0 : index
    %c0_1 = arith.constant 0 : index
    %0 = vector.load %arg2[%c0, %c0_0, %c0_1] : memref<1x8x16xf32, #tpu.memory_space<vmem>>, vector<1x8x16xf32>
    %1 = vector.shape_cast %0 : vector<1x8x16xf32> to vector<8x16xf32>
    %2 = arith.truncf %1 : vector<8x16xf32> to vector<8x16xbf16>
    %c0_2 = arith.constant 0 : index
    %c0_3 = arith.constant 0 : index
    %3 = vector.load %arg3[%c0_2, %c0_3] : memref<16x40xbf16, #tpu.memory_space<vmem>>, vector<16x40xbf16>
    %cst = arith.constant dense<0.000000e+00> : vector<8x40xf32>
    %4 = tpu.matmul %2, %3, %cst {dimension_numbers = #tpu.dot_dimension_numbers<[1], [0], [0], [1], [0, 0, 1, 1], [], []>} : vector<8x16xbf16>, vector<16x40xbf16>, vector<8x40xf32> -> vector<8x40xf32>
    %c0_4 = arith.constant 0 : index
    %c0_5 = arith.constant 0 : index
    %5 = vector.load %arg4[%c0_4, %c0_5] : memref<1x40xf32, #tpu.memory_space<vmem>>, vector<1x40xf32>
    %6 = vector.broadcast %5 : vector<1x40xf32> to vector<8x40xf32>
    %7 = arith.addf %4, %6 : vector<8x40xf32>
    %cst_6 = arith.constant 0.000000e+00 : f32
    %8 = vector.broadcast %cst_6 : f32 to vector<8x40xf32>
    %9 = arith.maximumf %7, %8 : vector<8x40xf32>
    %10 = tpu.iota {dimensions = array<i32: 1>} : vector<8x8xi32>
    %11 = arith.index_cast %arg0 : i32 to index
    %12 = memref.load %arg1[%11] : memref<2xi32, #tpu.memory_space<smem>>
    %13 = vector.broadcast %12 : i32 to vector<8x8xi32>
    %14 = arith.cmpi slt, %10, %13 : vector<8x8xi32>
    %cst_7 = arith.constant 0.000000e+00 : f32
    %cst_8 = arith.constant -1.000000e+30 : f32
    %15 = vector.broadcast %cst_7 : f32 to vector<8x8xf32>
    %16 = vector.broadcast %cst_8 : f32 to vector<8x8xf32>
    %17 = arith.select %14, %15, %16 : vector<8x8xi1>, vector<8x8xf32>
    %18 = arith.truncf %9 : vector<8x40xf32> to vector<8x40xbf16>
    %c0_9 = arith.constant 0 : index
    %c0_10 = arith.constant 0 : index
    %c0_11 = arith.constant 0 : index
    %19 = vector.load %arg5[%c0_9, %c0_10, %c0_11] : memref<2x40x120xbf16, #tpu.memory_space<vmem>>, vector<1x40x120xbf16>
    %20 = vector.shape_cast %19 : vector<1x40x120xbf16> to vector<40x120xbf16>
    %cst_12 = arith.constant dense<0.000000e+00> : vector<8x120xf32>
    %21 = tpu.matmul %18, %20, %cst_12 {dimension_numbers = #tpu.dot_dimension_numbers<[1], [0], [0], [1], [0, 0, 1, 1], [], []>} : vector<8x40xbf16>, vector<40x120xbf16>, vector<8x120xf32> -> vector<8x120xf32>
    %c0_13 = arith.constant 0 : index
    %c0_14 = arith.constant 0 : index
    %c0_15 = arith.constant 0 : index
    %22 = vector.load %arg6[%c0_13, %c0_14, %c0_15] : memref<2x1x120xf32, #tpu.memory_space<vmem>>, vector<1x1x120xf32>
    %23 = vector.shape_cast %22 : vector<1x1x120xf32> to vector<1x120xf32>
    %24 = vector.broadcast %23 : vector<1x120xf32> to vector<8x120xf32>
    %25 = arith.addf %21, %24 : vector<8x120xf32>
    %26 = vector.extract_strided_slice %25 {offsets = [0, 0], sizes = [8, 4], strides = [1, 1]} : vector<8x120xf32> to vector<8x4xf32>
    %27 = vector.extract_strided_slice %25 {offsets = [0, 40], sizes = [8, 4], strides = [1, 1]} : vector<8x120xf32> to vector<8x4xf32>
    %28 = vector.extract_strided_slice %25 {offsets = [0, 80], sizes = [8, 4], strides = [1, 1]} : vector<8x120xf32> to vector<8x4xf32>
    %cst_16 = arith.constant dense<0.000000e+00> : vector<8x8xf32>
    %29 = tpu.matmul %26, %27, %cst_16 {dimension_numbers = #tpu.dot_dimension_numbers<[1], [1], [0], [0], [0, 0, 1, 0], [], []>} : vector<8x4xf32>, vector<8x4xf32>, vector<8x8xf32> -> vector<8x8xf32>
    %cst_17 = arith.constant 5.000000e-01 : f32
    %30 = vector.broadcast %cst_17 : f32 to vector<8x8xf32>
    %31 = arith.mulf %29, %30 : vector<8x8xf32>
    %32 = arith.addf %31, %17 : vector<8x8xf32>
    %cst_18 = arith.constant dense<0xFF800000> : vector<8xf32>
    %33 = vector.multi_reduction <maximumf>, %32, %cst_18 [1] : vector<8x8xf32> to vector<8xf32>
    %34 = vector.shape_cast %33 : vector<8xf32> to vector<8x1xf32>
    %35 = vector.broadcast %34 : vector<8x1xf32> to vector<8x8xf32>
    %36 = arith.subf %32, %35 : vector<8x8xf32>
    %37 = math.exp %36 : vector<8x8xf32>
    %cst_19 = arith.constant dense<0.000000e+00> : vector<8xf32>
    %38 = vector.multi_reduction <add>, %37, %cst_19 [1] : vector<8x8xf32> to vector<8xf32>
    %39 = vector.shape_cast %38 : vector<8xf32> to vector<8x1xf32>
    %40 = tpu.reciprocal %39 {approx = true} : vector<8x1xf32> -> vector<8x1xf32>
    %41 = vector.broadcast %40 : vector<8x1xf32> to vector<8x8xf32>
    %42 = arith.mulf %37, %41 : vector<8x8xf32>
    %cst_20 = arith.constant dense<0.000000e+00> : vector<8x4xf32>
    %43 = tpu.matmul %42, %28, %cst_20 {dimension_numbers = #tpu.dot_dimension_numbers<[1], [0], [0], [1], [0, 0, 1, 1], [], []>} : vector<8x8xf32>, vector<8x4xf32>, vector<8x4xf32> -> vector<8x4xf32>
    %c0_21 = arith.constant 0 : index
    %c0_22 = arith.constant 0 : index
    %44 = vector.load %arg12[%c0_21, %c0_22] : memref<8x40xf32, #tpu.memory_space<vmem>>, vector<8x4xf32>
    tpu.vector_store %arg12[%c0_21, %c0_22], %43 {strides = array<i32>} : memref<8x40xf32, #tpu.memory_space<vmem>>, vector<8x4xf32>,
    %45 = vector.extract_strided_slice %25 {offsets = [0, 4], sizes = [8, 4], strides = [1, 1]} : vector<8x120xf32> to vector<8x4xf32>
    %46 = vector.extract_strided_slice %25 {offsets = [0, 44], sizes = [8, 4], strides = [1, 1]} : vector<8x120xf32> to vector<8x4xf32>
    %47 = vector.extract_strided_slice %25 {offsets = [0, 84], sizes = [8, 4], strides = [1, 1]} : vector<8x120xf32> to vector<8x4xf32>
    %cst_23 = arith.constant dense<0.000000e+00> : vector<8x8xf32>
    %48 = tpu.matmul %45, %46, %cst_23 {dimension_numbers = #tpu.dot_dimension_numbers<[1], [1], [0], [0], [0, 0, 1, 0], [], []>} : vector<8x4xf32>, vector<8x4xf32>, vector<8x8xf32> -> vector<8x8xf32>
    %cst_24 = arith.constant 5.000000e-01 : f32
    %49 = vector.broadcast %cst_24 : f32 to vector<8x8xf32>
    %50 = arith.mulf %48, %49 : vector<8x8xf32>
    %51 = arith.addf %50, %17 : vector<8x8xf32>
    %cst_25 = arith.constant dense<0xFF800000> : vector<8xf32>
    %52 = vector.multi_reduction <maximumf>, %51, %cst_25 [1] : vector<8x8xf32> to vector<8xf32>
    %53 = vector.shape_cast %52 : vector<8xf32> to vector<8x1xf32>
    %54 = vector.broadcast %53 : vector<8x1xf32> to vector<8x8xf32>
    %55 = arith.subf %51, %54 : vector<8x8xf32>
    %56 = math.exp %55 : vector<8x8xf32>
    %cst_26 = arith.constant dense<0.000000e+00> : vector<8xf32>
    %57 = vector.multi_reduction <add>, %56, %cst_26 [1] : vector<8x8xf32> to vector<8xf32>
    %58 = vector.shape_cast %57 : vector<8xf32> to vector<8x1xf32>
    %59 = tpu.reciprocal %58 {approx = true} : vector<8x1xf32> -> vector<8x1xf32>
    %60 = vector.broadcast %59 : vector<8x1xf32> to vector<8x8xf32>
    %61 = arith.mulf %56, %60 : vector<8x8xf32>
    %cst_27 = arith.constant dense<0.000000e+00> : vector<8x4xf32>
    %62 = tpu.matmul %61, %47, %cst_27 {dimension_numbers = #tpu.dot_dimension_numbers<[1], [0], [0], [1], [0, 0, 1, 1], [], []>} : vector<8x8xf32>, vector<8x4xf32>, vector<8x4xf32> -> vector<8x4xf32>
    %c0_28 = arith.constant 0 : index
    %c4 = arith.constant 4 : index
    %63 = vector.load %arg12[%c0_28, %c4] : memref<8x40xf32, #tpu.memory_space<vmem>>, vector<8x4xf32>
    tpu.vector_store %arg12[%c0_28, %c4], %62 {strides = array<i32>} : memref<8x40xf32, #tpu.memory_space<vmem>>, vector<8x4xf32>,
    %64 = vector.extract_strided_slice %25 {offsets = [0, 8], sizes = [8, 4], strides = [1, 1]} : vector<8x120xf32> to vector<8x4xf32>
    %65 = vector.extract_strided_slice %25 {offsets = [0, 48], sizes = [8, 4], strides = [1, 1]} : vector<8x120xf32> to vector<8x4xf32>
    %66 = vector.extract_strided_slice %25 {offsets = [0, 88], sizes = [8, 4], strides = [1, 1]} : vector<8x120xf32> to vector<8x4xf32>
    %cst_29 = arith.constant dense<0.000000e+00> : vector<8x8xf32>
    %67 = tpu.matmul %64, %65, %cst_29 {dimension_numbers = #tpu.dot_dimension_numbers<[1], [1], [0], [0], [0, 0, 1, 0], [], []>} : vector<8x4xf32>, vector<8x4xf32>, vector<8x8xf32> -> vector<8x8xf32>
    %cst_30 = arith.constant 5.000000e-01 : f32
    %68 = vector.broadcast %cst_30 : f32 to vector<8x8xf32>
    %69 = arith.mulf %67, %68 : vector<8x8xf32>
    %70 = arith.addf %69, %17 : vector<8x8xf32>
    %cst_31 = arith.constant dense<0xFF800000> : vector<8xf32>
    %71 = vector.multi_reduction <maximumf>, %70, %cst_31 [1] : vector<8x8xf32> to vector<8xf32>
    %72 = vector.shape_cast %71 : vector<8xf32> to vector<8x1xf32>
    %73 = vector.broadcast %72 : vector<8x1xf32> to vector<8x8xf32>
    %74 = arith.subf %70, %73 : vector<8x8xf32>
    %75 = math.exp %74 : vector<8x8xf32>
    %cst_32 = arith.constant dense<0.000000e+00> : vector<8xf32>
    %76 = vector.multi_reduction <add>, %75, %cst_32 [1] : vector<8x8xf32> to vector<8xf32>
    %77 = vector.shape_cast %76 : vector<8xf32> to vector<8x1xf32>
    %78 = tpu.reciprocal %77 {approx = true} : vector<8x1xf32> -> vector<8x1xf32>
    %79 = vector.broadcast %78 : vector<8x1xf32> to vector<8x8xf32>
    %80 = arith.mulf %75, %79 : vector<8x8xf32>
    %cst_33 = arith.constant dense<0.000000e+00> : vector<8x4xf32>
    %81 = tpu.matmul %80, %66, %cst_33 {dimension_numbers = #tpu.dot_dimension_numbers<[1], [0], [0], [1], [0, 0, 1, 1], [], []>} : vector<8x8xf32>, vector<8x4xf32>, vector<8x4xf32> -> vector<8x4xf32>
    %c0_34 = arith.constant 0 : index
    %c8 = arith.constant 8 : index
    %82 = vector.load %arg12[%c0_34, %c8] : memref<8x40xf32, #tpu.memory_space<vmem>>, vector<8x4xf32>
    tpu.vector_store %arg12[%c0_34, %c8], %81 {strides = array<i32>} : memref<8x40xf32, #tpu.memory_space<vmem>>, vector<8x4xf32>,
    %83 = vector.extract_strided_slice %25 {offsets = [0, 12], sizes = [8, 4], strides = [1, 1]} : vector<8x120xf32> to vector<8x4xf32>
    %84 = vector.extract_strided_slice %25 {offsets = [0, 52], sizes = [8, 4], strides = [1, 1]} : vector<8x120xf32> to vector<8x4xf32>
    %85 = vector.extract_strided_slice %25 {offsets = [0, 92], sizes = [8, 4], strides = [1, 1]} : vector<8x120xf32> to vector<8x4xf32>
    %cst_35 = arith.constant dense<0.000000e+00> : vector<8x8xf32>
    %86 = tpu.matmul %83, %84, %cst_35 {dimension_numbers = #tpu.dot_dimension_numbers<[1], [1], [0], [0], [0, 0, 1, 0], [], []>} : vector<8x4xf32>, vector<8x4xf32>, vector<8x8xf32> -> vector<8x8xf32>
    %cst_36 = arith.constant 5.000000e-01 : f32
    %87 = vector.broadcast %cst_36 : f32 to vector<8x8xf32>
    %88 = arith.mulf %86, %87 : vector<8x8xf32>
    %89 = arith.addf %88, %17 : vector<8x8xf32>
    %cst_37 = arith.constant dense<0xFF800000> : vector<8xf32>
    %90 = vector.multi_reduction <maximumf>, %89, %cst_37 [1] : vector<8x8xf32> to vector<8xf32>
    %91 = vector.shape_cast %90 : vector<8xf32> to vector<8x1xf32>
    %92 = vector.broadcast %91 : vector<8x1xf32> to vector<8x8xf32>
    %93 = arith.subf %89, %92 : vector<8x8xf32>
    %94 = math.exp %93 : vector<8x8xf32>
    %cst_38 = arith.constant dense<0.000000e+00> : vector<8xf32>
    %95 = vector.multi_reduction <add>, %94, %cst_38 [1] : vector<8x8xf32> to vector<8xf32>
    %96 = vector.shape_cast %95 : vector<8xf32> to vector<8x1xf32>
    %97 = tpu.reciprocal %96 {approx = true} : vector<8x1xf32> -> vector<8x1xf32>
    %98 = vector.broadcast %97 : vector<8x1xf32> to vector<8x8xf32>
    %99 = arith.mulf %94, %98 : vector<8x8xf32>
    %cst_39 = arith.constant dense<0.000000e+00> : vector<8x4xf32>
    %100 = tpu.matmul %99, %85, %cst_39 {dimension_numbers = #tpu.dot_dimension_numbers<[1], [0], [0], [1], [0, 0, 1, 1], [], []>} : vector<8x8xf32>, vector<8x4xf32>, vector<8x4xf32> -> vector<8x4xf32>
    %c0_40 = arith.constant 0 : index
    %c12 = arith.constant 12 : index
    %101 = vector.load %arg12[%c0_40, %c12] : memref<8x40xf32, #tpu.memory_space<vmem>>, vector<8x4xf32>
    tpu.vector_store %arg12[%c0_40, %c12], %100 {strides = array<i32>} : memref<8x40xf32, #tpu.memory_space<vmem>>, vector<8x4xf32>,
    %102 = vector.extract_strided_slice %25 {offsets = [0, 16], sizes = [8, 4], strides = [1, 1]} : vector<8x120xf32> to vector<8x4xf32>
    %103 = vector.extract_strided_slice %25 {offsets = [0, 56], sizes = [8, 4], strides = [1, 1]} : vector<8x120xf32> to vector<8x4xf32>
    %104 = vector.extract_strided_slice %25 {offsets = [0, 96], sizes = [8, 4], strides = [1, 1]} : vector<8x120xf32> to vector<8x4xf32>
    %cst_41 = arith.constant dense<0.000000e+00> : vector<8x8xf32>
    %105 = tpu.matmul %102, %103, %cst_41 {dimension_numbers = #tpu.dot_dimension_numbers<[1], [1], [0], [0], [0, 0, 1, 0], [], []>} : vector<8x4xf32>, vector<8x4xf32>, vector<8x8xf32> -> vector<8x8xf32>
    %cst_42 = arith.constant 5.000000e-01 : f32
    %106 = vector.broadcast %cst_42 : f32 to vector<8x8xf32>
    %107 = arith.mulf %105, %106 : vector<8x8xf32>
    %108 = arith.addf %107, %17 : vector<8x8xf32>
    %cst_43 = arith.constant dense<0xFF800000> : vector<8xf32>
    %109 = vector.multi_reduction <maximumf>, %108, %cst_43 [1] : vector<8x8xf32> to vector<8xf32>
    %110 = vector.shape_cast %109 : vector<8xf32> to vector<8x1xf32>
    %111 = vector.broadcast %110 : vector<8x1xf32> to vector<8x8xf32>
    %112 = arith.subf %108, %111 : vector<8x8xf32>
    %113 = math.exp %112 : vector<8x8xf32>
    %cst_44 = arith.constant dense<0.000000e+00> : vector<8xf32>
    %114 = vector.multi_reduction <add>, %113, %cst_44 [1] : vector<8x8xf32> to vector<8xf32>
    %115 = vector.shape_cast %114 : vector<8xf32> to vector<8x1xf32>
    %116 = tpu.reciprocal %115 {approx = true} : vector<8x1xf32> -> vector<8x1xf32>
    %117 = vector.broadcast %116 : vector<8x1xf32> to vector<8x8xf32>
    %118 = arith.mulf %113, %117 : vector<8x8xf32>
    %cst_45 = arith.constant dense<0.000000e+00> : vector<8x4xf32>
    %119 = tpu.matmul %118, %104, %cst_45 {dimension_numbers = #tpu.dot_dimension_numbers<[1], [0], [0], [1], [0, 0, 1, 1], [], []>} : vector<8x8xf32>, vector<8x4xf32>, vector<8x4xf32> -> vector<8x4xf32>
    %c0_46 = arith.constant 0 : index
    %c16 = arith.constant 16 : index
    %120 = vector.load %arg12[%c0_46, %c16] : memref<8x40xf32, #tpu.memory_space<vmem>>, vector<8x4xf32>
    tpu.vector_store %arg12[%c0_46, %c16], %119 {strides = array<i32>} : memref<8x40xf32, #tpu.memory_space<vmem>>, vector<8x4xf32>,
    %121 = vector.extract_strided_slice %25 {offsets = [0, 20], sizes = [8, 4], strides = [1, 1]} : vector<8x120xf32> to vector<8x4xf32>
    %122 = vector.extract_strided_slice %25 {offsets = [0, 60], sizes = [8, 4], strides = [1, 1]} : vector<8x120xf32> to vector<8x4xf32>
    %123 = vector.extract_strided_slice %25 {offsets = [0, 100], sizes = [8, 4], strides = [1, 1]} : vector<8x120xf32> to vector<8x4xf32>
    %cst_47 = arith.constant dense<0.000000e+00> : vector<8x8xf32>
    %124 = tpu.matmul %121, %122, %cst_47 {dimension_numbers = #tpu.dot_dimension_numbers<[1], [1], [0], [0], [0, 0, 1, 0], [], []>} : vector<8x4xf32>, vector<8x4xf32>, vector<8x8xf32> -> vector<8x8xf32>
    %cst_48 = arith.constant 5.000000e-01 : f32
    %125 = vector.broadcast %cst_48 : f32 to vector<8x8xf32>
    %126 = arith.mulf %124, %125 : vector<8x8xf32>
    %127 = arith.addf %126, %17 : vector<8x8xf32>
    %cst_49 = arith.constant dense<0xFF800000> : vector<8xf32>
    %128 = vector.multi_reduction <maximumf>, %127, %cst_49 [1] : vector<8x8xf32> to vector<8xf32>
    %129 = vector.shape_cast %128 : vector<8xf32> to vector<8x1xf32>
    %130 = vector.broadcast %129 : vector<8x1xf32> to vector<8x8xf32>
    %131 = arith.subf %127, %130 : vector<8x8xf32>
    %132 = math.exp %131 : vector<8x8xf32>
    %cst_50 = arith.constant dense<0.000000e+00> : vector<8xf32>
    %133 = vector.multi_reduction <add>, %132, %cst_50 [1] : vector<8x8xf32> to vector<8xf32>
    %134 = vector.shape_cast %133 : vector<8xf32> to vector<8x1xf32>
    %135 = tpu.reciprocal %134 {approx = true} : vector<8x1xf32> -> vector<8x1xf32>
    %136 = vector.broadcast %135 : vector<8x1xf32> to vector<8x8xf32>
    %137 = arith.mulf %132, %136 : vector<8x8xf32>
    %cst_51 = arith.constant dense<0.000000e+00> : vector<8x4xf32>
    %138 = tpu.matmul %137, %123, %cst_51 {dimension_numbers = #tpu.dot_dimension_numbers<[1], [0], [0], [1], [0, 0, 1, 1], [], []>} : vector<8x8xf32>, vector<8x4xf32>, vector<8x4xf32> -> vector<8x4xf32>
    %c0_52 = arith.constant 0 : index
    %c20 = arith.constant 20 : index
    %139 = vector.load %arg12[%c0_52, %c20] : memref<8x40xf32, #tpu.memory_space<vmem>>, vector<8x4xf32>
    tpu.vector_store %arg12[%c0_52, %c20], %138 {strides = array<i32>} : memref<8x40xf32, #tpu.memory_space<vmem>>, vector<8x4xf32>,
    %140 = vector.extract_strided_slice %25 {offsets = [0, 24], sizes = [8, 4], strides = [1, 1]} : vector<8x120xf32> to vector<8x4xf32>
    %141 = vector.extract_strided_slice %25 {offsets = [0, 64], sizes = [8, 4], strides = [1, 1]} : vector<8x120xf32> to vector<8x4xf32>
    %142 = vector.extract_strided_slice %25 {offsets = [0, 104], sizes = [8, 4], strides = [1, 1]} : vector<8x120xf32> to vector<8x4xf32>
    %cst_53 = arith.constant dense<0.000000e+00> : vector<8x8xf32>
    %143 = tpu.matmul %140, %141, %cst_53 {dimension_numbers = #tpu.dot_dimension_numbers<[1], [1], [0], [0], [0, 0, 1, 0], [], []>} : vector<8x4xf32>, vector<8x4xf32>, vector<8x8xf32> -> vector<8x8xf32>
    %cst_54 = arith.constant 5.000000e-01 : f32
    %144 = vector.broadcast %cst_54 : f32 to vector<8x8xf32>
    %145 = arith.mulf %143, %144 : vector<8x8xf32>
    %146 = arith.addf %145, %17 : vector<8x8xf32>
    %cst_55 = arith.constant dense<0xFF800000> : vector<8xf32>
    %147 = vector.multi_reduction <maximumf>, %146, %cst_55 [1] : vector<8x8xf32> to vector<8xf32>
    %148 = vector.shape_cast %147 : vector<8xf32> to vector<8x1xf32>
    %149 = vector.broadcast %148 : vector<8x1xf32> to vector<8x8xf32>
    %150 = arith.subf %146, %149 : vector<8x8xf32>
    %151 = math.exp %150 : vector<8x8xf32>
    %cst_56 = arith.constant dense<0.000000e+00> : vector<8xf32>
    %152 = vector.multi_reduction <add>, %151, %cst_56 [1] : vector<8x8xf32> to vector<8xf32>
    %153 = vector.shape_cast %152 : vector<8xf32> to vector<8x1xf32>
    %154 = tpu.reciprocal %153 {approx = true} : vector<8x1xf32> -> vector<8x1xf32>
    %155 = vector.broadcast %154 : vector<8x1xf32> to vector<8x8xf32>
    %156 = arith.mulf %151, %155 : vector<8x8xf32>
    %cst_57 = arith.constant dense<0.000000e+00> : vector<8x4xf32>
    %157 = tpu.matmul %156, %142, %cst_57 {dimension_numbers = #tpu.dot_dimension_numbers<[1], [0], [0], [1], [0, 0, 1, 1], [], []>} : vector<8x8xf32>, vector<8x4xf32>, vector<8x4xf32> -> vector<8x4xf32>
    %c0_58 = arith.constant 0 : index
    %c24 = arith.constant 24 : index
    %158 = vector.load %arg12[%c0_58, %c24] : memref<8x40xf32, #tpu.memory_space<vmem>>, vector<8x4xf32>
    tpu.vector_store %arg12[%c0_58, %c24], %157 {strides = array<i32>} : memref<8x40xf32, #tpu.memory_space<vmem>>, vector<8x4xf32>,
    %159 = vector.extract_strided_slice %25 {offsets = [0, 28], sizes = [8, 4], strides = [1, 1]} : vector<8x120xf32> to vector<8x4xf32>
    %160 = vector.extract_strided_slice %25 {offsets = [0, 68], sizes = [8, 4], strides = [1, 1]} : vector<8x120xf32> to vector<8x4xf32>
    %161 = vector.extract_strided_slice %25 {offsets = [0, 108], sizes = [8, 4], strides = [1, 1]} : vector<8x120xf32> to vector<8x4xf32>
    %cst_59 = arith.constant dense<0.000000e+00> : vector<8x8xf32>
    %162 = tpu.matmul %159, %160, %cst_59 {dimension_numbers = #tpu.dot_dimension_numbers<[1], [1], [0], [0], [0, 0, 1, 0], [], []>} : vector<8x4xf32>, vector<8x4xf32>, vector<8x8xf32> -> vector<8x8xf32>
    %cst_60 = arith.constant 5.000000e-01 : f32
    %163 = vector.broadcast %cst_60 : f32 to vector<8x8xf32>
    %164 = arith.mulf %162, %163 : vector<8x8xf32>
    %165 = arith.addf %164, %17 : vector<8x8xf32>
    %cst_61 = arith.constant dense<0xFF800000> : vector<8xf32>
    %166 = vector.multi_reduction <maximumf>, %165, %cst_61 [1] : vector<8x8xf32> to vector<8xf32>
    %167 = vector.shape_cast %166 : vector<8xf32> to vector<8x1xf32>
    %168 = vector.broadcast %167 : vector<8x1xf32> to vector<8x8xf32>
    %169 = arith.subf %165, %168 : vector<8x8xf32>
    %170 = math.exp %169 : vector<8x8xf32>
    %cst_62 = arith.constant dense<0.000000e+00> : vector<8xf32>
    %171 = vector.multi_reduction <add>, %170, %cst_62 [1] : vector<8x8xf32> to vector<8xf32>
    %172 = vector.shape_cast %171 : vector<8xf32> to vector<8x1xf32>
    %173 = tpu.reciprocal %172 {approx = true} : vector<8x1xf32> -> vector<8x1xf32>
    %174 = vector.broadcast %173 : vector<8x1xf32> to vector<8x8xf32>
    %175 = arith.mulf %170, %174 : vector<8x8xf32>
    %cst_63 = arith.constant dense<0.000000e+00> : vector<8x4xf32>
    %176 = tpu.matmul %175, %161, %cst_63 {dimension_numbers = #tpu.dot_dimension_numbers<[1], [0], [0], [1], [0, 0, 1, 1], [], []>} : vector<8x8xf32>, vector<8x4xf32>, vector<8x4xf32> -> vector<8x4xf32>
    %c0_64 = arith.constant 0 : index
    %c28 = arith.constant 28 : index
    %177 = vector.load %arg12[%c0_64, %c28] : memref<8x40xf32, #tpu.memory_space<vmem>>, vector<8x4xf32>
    tpu.vector_store %arg12[%c0_64, %c28], %176 {strides = array<i32>} : memref<8x40xf32, #tpu.memory_space<vmem>>, vector<8x4xf32>,
    %178 = vector.extract_strided_slice %25 {offsets = [0, 32], sizes = [8, 4], strides = [1, 1]} : vector<8x120xf32> to vector<8x4xf32>
    %179 = vector.extract_strided_slice %25 {offsets = [0, 72], sizes = [8, 4], strides = [1, 1]} : vector<8x120xf32> to vector<8x4xf32>
    %180 = vector.extract_strided_slice %25 {offsets = [0, 112], sizes = [8, 4], strides = [1, 1]} : vector<8x120xf32> to vector<8x4xf32>
    %cst_65 = arith.constant dense<0.000000e+00> : vector<8x8xf32>
    %181 = tpu.matmul %178, %179, %cst_65 {dimension_numbers = #tpu.dot_dimension_numbers<[1], [1], [0], [0], [0, 0, 1, 0], [], []>} : vector<8x4xf32>, vector<8x4xf32>, vector<8x8xf32> -> vector<8x8xf32>
    %cst_66 = arith.constant 5.000000e-01 : f32
    %182 = vector.broadcast %cst_66 : f32 to vector<8x8xf32>
    %183 = arith.mulf %181, %182 : vector<8x8xf32>
    %184 = arith.addf %183, %17 : vector<8x8xf32>
    %cst_67 = arith.constant dense<0xFF800000> : vector<8xf32>
    %185 = vector.multi_reduction <maximumf>, %184, %cst_67 [1] : vector<8x8xf32> to vector<8xf32>
    %186 = vector.shape_cast %185 : vector<8xf32> to vector<8x1xf32>
    %187 = vector.broadcast %186 : vector<8x1xf32> to vector<8x8xf32>
    %188 = arith.subf %184, %187 : vector<8x8xf32>
    %189 = math.exp %188 : vector<8x8xf32>
    %cst_68 = arith.constant dense<0.000000e+00> : vector<8xf32>
    %190 = vector.multi_reduction <add>, %189, %cst_68 [1] : vector<8x8xf32> to vector<8xf32>
    %191 = vector.shape_cast %190 : vector<8xf32> to vector<8x1xf32>
    %192 = tpu.reciprocal %191 {approx = true} : vector<8x1xf32> -> vector<8x1xf32>
    %193 = vector.broadcast %192 : vector<8x1xf32> to vector<8x8xf32>
    %194 = arith.mulf %189, %193 : vector<8x8xf32>
    %cst_69 = arith.constant dense<0.000000e+00> : vector<8x4xf32>
    %195 = tpu.matmul %194, %180, %cst_69 {dimension_numbers = #tpu.dot_dimension_numbers<[1], [0], [0], [1], [0, 0, 1, 1], [], []>} : vector<8x8xf32>, vector<8x4xf32>, vector<8x4xf32> -> vector<8x4xf32>
    %c0_70 = arith.constant 0 : index
    %c32 = arith.constant 32 : index
    %196 = vector.load %arg12[%c0_70, %c32] : memref<8x40xf32, #tpu.memory_space<vmem>>, vector<8x4xf32>
    tpu.vector_store %arg12[%c0_70, %c32], %195 {strides = array<i32>} : memref<8x40xf32, #tpu.memory_space<vmem>>, vector<8x4xf32>,
    %197 = vector.extract_strided_slice %25 {offsets = [0, 36], sizes = [8, 4], strides = [1, 1]} : vector<8x120xf32> to vector<8x4xf32>
    %198 = vector.extract_strided_slice %25 {offsets = [0, 76], sizes = [8, 4], strides = [1, 1]} : vector<8x120xf32> to vector<8x4xf32>
    %199 = vector.extract_strided_slice %25 {offsets = [0, 116], sizes = [8, 4], strides = [1, 1]} : vector<8x120xf32> to vector<8x4xf32>
    %cst_71 = arith.constant dense<0.000000e+00> : vector<8x8xf32>
    %200 = tpu.matmul %197, %198, %cst_71 {dimension_numbers = #tpu.dot_dimension_numbers<[1], [1], [0], [0], [0, 0, 1, 0], [], []>} : vector<8x4xf32>, vector<8x4xf32>, vector<8x8xf32> -> vector<8x8xf32>
    %cst_72 = arith.constant 5.000000e-01 : f32
    %201 = vector.broadcast %cst_72 : f32 to vector<8x8xf32>
    %202 = arith.mulf %200, %201 : vector<8x8xf32>
    %203 = arith.addf %202, %17 : vector<8x8xf32>
    %cst_73 = arith.constant dense<0xFF800000> : vector<8xf32>
    %204 = vector.multi_reduction <maximumf>, %203, %cst_73 [1] : vector<8x8xf32> to vector<8xf32>
    %205 = vector.shape_cast %204 : vector<8xf32> to vector<8x1xf32>
    %206 = vector.broadcast %205 : vector<8x1xf32> to vector<8x8xf32>
    %207 = arith.subf %203, %206 : vector<8x8xf32>
    %208 = math.exp %207 : vector<8x8xf32>
    %cst_74 = arith.constant dense<0.000000e+00> : vector<8xf32>
    %209 = vector.multi_reduction <add>, %208, %cst_74 [1] : vector<8x8xf32> to vector<8xf32>
    %210 = vector.shape_cast %209 : vector<8xf32> to vector<8x1xf32>
    %211 = tpu.reciprocal %210 {approx = true} : vector<8x1xf32> -> vector<8x1xf32>
    %212 = vector.broadcast %211 : vector<8x1xf32> to vector<8x8xf32>
    %213 = arith.mulf %208, %212 : vector<8x8xf32>
    %cst_75 = arith.constant dense<0.000000e+00> : vector<8x4xf32>
    %214 = tpu.matmul %213, %199, %cst_75 {dimension_numbers = #tpu.dot_dimension_numbers<[1], [0], [0], [1], [0, 0, 1, 1], [], []>} : vector<8x8xf32>, vector<8x4xf32>, vector<8x4xf32> -> vector<8x4xf32>
    %c0_76 = arith.constant 0 : index
    %c36 = arith.constant 36 : index
    %215 = vector.load %arg12[%c0_76, %c36] : memref<8x40xf32, #tpu.memory_space<vmem>>, vector<8x4xf32>
    tpu.vector_store %arg12[%c0_76, %c36], %214 {strides = array<i32>} : memref<8x40xf32, #tpu.memory_space<vmem>>, vector<8x4xf32>,
    %c0_77 = arith.constant 0 : index
    %c0_78 = arith.constant 0 : index
    %216 = vector.load %arg12[%c0_77, %c0_78] : memref<8x40xf32, #tpu.memory_space<vmem>>, vector<8x40xf32>
    %217 = arith.truncf %216 : vector<8x40xf32> to vector<8x40xbf16>
    %c0_79 = arith.constant 0 : index
    %c0_80 = arith.constant 0 : index
    %c0_81 = arith.constant 0 : index
    %218 = vector.load %arg7[%c0_79, %c0_80, %c0_81] : memref<2x40x40xbf16, #tpu.memory_space<vmem>>, vector<1x40x40xbf16>
    %219 = vector.shape_cast %218 : vector<1x40x40xbf16> to vector<40x40xbf16>
    %cst_82 = arith.constant dense<0.000000e+00> : vector<8x40xf32>
    %220 = tpu.matmul %217, %219, %cst_82 {dimension_numbers = #tpu.dot_dimension_numbers<[1], [0], [0], [1], [0, 0, 1, 1], [], []>} : vector<8x40xbf16>, vector<40x40xbf16>, vector<8x40xf32> -> vector<8x40xf32>
    %c0_83 = arith.constant 0 : index
    %c0_84 = arith.constant 0 : index
    %c0_85 = arith.constant 0 : index
    %221 = vector.load %arg8[%c0_83, %c0_84, %c0_85] : memref<2x1x40xf32, #tpu.memory_space<vmem>>, vector<1x1x40xf32>
    %222 = vector.shape_cast %221 : vector<1x1x40xf32> to vector<1x40xf32>
    %223 = vector.broadcast %222 : vector<1x40xf32> to vector<8x40xf32>
    %224 = arith.addf %220, %223 : vector<8x40xf32>
    %225 = arith.addf %9, %224 : vector<8x40xf32>
    %226 = vector.shape_cast %225 : vector<8x40xf32> to vector<1x8x40xf32>
    %cst_86 = arith.constant dense<0.000000e+00> : vector<1xf32>
    %227 = vector.multi_reduction <add>, %226, %cst_86 [1, 2] : vector<1x8x40xf32> to vector<1xf32>
    %228 = vector.shape_cast %227 : vector<1xf32> to vector<1x1x1xf32>
    %229 = vector.extract %228[0, 0, 0] : f32 from vector<1x1x1xf32>
    %cst_87 = arith.constant 3.125000e-03 : f32
    %230 = arith.mulf %229, %cst_87 : f32
    %231 = vector.broadcast %230 : f32 to vector<8x40xf32>
    %232 = arith.subf %225, %231 : vector<8x40xf32>
    %233 = arith.mulf %232, %232 : vector<8x40xf32>
    %234 = vector.shape_cast %233 : vector<8x40xf32> to vector<1x8x40xf32>
    %cst_88 = arith.constant dense<0.000000e+00> : vector<1xf32>
    %235 = vector.multi_reduction <add>, %234, %cst_88 [1, 2] : vector<1x8x40xf32> to vector<1xf32>
    %236 = vector.shape_cast %235 : vector<1xf32> to vector<1x1x1xf32>
    %237 = vector.extract %236[0, 0, 0] : f32 from vector<1x1x1xf32>
    %cst_89 = arith.constant 3.125000e-03 : f32
    %238 = arith.mulf %237, %cst_89 : f32
    %cst_90 = arith.constant 9.99999974E-6 : f32
    %239 = arith.addf %238, %cst_90 : f32
    %240 = math.rsqrt %239 : f32
    %241 = vector.broadcast %240 : f32 to vector<8x40xf32>
    %242 = arith.mulf %232, %241 : vector<8x40xf32>
    %c0_91 = arith.constant 0 : index
    %c0_92 = arith.constant 0 : index
    %c0_93 = arith.constant 0 : index
    %243 = vector.load %arg9[%c0_91, %c0_92, %c0_93] : memref<2x1x40xf32, #tpu.memory_space<vmem>>, vector<1x1x40xf32>
    %244 = vector.shape_cast %243 : vector<1x1x40xf32> to vector<1x40xf32>
    %245 = vector.broadcast %244 : vector<1x40xf32> to vector<8x40xf32>
    %246 = arith.mulf %242, %245 : vector<8x40xf32>
    %c0_94 = arith.constant 0 : index
    %c0_95 = arith.constant 0 : index
    %c0_96 = arith.constant 0 : index
    %247 = vector.load %arg10[%c0_94, %c0_95, %c0_96] : memref<2x1x40xf32, #tpu.memory_space<vmem>>, vector<1x1x40xf32>
    %248 = vector.shape_cast %247 : vector<1x1x40xf32> to vector<1x40xf32>
    %249 = vector.broadcast %248 : vector<1x40xf32> to vector<8x40xf32>
    %250 = arith.addf %246, %249 : vector<8x40xf32>
    %251 = arith.truncf %250 : vector<8x40xf32> to vector<8x40xbf16>
    %c1 = arith.constant 1 : index
    %c0_97 = arith.constant 0 : index
    %c0_98 = arith.constant 0 : index
    %252 = vector.load %arg5[%c1, %c0_97, %c0_98] : memref<2x40x120xbf16, #tpu.memory_space<vmem>>, vector<1x40x120xbf16>
    %253 = vector.shape_cast %252 : vector<1x40x120xbf16> to vector<40x120xbf16>
    %cst_99 = arith.constant dense<0.000000e+00> : vector<8x120xf32>
    %254 = tpu.matmul %251, %253, %cst_99 {dimension_numbers = #tpu.dot_dimension_numbers<[1], [0], [0], [1], [0, 0, 1, 1], [], []>} : vector<8x40xbf16>, vector<40x120xbf16>, vector<8x120xf32> -> vector<8x120xf32>
    %c1_100 = arith.constant 1 : index
    %c0_101 = arith.constant 0 : index
    %c0_102 = arith.constant 0 : index
    %255 = vector.load %arg6[%c1_100, %c0_101, %c0_102] : memref<2x1x120xf32, #tpu.memory_space<vmem>>, vector<1x1x120xf32>
    %256 = vector.shape_cast %255 : vector<1x1x120xf32> to vector<1x120xf32>
    %257 = vector.broadcast %256 : vector<1x120xf32> to vector<8x120xf32>
    %258 = arith.addf %254, %257 : vector<8x120xf32>
    %259 = vector.extract_strided_slice %258 {offsets = [0, 0], sizes = [8, 4], strides = [1, 1]} : vector<8x120xf32> to vector<8x4xf32>
    %260 = vector.extract_strided_slice %258 {offsets = [0, 40], sizes = [8, 4], strides = [1, 1]} : vector<8x120xf32> to vector<8x4xf32>
    %261 = vector.extract_strided_slice %258 {offsets = [0, 80], sizes = [8, 4], strides = [1, 1]} : vector<8x120xf32> to vector<8x4xf32>
    %cst_103 = arith.constant dense<0.000000e+00> : vector<8x8xf32>
    %262 = tpu.matmul %259, %260, %cst_103 {dimension_numbers = #tpu.dot_dimension_numbers<[1], [1], [0], [0], [0, 0, 1, 0], [], []>} : vector<8x4xf32>, vector<8x4xf32>, vector<8x8xf32> -> vector<8x8xf32>
    %cst_104 = arith.constant 5.000000e-01 : f32
    %263 = vector.broadcast %cst_104 : f32 to vector<8x8xf32>
    %264 = arith.mulf %262, %263 : vector<8x8xf32>
    %265 = arith.addf %264, %17 : vector<8x8xf32>
    %cst_105 = arith.constant dense<0xFF800000> : vector<8xf32>
    %266 = vector.multi_reduction <maximumf>, %265, %cst_105 [1] : vector<8x8xf32> to vector<8xf32>
    %267 = vector.shape_cast %266 : vector<8xf32> to vector<8x1xf32>
    %268 = vector.broadcast %267 : vector<8x1xf32> to vector<8x8xf32>
    %269 = arith.subf %265, %268 : vector<8x8xf32>
    %270 = math.exp %269 : vector<8x8xf32>
    %cst_106 = arith.constant dense<0.000000e+00> : vector<8xf32>
    %271 = vector.multi_reduction <add>, %270, %cst_106 [1] : vector<8x8xf32> to vector<8xf32>
    %272 = vector.shape_cast %271 : vector<8xf32> to vector<8x1xf32>
    %273 = tpu.reciprocal %272 {approx = true} : vector<8x1xf32> -> vector<8x1xf32>
    %274 = vector.broadcast %273 : vector<8x1xf32> to vector<8x8xf32>
    %275 = arith.mulf %270, %274 : vector<8x8xf32>
    %cst_107 = arith.constant dense<0.000000e+00> : vector<8x4xf32>
    %276 = tpu.matmul %275, %261, %cst_107 {dimension_numbers = #tpu.dot_dimension_numbers<[1], [0], [0], [1], [0, 0, 1, 1], [], []>} : vector<8x8xf32>, vector<8x4xf32>, vector<8x4xf32> -> vector<8x4xf32>
    %c0_108 = arith.constant 0 : index
    %c0_109 = arith.constant 0 : index
    %277 = vector.load %arg12[%c0_108, %c0_109] : memref<8x40xf32, #tpu.memory_space<vmem>>, vector<8x4xf32>
    tpu.vector_store %arg12[%c0_108, %c0_109], %276 {strides = array<i32>} : memref<8x40xf32, #tpu.memory_space<vmem>>, vector<8x4xf32>,
    %278 = vector.extract_strided_slice %258 {offsets = [0, 4], sizes = [8, 4], strides = [1, 1]} : vector<8x120xf32> to vector<8x4xf32>
    %279 = vector.extract_strided_slice %258 {offsets = [0, 44], sizes = [8, 4], strides = [1, 1]} : vector<8x120xf32> to vector<8x4xf32>
    %280 = vector.extract_strided_slice %258 {offsets = [0, 84], sizes = [8, 4], strides = [1, 1]} : vector<8x120xf32> to vector<8x4xf32>
    %cst_110 = arith.constant dense<0.000000e+00> : vector<8x8xf32>
    %281 = tpu.matmul %278, %279, %cst_110 {dimension_numbers = #tpu.dot_dimension_numbers<[1], [1], [0], [0], [0, 0, 1, 0], [], []>} : vector<8x4xf32>, vector<8x4xf32>, vector<8x8xf32> -> vector<8x8xf32>
    %cst_111 = arith.constant 5.000000e-01 : f32
    %282 = vector.broadcast %cst_111 : f32 to vector<8x8xf32>
    %283 = arith.mulf %281, %282 : vector<8x8xf32>
    %284 = arith.addf %283, %17 : vector<8x8xf32>
    %cst_112 = arith.constant dense<0xFF800000> : vector<8xf32>
    %285 = vector.multi_reduction <maximumf>, %284, %cst_112 [1] : vector<8x8xf32> to vector<8xf32>
    %286 = vector.shape_cast %285 : vector<8xf32> to vector<8x1xf32>
    %287 = vector.broadcast %286 : vector<8x1xf32> to vector<8x8xf32>
    %288 = arith.subf %284, %287 : vector<8x8xf32>
    %289 = math.exp %288 : vector<8x8xf32>
    %cst_113 = arith.constant dense<0.000000e+00> : vector<8xf32>
    %290 = vector.multi_reduction <add>, %289, %cst_113 [1] : vector<8x8xf32> to vector<8xf32>
    %291 = vector.shape_cast %290 : vector<8xf32> to vector<8x1xf32>
    %292 = tpu.reciprocal %291 {approx = true} : vector<8x1xf32> -> vector<8x1xf32>
    %293 = vector.broadcast %292 : vector<8x1xf32> to vector<8x8xf32>
    %294 = arith.mulf %289, %293 : vector<8x8xf32>
    %cst_114 = arith.constant dense<0.000000e+00> : vector<8x4xf32>
    %295 = tpu.matmul %294, %280, %cst_114 {dimension_numbers = #tpu.dot_dimension_numbers<[1], [0], [0], [1], [0, 0, 1, 1], [], []>} : vector<8x8xf32>, vector<8x4xf32>, vector<8x4xf32> -> vector<8x4xf32>
    %c0_115 = arith.constant 0 : index
    %c4_116 = arith.constant 4 : index
    %296 = vector.load %arg12[%c0_115, %c4_116] : memref<8x40xf32, #tpu.memory_space<vmem>>, vector<8x4xf32>
    tpu.vector_store %arg12[%c0_115, %c4_116], %295 {strides = array<i32>} : memref<8x40xf32, #tpu.memory_space<vmem>>, vector<8x4xf32>,
    %297 = vector.extract_strided_slice %258 {offsets = [0, 8], sizes = [8, 4], strides = [1, 1]} : vector<8x120xf32> to vector<8x4xf32>
    %298 = vector.extract_strided_slice %258 {offsets = [0, 48], sizes = [8, 4], strides = [1, 1]} : vector<8x120xf32> to vector<8x4xf32>
    %299 = vector.extract_strided_slice %258 {offsets = [0, 88], sizes = [8, 4], strides = [1, 1]} : vector<8x120xf32> to vector<8x4xf32>
    %cst_117 = arith.constant dense<0.000000e+00> : vector<8x8xf32>
    %300 = tpu.matmul %297, %298, %cst_117 {dimension_numbers = #tpu.dot_dimension_numbers<[1], [1], [0], [0], [0, 0, 1, 0], [], []>} : vector<8x4xf32>, vector<8x4xf32>, vector<8x8xf32> -> vector<8x8xf32>
    %cst_118 = arith.constant 5.000000e-01 : f32
    %301 = vector.broadcast %cst_118 : f32 to vector<8x8xf32>
    %302 = arith.mulf %300, %301 : vector<8x8xf32>
    %303 = arith.addf %302, %17 : vector<8x8xf32>
    %cst_119 = arith.constant dense<0xFF800000> : vector<8xf32>
    %304 = vector.multi_reduction <maximumf>, %303, %cst_119 [1] : vector<8x8xf32> to vector<8xf32>
    %305 = vector.shape_cast %304 : vector<8xf32> to vector<8x1xf32>
    %306 = vector.broadcast %305 : vector<8x1xf32> to vector<8x8xf32>
    %307 = arith.subf %303, %306 : vector<8x8xf32>
    %308 = math.exp %307 : vector<8x8xf32>
    %cst_120 = arith.constant dense<0.000000e+00> : vector<8xf32>
    %309 = vector.multi_reduction <add>, %308, %cst_120 [1] : vector<8x8xf32> to vector<8xf32>
    %310 = vector.shape_cast %309 : vector<8xf32> to vector<8x1xf32>
    %311 = tpu.reciprocal %310 {approx = true} : vector<8x1xf32> -> vector<8x1xf32>
    %312 = vector.broadcast %311 : vector<8x1xf32> to vector<8x8xf32>
    %313 = arith.mulf %308, %312 : vector<8x8xf32>
    %cst_121 = arith.constant dense<0.000000e+00> : vector<8x4xf32>
    %314 = tpu.matmul %313, %299, %cst_121 {dimension_numbers = #tpu.dot_dimension_numbers<[1], [0], [0], [1], [0, 0, 1, 1], [], []>} : vector<8x8xf32>, vector<8x4xf32>, vector<8x4xf32> -> vector<8x4xf32>
    %c0_122 = arith.constant 0 : index
    %c8_123 = arith.constant 8 : index
    %315 = vector.load %arg12[%c0_122, %c8_123] : memref<8x40xf32, #tpu.memory_space<vmem>>, vector<8x4xf32>
    tpu.vector_store %arg12[%c0_122, %c8_123], %314 {strides = array<i32>} : memref<8x40xf32, #tpu.memory_space<vmem>>, vector<8x4xf32>,
    %316 = vector.extract_strided_slice %258 {offsets = [0, 12], sizes = [8, 4], strides = [1, 1]} : vector<8x120xf32> to vector<8x4xf32>
    %317 = vector.extract_strided_slice %258 {offsets = [0, 52], sizes = [8, 4], strides = [1, 1]} : vector<8x120xf32> to vector<8x4xf32>
    %318 = vector.extract_strided_slice %258 {offsets = [0, 92], sizes = [8, 4], strides = [1, 1]} : vector<8x120xf32> to vector<8x4xf32>
    %cst_124 = arith.constant dense<0.000000e+00> : vector<8x8xf32>
    %319 = tpu.matmul %316, %317, %cst_124 {dimension_numbers = #tpu.dot_dimension_numbers<[1], [1], [0], [0], [0, 0, 1, 0], [], []>} : vector<8x4xf32>, vector<8x4xf32>, vector<8x8xf32> -> vector<8x8xf32>
    %cst_125 = arith.constant 5.000000e-01 : f32
    %320 = vector.broadcast %cst_125 : f32 to vector<8x8xf32>
    %321 = arith.mulf %319, %320 : vector<8x8xf32>
    %322 = arith.addf %321, %17 : vector<8x8xf32>
    %cst_126 = arith.constant dense<0xFF800000> : vector<8xf32>
    %323 = vector.multi_reduction <maximumf>, %322, %cst_126 [1] : vector<8x8xf32> to vector<8xf32>
    %324 = vector.shape_cast %323 : vector<8xf32> to vector<8x1xf32>
    %325 = vector.broadcast %324 : vector<8x1xf32> to vector<8x8xf32>
    %326 = arith.subf %322, %325 : vector<8x8xf32>
    %327 = math.exp %326 : vector<8x8xf32>
    %cst_127 = arith.constant dense<0.000000e+00> : vector<8xf32>
    %328 = vector.multi_reduction <add>, %327, %cst_127 [1] : vector<8x8xf32> to vector<8xf32>
    %329 = vector.shape_cast %328 : vector<8xf32> to vector<8x1xf32>
    %330 = tpu.reciprocal %329 {approx = true} : vector<8x1xf32> -> vector<8x1xf32>
    %331 = vector.broadcast %330 : vector<8x1xf32> to vector<8x8xf32>
    %332 = arith.mulf %327, %331 : vector<8x8xf32>
    %cst_128 = arith.constant dense<0.000000e+00> : vector<8x4xf32>
    %333 = tpu.matmul %332, %318, %cst_128 {dimension_numbers = #tpu.dot_dimension_numbers<[1], [0], [0], [1], [0, 0, 1, 1], [], []>} : vector<8x8xf32>, vector<8x4xf32>, vector<8x4xf32> -> vector<8x4xf32>
    %c0_129 = arith.constant 0 : index
    %c12_130 = arith.constant 12 : index
    %334 = vector.load %arg12[%c0_129, %c12_130] : memref<8x40xf32, #tpu.memory_space<vmem>>, vector<8x4xf32>
    tpu.vector_store %arg12[%c0_129, %c12_130], %333 {strides = array<i32>} : memref<8x40xf32, #tpu.memory_space<vmem>>, vector<8x4xf32>,
    %335 = vector.extract_strided_slice %258 {offsets = [0, 16], sizes = [8, 4], strides = [1, 1]} : vector<8x120xf32> to vector<8x4xf32>
    %336 = vector.extract_strided_slice %258 {offsets = [0, 56], sizes = [8, 4], strides = [1, 1]} : vector<8x120xf32> to vector<8x4xf32>
    %337 = vector.extract_strided_slice %258 {offsets = [0, 96], sizes = [8, 4], strides = [1, 1]} : vector<8x120xf32> to vector<8x4xf32>
    %cst_131 = arith.constant dense<0.000000e+00> : vector<8x8xf32>
    %338 = tpu.matmul %335, %336, %cst_131 {dimension_numbers = #tpu.dot_dimension_numbers<[1], [1], [0], [0], [0, 0, 1, 0], [], []>} : vector<8x4xf32>, vector<8x4xf32>, vector<8x8xf32> -> vector<8x8xf32>
    %cst_132 = arith.constant 5.000000e-01 : f32
    %339 = vector.broadcast %cst_132 : f32 to vector<8x8xf32>
    %340 = arith.mulf %338, %339 : vector<8x8xf32>
    %341 = arith.addf %340, %17 : vector<8x8xf32>
    %cst_133 = arith.constant dense<0xFF800000> : vector<8xf32>
    %342 = vector.multi_reduction <maximumf>, %341, %cst_133 [1] : vector<8x8xf32> to vector<8xf32>
    %343 = vector.shape_cast %342 : vector<8xf32> to vector<8x1xf32>
    %344 = vector.broadcast %343 : vector<8x1xf32> to vector<8x8xf32>
    %345 = arith.subf %341, %344 : vector<8x8xf32>
    %346 = math.exp %345 : vector<8x8xf32>
    %cst_134 = arith.constant dense<0.000000e+00> : vector<8xf32>
    %347 = vector.multi_reduction <add>, %346, %cst_134 [1] : vector<8x8xf32> to vector<8xf32>
    %348 = vector.shape_cast %347 : vector<8xf32> to vector<8x1xf32>
    %349 = tpu.reciprocal %348 {approx = true} : vector<8x1xf32> -> vector<8x1xf32>
    %350 = vector.broadcast %349 : vector<8x1xf32> to vector<8x8xf32>
    %351 = arith.mulf %346, %350 : vector<8x8xf32>
    %cst_135 = arith.constant dense<0.000000e+00> : vector<8x4xf32>
    %352 = tpu.matmul %351, %337, %cst_135 {dimension_numbers = #tpu.dot_dimension_numbers<[1], [0], [0], [1], [0, 0, 1, 1], [], []>} : vector<8x8xf32>, vector<8x4xf32>, vector<8x4xf32> -> vector<8x4xf32>
    %c0_136 = arith.constant 0 : index
    %c16_137 = arith.constant 16 : index
    %353 = vector.load %arg12[%c0_136, %c16_137] : memref<8x40xf32, #tpu.memory_space<vmem>>, vector<8x4xf32>
    tpu.vector_store %arg12[%c0_136, %c16_137], %352 {strides = array<i32>} : memref<8x40xf32, #tpu.memory_space<vmem>>, vector<8x4xf32>,
    %354 = vector.extract_strided_slice %258 {offsets = [0, 20], sizes = [8, 4], strides = [1, 1]} : vector<8x120xf32> to vector<8x4xf32>
    %355 = vector.extract_strided_slice %258 {offsets = [0, 60], sizes = [8, 4], strides = [1, 1]} : vector<8x120xf32> to vector<8x4xf32>
    %356 = vector.extract_strided_slice %258 {offsets = [0, 100], sizes = [8, 4], strides = [1, 1]} : vector<8x120xf32> to vector<8x4xf32>
    %cst_138 = arith.constant dense<0.000000e+00> : vector<8x8xf32>
    %357 = tpu.matmul %354, %355, %cst_138 {dimension_numbers = #tpu.dot_dimension_numbers<[1], [1], [0], [0], [0, 0, 1, 0], [], []>} : vector<8x4xf32>, vector<8x4xf32>, vector<8x8xf32> -> vector<8x8xf32>
    %cst_139 = arith.constant 5.000000e-01 : f32
    %358 = vector.broadcast %cst_139 : f32 to vector<8x8xf32>
    %359 = arith.mulf %357, %358 : vector<8x8xf32>
    %360 = arith.addf %359, %17 : vector<8x8xf32>
    %cst_140 = arith.constant dense<0xFF800000> : vector<8xf32>
    %361 = vector.multi_reduction <maximumf>, %360, %cst_140 [1] : vector<8x8xf32> to vector<8xf32>
    %362 = vector.shape_cast %361 : vector<8xf32> to vector<8x1xf32>
    %363 = vector.broadcast %362 : vector<8x1xf32> to vector<8x8xf32>
    %364 = arith.subf %360, %363 : vector<8x8xf32>
    %365 = math.exp %364 : vector<8x8xf32>
    %cst_141 = arith.constant dense<0.000000e+00> : vector<8xf32>
    %366 = vector.multi_reduction <add>, %365, %cst_141 [1] : vector<8x8xf32> to vector<8xf32>
    %367 = vector.shape_cast %366 : vector<8xf32> to vector<8x1xf32>
    %368 = tpu.reciprocal %367 {approx = true} : vector<8x1xf32> -> vector<8x1xf32>
    %369 = vector.broadcast %368 : vector<8x1xf32> to vector<8x8xf32>
    %370 = arith.mulf %365, %369 : vector<8x8xf32>
    %cst_142 = arith.constant dense<0.000000e+00> : vector<8x4xf32>
    %371 = tpu.matmul %370, %356, %cst_142 {dimension_numbers = #tpu.dot_dimension_numbers<[1], [0], [0], [1], [0, 0, 1, 1], [], []>} : vector<8x8xf32>, vector<8x4xf32>, vector<8x4xf32> -> vector<8x4xf32>
    %c0_143 = arith.constant 0 : index
    %c20_144 = arith.constant 20 : index
    %372 = vector.load %arg12[%c0_143, %c20_144] : memref<8x40xf32, #tpu.memory_space<vmem>>, vector<8x4xf32>
    tpu.vector_store %arg12[%c0_143, %c20_144], %371 {strides = array<i32>} : memref<8x40xf32, #tpu.memory_space<vmem>>, vector<8x4xf32>,
    %373 = vector.extract_strided_slice %258 {offsets = [0, 24], sizes = [8, 4], strides = [1, 1]} : vector<8x120xf32> to vector<8x4xf32>
    %374 = vector.extract_strided_slice %258 {offsets = [0, 64], sizes = [8, 4], strides = [1, 1]} : vector<8x120xf32> to vector<8x4xf32>
    %375 = vector.extract_strided_slice %258 {offsets = [0, 104], sizes = [8, 4], strides = [1, 1]} : vector<8x120xf32> to vector<8x4xf32>
    %cst_145 = arith.constant dense<0.000000e+00> : vector<8x8xf32>
    %376 = tpu.matmul %373, %374, %cst_145 {dimension_numbers = #tpu.dot_dimension_numbers<[1], [1], [0], [0], [0, 0, 1, 0], [], []>} : vector<8x4xf32>, vector<8x4xf32>, vector<8x8xf32> -> vector<8x8xf32>
    %cst_146 = arith.constant 5.000000e-01 : f32
    %377 = vector.broadcast %cst_146 : f32 to vector<8x8xf32>
    %378 = arith.mulf %376, %377 : vector<8x8xf32>
    %379 = arith.addf %378, %17 : vector<8x8xf32>
    %cst_147 = arith.constant dense<0xFF800000> : vector<8xf32>
    %380 = vector.multi_reduction <maximumf>, %379, %cst_147 [1] : vector<8x8xf32> to vector<8xf32>
    %381 = vector.shape_cast %380 : vector<8xf32> to vector<8x1xf32>
    %382 = vector.broadcast %381 : vector<8x1xf32> to vector<8x8xf32>
    %383 = arith.subf %379, %382 : vector<8x8xf32>
    %384 = math.exp %383 : vector<8x8xf32>
    %cst_148 = arith.constant dense<0.000000e+00> : vector<8xf32>
    %385 = vector.multi_reduction <add>, %384, %cst_148 [1] : vector<8x8xf32> to vector<8xf32>
    %386 = vector.shape_cast %385 : vector<8xf32> to vector<8x1xf32>
    %387 = tpu.reciprocal %386 {approx = true} : vector<8x1xf32> -> vector<8x1xf32>
    %388 = vector.broadcast %387 : vector<8x1xf32> to vector<8x8xf32>
    %389 = arith.mulf %384, %388 : vector<8x8xf32>
    %cst_149 = arith.constant dense<0.000000e+00> : vector<8x4xf32>
    %390 = tpu.matmul %389, %375, %cst_149 {dimension_numbers = #tpu.dot_dimension_numbers<[1], [0], [0], [1], [0, 0, 1, 1], [], []>} : vector<8x8xf32>, vector<8x4xf32>, vector<8x4xf32> -> vector<8x4xf32>
    %c0_150 = arith.constant 0 : index
    %c24_151 = arith.constant 24 : index
    %391 = vector.load %arg12[%c0_150, %c24_151] : memref<8x40xf32, #tpu.memory_space<vmem>>, vector<8x4xf32>
    tpu.vector_store %arg12[%c0_150, %c24_151], %390 {strides = array<i32>} : memref<8x40xf32, #tpu.memory_space<vmem>>, vector<8x4xf32>,
    %392 = vector.extract_strided_slice %258 {offsets = [0, 28], sizes = [8, 4], strides = [1, 1]} : vector<8x120xf32> to vector<8x4xf32>
    %393 = vector.extract_strided_slice %258 {offsets = [0, 68], sizes = [8, 4], strides = [1, 1]} : vector<8x120xf32> to vector<8x4xf32>
    %394 = vector.extract_strided_slice %258 {offsets = [0, 108], sizes = [8, 4], strides = [1, 1]} : vector<8x120xf32> to vector<8x4xf32>
    %cst_152 = arith.constant dense<0.000000e+00> : vector<8x8xf32>
    %395 = tpu.matmul %392, %393, %cst_152 {dimension_numbers = #tpu.dot_dimension_numbers<[1], [1], [0], [0], [0, 0, 1, 0], [], []>} : vector<8x4xf32>, vector<8x4xf32>, vector<8x8xf32> -> vector<8x8xf32>
    %cst_153 = arith.constant 5.000000e-01 : f32
    %396 = vector.broadcast %cst_153 : f32 to vector<8x8xf32>
    %397 = arith.mulf %395, %396 : vector<8x8xf32>
    %398 = arith.addf %397, %17 : vector<8x8xf32>
    %cst_154 = arith.constant dense<0xFF800000> : vector<8xf32>
    %399 = vector.multi_reduction <maximumf>, %398, %cst_154 [1] : vector<8x8xf32> to vector<8xf32>
    %400 = vector.shape_cast %399 : vector<8xf32> to vector<8x1xf32>
    %401 = vector.broadcast %400 : vector<8x1xf32> to vector<8x8xf32>
    %402 = arith.subf %398, %401 : vector<8x8xf32>
    %403 = math.exp %402 : vector<8x8xf32>
    %cst_155 = arith.constant dense<0.000000e+00> : vector<8xf32>
    %404 = vector.multi_reduction <add>, %403, %cst_155 [1] : vector<8x8xf32> to vector<8xf32>
    %405 = vector.shape_cast %404 : vector<8xf32> to vector<8x1xf32>
    %406 = tpu.reciprocal %405 {approx = true} : vector<8x1xf32> -> vector<8x1xf32>
    %407 = vector.broadcast %406 : vector<8x1xf32> to vector<8x8xf32>
    %408 = arith.mulf %403, %407 : vector<8x8xf32>
    %cst_156 = arith.constant dense<0.000000e+00> : vector<8x4xf32>
    %409 = tpu.matmul %408, %394, %cst_156 {dimension_numbers = #tpu.dot_dimension_numbers<[1], [0], [0], [1], [0, 0, 1, 1], [], []>} : vector<8x8xf32>, vector<8x4xf32>, vector<8x4xf32> -> vector<8x4xf32>
    %c0_157 = arith.constant 0 : index
    %c28_158 = arith.constant 28 : index
    %410 = vector.load %arg12[%c0_157, %c28_158] : memref<8x40xf32, #tpu.memory_space<vmem>>, vector<8x4xf32>
    tpu.vector_store %arg12[%c0_157, %c28_158], %409 {strides = array<i32>} : memref<8x40xf32, #tpu.memory_space<vmem>>, vector<8x4xf32>,
    %411 = vector.extract_strided_slice %258 {offsets = [0, 32], sizes = [8, 4], strides = [1, 1]} : vector<8x120xf32> to vector<8x4xf32>
    %412 = vector.extract_strided_slice %258 {offsets = [0, 72], sizes = [8, 4], strides = [1, 1]} : vector<8x120xf32> to vector<8x4xf32>
    %413 = vector.extract_strided_slice %258 {offsets = [0, 112], sizes = [8, 4], strides = [1, 1]} : vector<8x120xf32> to vector<8x4xf32>
    %cst_159 = arith.constant dense<0.000000e+00> : vector<8x8xf32>
    %414 = tpu.matmul %411, %412, %cst_159 {dimension_numbers = #tpu.dot_dimension_numbers<[1], [1], [0], [0], [0, 0, 1, 0], [], []>} : vector<8x4xf32>, vector<8x4xf32>, vector<8x8xf32> -> vector<8x8xf32>
    %cst_160 = arith.constant 5.000000e-01 : f32
    %415 = vector.broadcast %cst_160 : f32 to vector<8x8xf32>
    %416 = arith.mulf %414, %415 : vector<8x8xf32>
    %417 = arith.addf %416, %17 : vector<8x8xf32>
    %cst_161 = arith.constant dense<0xFF800000> : vector<8xf32>
    %418 = vector.multi_reduction <maximumf>, %417, %cst_161 [1] : vector<8x8xf32> to vector<8xf32>
    %419 = vector.shape_cast %418 : vector<8xf32> to vector<8x1xf32>
    %420 = vector.broadcast %419 : vector<8x1xf32> to vector<8x8xf32>
    %421 = arith.subf %417, %420 : vector<8x8xf32>
    %422 = math.exp %421 : vector<8x8xf32>
    %cst_162 = arith.constant dense<0.000000e+00> : vector<8xf32>
    %423 = vector.multi_reduction <add>, %422, %cst_162 [1] : vector<8x8xf32> to vector<8xf32>
    %424 = vector.shape_cast %423 : vector<8xf32> to vector<8x1xf32>
    %425 = tpu.reciprocal %424 {approx = true} : vector<8x1xf32> -> vector<8x1xf32>
    %426 = vector.broadcast %425 : vector<8x1xf32> to vector<8x8xf32>
    %427 = arith.mulf %422, %426 : vector<8x8xf32>
    %cst_163 = arith.constant dense<0.000000e+00> : vector<8x4xf32>
    %428 = tpu.matmul %427, %413, %cst_163 {dimension_numbers = #tpu.dot_dimension_numbers<[1], [0], [0], [1], [0, 0, 1, 1], [], []>} : vector<8x8xf32>, vector<8x4xf32>, vector<8x4xf32> -> vector<8x4xf32>
    %c0_164 = arith.constant 0 : index
    %c32_165 = arith.constant 32 : index
    %429 = vector.load %arg12[%c0_164, %c32_165] : memref<8x40xf32, #tpu.memory_space<vmem>>, vector<8x4xf32>
    tpu.vector_store %arg12[%c0_164, %c32_165], %428 {strides = array<i32>} : memref<8x40xf32, #tpu.memory_space<vmem>>, vector<8x4xf32>,
    %430 = vector.extract_strided_slice %258 {offsets = [0, 36], sizes = [8, 4], strides = [1, 1]} : vector<8x120xf32> to vector<8x4xf32>
    %431 = vector.extract_strided_slice %258 {offsets = [0, 76], sizes = [8, 4], strides = [1, 1]} : vector<8x120xf32> to vector<8x4xf32>
    %432 = vector.extract_strided_slice %258 {offsets = [0, 116], sizes = [8, 4], strides = [1, 1]} : vector<8x120xf32> to vector<8x4xf32>
    %cst_166 = arith.constant dense<0.000000e+00> : vector<8x8xf32>
    %433 = tpu.matmul %430, %431, %cst_166 {dimension_numbers = #tpu.dot_dimension_numbers<[1], [1], [0], [0], [0, 0, 1, 0], [], []>} : vector<8x4xf32>, vector<8x4xf32>, vector<8x8xf32> -> vector<8x8xf32>
    %cst_167 = arith.constant 5.000000e-01 : f32
    %434 = vector.broadcast %cst_167 : f32 to vector<8x8xf32>
    %435 = arith.mulf %433, %434 : vector<8x8xf32>
    %436 = arith.addf %435, %17 : vector<8x8xf32>
    %cst_168 = arith.constant dense<0xFF800000> : vector<8xf32>
    %437 = vector.multi_reduction <maximumf>, %436, %cst_168 [1] : vector<8x8xf32> to vector<8xf32>
    %438 = vector.shape_cast %437 : vector<8xf32> to vector<8x1xf32>
    %439 = vector.broadcast %438 : vector<8x1xf32> to vector<8x8xf32>
    %440 = arith.subf %436, %439 : vector<8x8xf32>
    %441 = math.exp %440 : vector<8x8xf32>
    %cst_169 = arith.constant dense<0.000000e+00> : vector<8xf32>
    %442 = vector.multi_reduction <add>, %441, %cst_169 [1] : vector<8x8xf32> to vector<8xf32>
    %443 = vector.shape_cast %442 : vector<8xf32> to vector<8x1xf32>
    %444 = tpu.reciprocal %443 {approx = true} : vector<8x1xf32> -> vector<8x1xf32>
    %445 = vector.broadcast %444 : vector<8x1xf32> to vector<8x8xf32>
    %446 = arith.mulf %441, %445 : vector<8x8xf32>
    %cst_170 = arith.constant dense<0.000000e+00> : vector<8x4xf32>
    %447 = tpu.matmul %446, %432, %cst_170 {dimension_numbers = #tpu.dot_dimension_numbers<[1], [0], [0], [1], [0, 0, 1, 1], [], []>} : vector<8x8xf32>, vector<8x4xf32>, vector<8x4xf32> -> vector<8x4xf32>
    %c0_171 = arith.constant 0 : index
    %c36_172 = arith.constant 36 : index
    %448 = vector.load %arg12[%c0_171, %c36_172] : memref<8x40xf32, #tpu.memory_space<vmem>>, vector<8x4xf32>
    tpu.vector_store %arg12[%c0_171, %c36_172], %447 {strides = array<i32>} : memref<8x40xf32, #tpu.memory_space<vmem>>, vector<8x4xf32>,
    %c0_173 = arith.constant 0 : index
    %c0_174 = arith.constant 0 : index
    %449 = vector.load %arg12[%c0_173, %c0_174] : memref<8x40xf32, #tpu.memory_space<vmem>>, vector<8x40xf32>
    %450 = arith.truncf %449 : vector<8x40xf32> to vector<8x40xbf16>
    %c1_175 = arith.constant 1 : index
    %c0_176 = arith.constant 0 : index
    %c0_177 = arith.constant 0 : index
    %451 = vector.load %arg7[%c1_175, %c0_176, %c0_177] : memref<2x40x40xbf16, #tpu.memory_space<vmem>>, vector<1x40x40xbf16>
    %452 = vector.shape_cast %451 : vector<1x40x40xbf16> to vector<40x40xbf16>
    %cst_178 = arith.constant dense<0.000000e+00> : vector<8x40xf32>
    %453 = tpu.matmul %450, %452, %cst_178 {dimension_numbers = #tpu.dot_dimension_numbers<[1], [0], [0], [1], [0, 0, 1, 1], [], []>} : vector<8x40xbf16>, vector<40x40xbf16>, vector<8x40xf32> -> vector<8x40xf32>
    %c1_179 = arith.constant 1 : index
    %c0_180 = arith.constant 0 : index
    %c0_181 = arith.constant 0 : index
    %454 = vector.load %arg8[%c1_179, %c0_180, %c0_181] : memref<2x1x40xf32, #tpu.memory_space<vmem>>, vector<1x1x40xf32>
    %455 = vector.shape_cast %454 : vector<1x1x40xf32> to vector<1x40xf32>
    %456 = vector.broadcast %455 : vector<1x40xf32> to vector<8x40xf32>
    %457 = arith.addf %453, %456 : vector<8x40xf32>
    %458 = arith.addf %250, %457 : vector<8x40xf32>
    %459 = vector.shape_cast %458 : vector<8x40xf32> to vector<1x8x40xf32>
    %cst_182 = arith.constant dense<0.000000e+00> : vector<1xf32>
    %460 = vector.multi_reduction <add>, %459, %cst_182 [1, 2] : vector<1x8x40xf32> to vector<1xf32>
    %461 = vector.shape_cast %460 : vector<1xf32> to vector<1x1x1xf32>
    %462 = vector.extract %461[0, 0, 0] : f32 from vector<1x1x1xf32>
    %cst_183 = arith.constant 3.125000e-03 : f32
    %463 = arith.mulf %462, %cst_183 : f32
    %464 = vector.broadcast %463 : f32 to vector<8x40xf32>
    %465 = arith.subf %458, %464 : vector<8x40xf32>
    %466 = arith.mulf %465, %465 : vector<8x40xf32>
    %467 = vector.shape_cast %466 : vector<8x40xf32> to vector<1x8x40xf32>
    %cst_184 = arith.constant dense<0.000000e+00> : vector<1xf32>
    %468 = vector.multi_reduction <add>, %467, %cst_184 [1, 2] : vector<1x8x40xf32> to vector<1xf32>
    %469 = vector.shape_cast %468 : vector<1xf32> to vector<1x1x1xf32>
    %470 = vector.extract %469[0, 0, 0] : f32 from vector<1x1x1xf32>
    %cst_185 = arith.constant 3.125000e-03 : f32
    %471 = arith.mulf %470, %cst_185 : f32
    %cst_186 = arith.constant 9.99999974E-6 : f32
    %472 = arith.addf %471, %cst_186 : f32
    %473 = math.rsqrt %472 : f32
    %474 = vector.broadcast %473 : f32 to vector<8x40xf32>
    %475 = arith.mulf %465, %474 : vector<8x40xf32>
    %c1_187 = arith.constant 1 : index
    %c0_188 = arith.constant 0 : index
    %c0_189 = arith.constant 0 : index
    %476 = vector.load %arg9[%c1_187, %c0_188, %c0_189] : memref<2x1x40xf32, #tpu.memory_space<vmem>>, vector<1x1x40xf32>
    %477 = vector.shape_cast %476 : vector<1x1x40xf32> to vector<1x40xf32>
    %478 = vector.broadcast %477 : vector<1x40xf32> to vector<8x40xf32>
    %479 = arith.mulf %475, %478 : vector<8x40xf32>
    %c1_190 = arith.constant 1 : index
    %c0_191 = arith.constant 0 : index
    %c0_192 = arith.constant 0 : index
    %480 = vector.load %arg10[%c1_190, %c0_191, %c0_192] : memref<2x1x40xf32, #tpu.memory_space<vmem>>, vector<1x1x40xf32>
    %481 = vector.shape_cast %480 : vector<1x1x40xf32> to vector<1x40xf32>
    %482 = vector.broadcast %481 : vector<1x40xf32> to vector<8x40xf32>
    %483 = arith.addf %479, %482 : vector<8x40xf32>
    %484 = math.tanh %483 : vector<8x40xf32>
    %c0_193 = arith.constant 0 : index
    %c0_194 = arith.constant 0 : index
    %c0_195 = arith.constant 0 : index
    %485 = vector.load %arg11[%c0_193, %c0_194, %c0_195] : memref<1x8x40xf32, #tpu.memory_space<vmem>>, vector<1x8x40xf32>
    %486 = vector.shape_cast %485 : vector<1x8x40xf32> to vector<8x40xf32>
    %487 = vector.shape_cast %484 : vector<8x40xf32> to vector<1x8x40xf32>
    tpu.vector_store %arg11[%c0_193, %c0_194, %c0_195], %487 {strides = array<i32>} : memref<1x8x40xf32, #tpu.memory_space<vmem>>, vector<1x8x40xf32>,
    return
  }
  func.func @transform_0(%arg0: i32, %arg1: memref<2xi32, #tpu.memory_space<smem>>) -> (i32, i32, i32) {
    %c0_i32 = arith.constant 0 : i32
    %c0_i32_0 = arith.constant 0 : i32
    %c0_i32_1 = arith.constant 0 : i32
    return %arg0, %c0_i32, %c0_i32_0 : i32, i32, i32
  }
  func.func @transform_1(%arg0: i32, %arg1: memref<2xi32, #tpu.memory_space<smem>>) -> (i32, i32) {
    %c0_i32 = arith.constant 0 : i32
    %c0_i32_0 = arith.constant 0 : i32
    %c0_i32_1 = arith.constant 0 : i32
    return %c0_i32, %c0_i32_0 : i32, i32
  }
  func.func @transform_2(%arg0: i32, %arg1: memref<2xi32, #tpu.memory_space<smem>>) -> (i32, i32) {
    %c0_i32 = arith.constant 0 : i32
    %c0_i32_0 = arith.constant 0 : i32
    %c0_i32_1 = arith.constant 0 : i32
    return %c0_i32, %c0_i32_0 : i32, i32
  }
  func.func @transform_3(%arg0: i32, %arg1: memref<2xi32, #tpu.memory_space<smem>>) -> (i32, i32, i32) {
    %c0_i32 = arith.constant 0 : i32
    %c0_i32_0 = arith.constant 0 : i32
    %c0_i32_1 = arith.constant 0 : i32
    %c0_i32_2 = arith.constant 0 : i32
    return %c0_i32, %c0_i32_0, %c0_i32_1 : i32, i32, i32
  }
  func.func @transform_4(%arg0: i32, %arg1: memref<2xi32, #tpu.memory_space<smem>>) -> (i32, i32, i32) {
    %c0_i32 = arith.constant 0 : i32
    %c0_i32_0 = arith.constant 0 : i32
    %c0_i32_1 = arith.constant 0 : i32
    %c0_i32_2 = arith.constant 0 : i32
    return %c0_i32, %c0_i32_0, %c0_i32_1 : i32, i32, i32
  }
  func.func @transform_5(%arg0: i32, %arg1: memref<2xi32, #tpu.memory_space<smem>>) -> (i32, i32, i32) {
    %c0_i32 = arith.constant 0 : i32
    %c0_i32_0 = arith.constant 0 : i32
    %c0_i32_1 = arith.constant 0 : i32
    %c0_i32_2 = arith.constant 0 : i32
    return %c0_i32, %c0_i32_0, %c0_i32_1 : i32, i32, i32
  }
  func.func @transform_6(%arg0: i32, %arg1: memref<2xi32, #tpu.memory_space<smem>>) -> (i32, i32, i32) {
    %c0_i32 = arith.constant 0 : i32
    %c0_i32_0 = arith.constant 0 : i32
    %c0_i32_1 = arith.constant 0 : i32
    %c0_i32_2 = arith.constant 0 : i32
    return %c0_i32, %c0_i32_0, %c0_i32_1 : i32, i32, i32
  }
  func.func @transform_7(%arg0: i32, %arg1: memref<2xi32, #tpu.memory_space<smem>>) -> (i32, i32, i32) {
    %c0_i32 = arith.constant 0 : i32
    %c0_i32_0 = arith.constant 0 : i32
    %c0_i32_1 = arith.constant 0 : i32
    %c0_i32_2 = arith.constant 0 : i32
    return %c0_i32, %c0_i32_0, %c0_i32_1 : i32, i32, i32
  }
  func.func @transform_8(%arg0: i32, %arg1: memref<2xi32, #tpu.memory_space<smem>>) -> (i32, i32, i32) {
    %c0_i32 = arith.constant 0 : i32
    %c0_i32_0 = arith.constant 0 : i32
    %c0_i32_1 = arith.constant 0 : i32
    %c0_i32_2 = arith.constant 0 : i32
    return %c0_i32, %c0_i32_0, %c0_i32_1 : i32, i32, i32
  }
  func.func @transform_9(%arg0: i32, %arg1: memref<2xi32, #tpu.memory_space<smem>>) -> (i32, i32, i32) {
    %c0_i32 = arith.constant 0 : i32
    %c0_i32_0 = arith.constant 0 : i32
    %c0_i32_1 = arith.constant 0 : i32
    return %arg0, %c0_i32, %c0_i32_0 : i32, i32, i32
  }
}

</mosaic_0001>

<llo_original>
// kernel: tpu_custom_call.1
$region0: #{tpu_custom_call.1}
  #allocation0 [shape = 'u32[]', space=smem, size = 0x4, offset = 0x4, fixed_abs, tag = 'smem constant byte address 0x4 - core index']
  #allocation1 [shape = 'u32[72,128]{1,0:T(1,128)}', space=vmem, size = 0x9000, scoped, tag = 'internal scratch']
  #allocation2 [shape = 'f32[8,40]{1,0:T(8,128)}', space=vmem, size = 0x1000, scoped, tag = 'scratch operand']
  #allocation3 [shape = 's32[1]{0}', space=sflag, size = 0x4, scoped, tag = 'scoped memory for tpu_custom_call.1']
  #allocation4 [shape = 'u8[512]{0}', space=smem, size = 0x200, scoped, tag = 'prefetched SMEM operand 0']
  %s0 = inlined_call_operand.hbm [shape: s32[2], index: 0, kind: input, shape index: {}]
  %s1 = inlined_call_operand.hbm [shape: f32[2,8,16], index: 1, kind: input, shape index: {}]
  %s2 = inlined_call_operand.hbm [shape: bf16[16,40], index: 2, kind: input, shape index: {}]
  %s3 = inlined_call_operand.hbm [shape: f32[1,40], index: 3, kind: input, shape index: {}]
  %s4 = inlined_call_operand.hbm [shape: bf16[2,40,120], index: 4, kind: input, shape index: {}]
  %s5 = inlined_call_operand.vmem [shape: f32[2,1,120], index: 5, kind: input, shape index: {}]
  %s6 = inlined_call_operand.hbm [shape: bf16[2,40,40], index: 6, kind: input, shape index: {}]
  %s7 = inlined_call_operand.vmem [shape: f32[2,1,40], index: 7, kind: input, shape index: {}]
  %s8 = inlined_call_operand.vmem [shape: f32[2,1,40], index: 8, kind: input, shape index: {}]
  %s9 = inlined_call_operand.vmem [shape: f32[2,1,40], index: 9, kind: input, shape index: {}]
  %s10 = inlined_call_operand.hbm [shape: f32[2,8,40], index: 10, kind: output, shape index: {}]
  %s11 = sld [smem:[#allocation0]]
  $region89: #{tpu_custom_call.1} parent=0
    _
  %s13 = ssub.s32 1, %s11
  %s14 = scalar_select 0, %s13, %s11
  %s16 = sshll.u32 %s0, 4
  %s17 = int_to_ptr.hbm [resolvable:$true] %s16
  %19 = dma.hbm_to_smem %s17, 16, [#allocation4], [#allocation3]
  %21 = dma.done [#allocation3], 16
  %22 = sfence
  $region1: #{tpu_custom_call.1} parent=0
    #allocation5 [shape = 'u8[8192]{0}', space=vmem, size = 0x2000, scoped, tag = 'input window, operand 1']
    #allocation6 [shape = 's32[2]{0}', space=sflag, size = 0x8, scoped, tag = 'scoped memory for tpu_custom_call.1']
    #allocation7 [shape = 's32[2]{0}', space=sflag, size = 0x8, scoped, tag = 'scoped memory for tpu_custom_call.1']
    #allocation8 [shape = 'u8[4096]{0}', space=vmem, size = 0x1000, scoped, tag = 'input window, operand 2, single buffered']
    #allocation9 [shape = 's32[1]{0}', space=sflag, size = 0x4, scoped, tag = 'scoped memory for tpu_custom_call.1']
    #allocation10 [shape = 'u8[512]{0}', space=vmem, size = 0x400, scoped, tag = 'input window, operand 3, single buffered']
    #allocation11 [shape = 'u8[20480]{0}', space=vmem, size = 0x5000, scoped, tag = 'input window, operand 4, single buffered']
    #allocation12 [shape = 's32[1]{0}', space=sflag, size = 0x4, scoped, tag = 'scoped memory for tpu_custom_call.1']
    #allocation13 [shape = 'u8[20480]{0}', space=vmem, size = 0x5000, scoped, tag = 'input window, operand 6, single buffered']
    #allocation14 [shape = 'u8[8192]{0}', space=vmem, size = 0x2000, scoped, tag = 'output window, operand 0']
    %23 = vsyncpa [#allocation6], 0
    %s24 = scalar_lea.sflag [#allocation6], 1
    %25 = vsyncpa %s24, 0
    %26 = vsyncpa [#allocation9], 0
    %27 = vsyncpa [#allocation12], 0
    %28 = vsyncpa [#allocation7], 0
    %s29 = scalar_lea.sflag [#allocation7], 1
    %30 = vsyncpa %s29, 0
    loop: start=0, step=1, limit=4
    $region2: #{tpu_custom_call.1} parent=1 // loop_pre_header
      _
    $region3: #{tpu_custom_call.1} parent=1 // loop_header
      %s32 = sphi 0, %s36
      %p33 = scmp.ge.s32.totalorder %s32, 4
      %s42 = sphi 0, %s44
      %s45 = sphi 0, %s42
      %s46 = sphi 0, %s45
      %s62 = sphi 0, %s46
      %s66 = sphi 0, %s66
      %s68 = sphi 0, %s66
      %s69 = sphi 0, %s68
      %s83 = sphi 0, %s69
      %s87 = sphi 0, %s87
      %s89 = sphi 0, %s87
      %s90 = sphi 0, %s89
      %s104 = sphi 0, %s90
      %s108 = sphi 0, %s108
      %s110 = sphi 0, %s108
      %s111 = sphi 0, %s110
      %s125 = sphi 0, %s111
      %s129 = sphi 0, %s129
      %s131 = sphi 0, %s129
      %s132 = sphi 0, %s131
      %s146 = sphi 0, %s132
      %s150 = sphi 0, %s150
      %s152 = sphi 0, %s150
      %s153 = sphi 0, %s152
      %s167 = sphi 0, %s153
      %s171 = sphi 0, %s171
      %s173 = sphi 0, %s171
      %s174 = sphi 0, %s173
      %s188 = sphi 0, %s174
      %s192 = sphi 0, %s192
      %s194 = sphi 0, %s192
      %s195 = sphi 0, %s194
      %s209 = sphi 0, %s195
      %s213 = sphi 0, %s213
      %s215 = sphi 0, %s213
      %s216 = sphi 0, %s215
      %s230 = sphi 0, %s216
      %s236 = sphi 0, %s238
      %s239 = sphi 0, %s236
      %s240 = sphi 0, %s239
      %s256 = sphi 0, %s240
    $region4: #{tpu_custom_call.1} parent=1 // loop_header_branch
      %35 = sbr.rel (%p33) target = $region8
    $region5: #{tpu_custom_call.1} parent=1 // loop_body
      %s37 = ssub.s32 %s32, 1
      %s38 = ssub.s32 %s32, 2
      %s39 = sadd.s32 %s32, 1
      %s40 = ssub.s32 %s32, %s39
      %p41 = scmp.eq.s32.totalorder %s40, 0
      %s43 = sadd.s32 %s42, 1
      %s44 = scalar_select %p41, %s42, %s43
      %p47 = pneg %p41
      %p48 = scmp.eq.s32.totalorder %s32, 1
      %p49 = por %p47, %p48
      %p50 = scmp.ne.s32.totalorder %s42, %s45
      %p51 = scmp.eq.s32.totalorder %s32, 0
      %p52 = por %p50, %p51
      %p53 = scmp.ne.s32.totalorder %s42, %s45
      %p54 = scmp.eq.s32.totalorder %s37, 1
      %p55 = por %p53, %p54
      %p56 = scmp.ne.s32.totalorder %s45, %s46
      %p57 = scmp.eq.s32.totalorder %s37, 0
      %p58 = por %p56, %p57
      %p59 = scmp.ne.s32.totalorder %s45, %s46
      %p60 = scmp.eq.s32.totalorder %s38, 1
      %p61 = por %p59, %p60
      %p63 = scmp.ne.s32.totalorder %s46, %s62
      %p64 = scmp.eq.s32.totalorder %s38, 0
      %p65 = por %p63, %p64
      %s67 = sadd.s32 %s66, 1
      %p70 = scmp.eq.s32.totalorder %s32, 1
      %p71 = scmp.ne.s32.totalorder %s66, %s68
      %p72 = scmp.eq.s32.totalorder %s32, 0
      %p73 = por %p71, %p72
      %p74 = scmp.ne.s32.totalorder %s66, %s68
      %p75 = scmp.eq.s32.totalorder %s37, 1
      %p76 = por %p74, %p75
      %p77 = scmp.ne.s32.totalorder %s68, %s69
      %p78 = scmp.eq.s32.totalorder %s37, 0
      %p79 = por %p77, %p78
      %p80 = scmp.ne.s32.totalorder %s68, %s69
      %p81 = scmp.eq.s32.totalorder %s38, 1
      %p82 = por %p80, %p81
      %p84 = scmp.ne.s32.totalorder %s69, %s83
      %p85 = scmp.eq.s32.totalorder %s38, 0
      %p86 = por %p84, %p85
      %s88 = sadd.s32 %s87, 1
      %p91 = scmp.eq.s32.totalorder %s32, 1
      %p92 = scmp.ne.s32.totalorder %s87, %s89
      %p93 = scmp.eq.s32.totalorder %s32, 0
      %p94 = por %p92, %p93
      %p95 = scmp.ne.s32.totalorder %s87, %s89
      %p96 = scmp.eq.s32.totalorder %s37, 1
      %p97 = por %p95, %p96
      %p98 = scmp.ne.s32.totalorder %s89, %s90
      %p99 = scmp.eq.s32.totalorder %s37, 0
      %p100 = por %p98, %p99
      %p101 = scmp.ne.s32.totalorder %s89, %s90
      %p102 = scmp.eq.s32.totalorder %s38, 1
      %p103 = por %p101, %p102
      %p105 = scmp.ne.s32.totalorder %s90, %s104
      %p106 = scmp.eq.s32.totalorder %s38, 0
      %p107 = por %p105, %p106
      %s109 = sadd.s32 %s108, 1
      %p112 = scmp.eq.s32.totalorder %s32, 1
      %p113 = scmp.ne.s32.totalorder %s108, %s110
      %p114 = scmp.eq.s32.totalorder %s32, 0
      %p115 = por %p113, %p114
      %p116 = scmp.ne.s32.totalorder %s108, %s110
      %p117 = scmp.eq.s32.totalorder %s37, 1
      %p118 = por %p116, %p117
      %p119 = scmp.ne.s32.totalorder %s110, %s111
      %p120 = scmp.eq.s32.totalorder %s37, 0
      %p121 = por %p119, %p120
      %p122 = scmp.ne.s32.totalorder %s110, %s111
      %p123 = scmp.eq.s32.totalorder %s38, 1
      %p124 = por %p122, %p123
      %p126 = scmp.ne.s32.totalorder %s111, %s125
      %p127 = scmp.eq.s32.totalorder %s38, 0
      %p128 = por %p126, %p127
      %s130 = sadd.s32 %s129, 1
      %p133 = scmp.eq.s32.totalorder %s32, 1
      %p134 = scmp.ne.s32.totalorder %s129, %s131
      %p135 = scmp.eq.s32.totalorder %s32, 0
      %p136 = por %p134, %p135
      %p137 = scmp.ne.s32.totalorder %s129, %s131
      %p138 = scmp.eq.s32.totalorder %s37, 1
      %p139 = por %p137, %p138
      %p140 = scmp.ne.s32.totalorder %s131, %s132
      %p141 = scmp.eq.s32.totalorder %s37, 0
      %p142 = por %p140, %p141
      %p143 = scmp.ne.s32.totalorder %s131, %s132
      %p144 = scmp.eq.s32.totalorder %s38, 1
      %p145 = por %p143, %p144
      %p147 = scmp.ne.s32.totalorder %s132, %s146
      %p148 = scmp.eq.s32.totalorder %s38, 0
      %p149 = por %p147, %p148
      %s151 = sadd.s32 %s150, 1
      %p154 = scmp.eq.s32.totalorder %s32, 1
      %p155 = scmp.ne.s32.totalorder %s150, %s152
      %p156 = scmp.eq.s32.totalorder %s32, 0
      %p157 = por %p155, %p156
      %p158 = scmp.ne.s32.totalorder %s150, %s152
      %p159 = scmp.eq.s32.totalorder %s37, 1
      %p160 = por %p158, %p159
      %p161 = scmp.ne.s32.totalorder %s152, %s153
      %p162 = scmp.eq.s32.totalorder %s37, 0
      %p163 = por %p161, %p162
      %p164 = scmp.ne.s32.totalorder %s152, %s153
      %p165 = scmp.eq.s32.totalorder %s38, 1
      %p166 = por %p164, %p165
      %p168 = scmp.ne.s32.totalorder %s153, %s167
      %p169 = scmp.eq.s32.totalorder %s38, 0
      %p170 = por %p168, %p169
      %s172 = sadd.s32 %s171, 1
      %p175 = scmp.eq.s32.totalorder %s32, 1
      %p176 = scmp.ne.s32.totalorder %s171, %s173
      %p177 = scmp.eq.s32.totalorder %s32, 0
      %p178 = por %p176, %p177
      %p179 = scmp.ne.s32.totalorder %s171, %s173
      %p180 = scmp.eq.s32.totalorder %s37, 1
      %p181 = por %p179, %p180
      %p182 = scmp.ne.s32.totalorder %s173, %s174
      %p183 = scmp.eq.s32.totalorder %s37, 0
      %p184 = por %p182, %p183
      %p185 = scmp.ne.s32.totalorder %s173, %s174
      %p186 = scmp.eq.s32.totalorder %s38, 1
      %p187 = por %p185, %p186
      %p189 = scmp.ne.s32.totalorder %s174, %s188
      %p190 = scmp.eq.s32.totalorder %s38, 0
      %p191 = por %p189, %p190
      %s193 = sadd.s32 %s192, 1
      %p196 = scmp.eq.s32.totalorder %s32, 1
      %p197 = scmp.ne.s32.totalorder %s192, %s194
      %p198 = scmp.eq.s32.totalorder %s32, 0
      %p199 = por %p197, %p198
      %p200 = scmp.ne.s32.totalorder %s192, %s194
      %p201 = scmp.eq.s32.totalorder %s37, 1
      %p202 = por %p200, %p201
      %p203 = scmp.ne.s32.totalorder %s194, %s195
      %p204 = scmp.eq.s32.totalorder %s37, 0
      %p205 = por %p203, %p204
      %p206 = scmp.ne.s32.totalorder %s194, %s195
      %p207 = scmp.eq.s32.totalorder %s38, 1
      %p208 = por %p206, %p207
      %p210 = scmp.ne.s32.totalorder %s195, %s209
      %p211 = scmp.eq.s32.totalorder %s38, 0
      %p212 = por %p210, %p211
      %s214 = sadd.s32 %s213, 1
      %p217 = scmp.eq.s32.totalorder %s32, 1
      %p218 = scmp.ne.s32.totalorder %s213, %s215
      %p219 = scmp.eq.s32.totalorder %s32, 0
      %p220 = por %p218, %p219
      %p221 = scmp.ne.s32.totalorder %s213, %s215
      %p222 = scmp.eq.s32.totalorder %s37, 1
      %p223 = por %p221, %p222
      %p224 = scmp.ne.s32.totalorder %s215, %s216
      %p225 = scmp.eq.s32.totalorder %s37, 0
      %p226 = por %p224, %p225
      %p227 = scmp.ne.s32.totalorder %s215, %s216
      %p228 = scmp.eq.s32.totalorder %s38, 1
      %p229 = por %p227, %p228
      %p231 = scmp.ne.s32.totalorder %s216, %s230
      %p232 = scmp.eq.s32.totalorder %s38, 0
      %p233 = por %p231, %p232
      %s234 = ssub.s32 %s32, %s39
      %p235 = scmp.eq.s32.totalorder %s234, 0
      %s237 = sadd.s32 %s236, 1
      %s238 = scalar_select %p235, %s236, %s237
      %p241 = pneg %p235
      %p242 = scmp.eq.s32.totalorder %s32, 1
      %p243 = por %p241, %p242
      %p244 = scmp.ne.s32.totalorder %s236, %s239
      %p245 = scmp.eq.s32.totalorder %s32, 0
      %p246 = por %p244, %p245
      %p247 = scmp.ne.s32.totalorder %s236, %s239
      %p248 = scmp.eq.s32.totalorder %s37, 1
      %p249 = por %p247, %p248
      %p250 = scmp.ne.s32.totalorder %s239, %s240
      %p251 = scmp.eq.s32.totalorder %s37, 0
      %p252 = por %p250, %p251
      %p253 = scmp.ne.s32.totalorder %s239, %s240
      %p254 = scmp.eq.s32.totalorder %s38, 1
      %p255 = por %p253, %p254
      %p257 = scmp.ne.s32.totalorder %s240, %s256
      %p258 = scmp.eq.s32.totalorder %s38, 0
      %p259 = por %p257, %p258
      %p260 = scmp.le.s32.totalorder 1, %s32
      %p261 = scmp.lt.s32.totalorder %s32, 3
      %p262 = pnand %p260, %p261
      %p263 = pneg %p262
      // Predicated region
      $region9: #{tpu_custom_call.1} parent=5 // pred_check
        _
      $region10: #{tpu_custom_call.1} parent=5 // pred_check_branch
        %265 = sbr.rel (%p262) target = $region12
      $region11: #{tpu_custom_call.1} parent=5 // pred_region
        %s266 = ssub.s32 %s32, 1
        // Predicated region
        $region13: #{tpu_custom_call.1} parent=11 // pred_check
          %p267 = pneg %p79
        $region14: #{tpu_custom_call.1} parent=11 // pred_check_branch
          %269 = sbr.rel (%p267) target = $region16
        $region15: #{tpu_custom_call.1} parent=11 // pred_region
          %271 = vsyncadd [#allocation9], 0
          %s272 = sshll.u32 %s2, 4
          %s273 = int_to_ptr.hbm [resolvable:$true] %s272
          %s274 = sshll.u32 [#allocation8], 4
          %s275 = int_to_ptr.vmem [resolvable:$true] %s274
          %280 = dma.hbm_to_vmem [thread:$0]  %s273, 128, %s275, [#allocation9], 64, 64, 4
        $region16: #{tpu_custom_call.1} parent=11 // pred_fallthru
          _
        // Predicated region
        $region17: #{tpu_custom_call.1} parent=11 // pred_check
          %p281 = pneg %p100
        $region18: #{tpu_custom_call.1} parent=11 // pred_check_branch
          %283 = sbr.rel (%p281) target = $region20
        $region19: #{tpu_custom_call.1} parent=11 // pred_region
          %285 = vsyncadd [#allocation9], 0
          %s287 = sshll.u32 %s3, 4
          %s288 = int_to_ptr.hbm [resolvable:$true] %s287
          %s289 = sshll.u32 [#allocation10], 4
          %s290 = int_to_ptr.vmem [resolvable:$true] %s289
          %292 = dma.hbm_to_vmem [thread:$0]  %s288, 16, %s290, [#allocation9]
        $region20: #{tpu_custom_call.1} parent=11 // pred_fallthru
          _
        // Predicated region
        $region21: #{tpu_custom_call.1} parent=11 // pred_check
          %p293 = pneg %p121
        $region22: #{tpu_custom_call.1} parent=11 // pred_check_branch
          %295 = sbr.rel (%p293) target = $region24
        $region23: #{tpu_custom_call.1} parent=11 // pred_region
          %297 = vsyncadd [#allocation12], 0
          %s298 = sshll.u32 %s4, 4
          %s299 = int_to_ptr.hbm [resolvable:$true] %s298
          %s300 = sshll.u32 [#allocation11], 4
          %s301 = int_to_ptr.vmem [resolvable:$true] %s300
          %306 = dma.hbm_to_vmem [thread:$0]  %s299, 640, %s301, [#allocation12], 64, 64, 4
        $region24: #{tpu_custom_call.1} parent=11 // pred_fallthru
          _
        // Predicated region
        $region25: #{tpu_custom_call.1} parent=11 // pred_check
          %p307 = pneg %p142
        $region26: #{tpu_custom_call.1} parent=11 // pred_check_branch
          %309 = sbr.rel (%p307) target = $region28
        $region27: #{tpu_custom_call.1} parent=11 // pred_region
          _
        $region28: #{tpu_custom_call.1} parent=11 // pred_fallthru
          _
        // Predicated region
        $region29: #{tpu_custom_call.1} parent=11 // pred_check
          %p310 = pneg %p163
        $region30: #{tpu_custom_call.1} parent=11 // pred_check_branch
          %312 = sbr.rel (%p310) target = $region32
        $region31: #{tpu_custom_call.1} parent=11 // pred_region
          %314 = vsyncadd [#allocation12], 0
          %s315 = sshll.u32 %s6, 4
          %s316 = int_to_ptr.hbm [resolvable:$true] %s315
          %s317 = sshll.u32 [#allocation13], 4
          %s318 = int_to_ptr.vmem [resolvable:$true] %s317
          %323 = dma.hbm_to_vmem [thread:$0]  %s316, 640, %s318, [#allocation12], 64, 64, 4
        $region32: #{tpu_custom_call.1} parent=11 // pred_fallthru
          _
        // Predicated region
        $region33: #{tpu_custom_call.1} parent=11 // pred_check
          %p324 = pneg %p184
        $region34: #{tpu_custom_call.1} parent=11 // pred_check_branch
          %326 = sbr.rel (%p324) target = $region36
        $region35: #{tpu_custom_call.1} parent=11 // pred_region
          _
        $region36: #{tpu_custom_call.1} parent=11 // pred_fallthru
          _
        // Predicated region
        $region37: #{tpu_custom_call.1} parent=11 // pred_check
          %p327 = pneg %p205
        $region38: #{tpu_custom_call.1} parent=11 // pred_check_branch
          %329 = sbr.rel (%p327) target = $region40
        $region39: #{tpu_custom_call.1} parent=11 // pred_region
          _
        $region40: #{tpu_custom_call.1} parent=11 // pred_fallthru
          _
        // Predicated region
        $region41: #{tpu_custom_call.1} parent=11 // pred_check
          %p330 = pneg %p226
        $region42: #{tpu_custom_call.1} parent=11 // pred_check_branch
          %332 = sbr.rel (%p330) target = $region44
        $region43: #{tpu_custom_call.1} parent=11 // pred_region
          _
        $region44: #{tpu_custom_call.1} parent=11 // pred_fallthru
          _
      $region12: #{tpu_custom_call.1} parent=5 // pred_fallthru
        _
      %p333 = scmp.lt.s32.totalorder %s32, 2
      // Predicated region
      $region45: #{tpu_custom_call.1} parent=5 // pred_check
        %p334 = pneg %p333
      $region46: #{tpu_custom_call.1} parent=5 // pred_check_branch
        %336 = sbr.rel (%p334) target = $region48
      $region47: #{tpu_custom_call.1} parent=5 // pred_region
        // Predicated region
        $region49: #{tpu_custom_call.1} parent=47 // pred_check
          %p337 = pneg %p52
        $region50: #{tpu_custom_call.1} parent=47 // pred_check_branch
          %339 = sbr.rel (%p337) target = $region52
        $region51: #{tpu_custom_call.1} parent=47 // pred_region
          %s340 = sand.u32 %s42, 1
          %s341 = scalar_lea.sflag [#allocation6], %s340
          %s342 = sand.u32 %s42, 1
          %s343 = smul.addr %s342, 8
          %s344 = scalar_lea.vmem [#allocation5], %s343
          %346 = vsyncadd %s341, 0
          %s347 = smul.addr %s32, 8
          %s348 = scalar_lea.hbm %s1, %s347
          %s350 = sshll.u32 %s348, 4
          %s351 = int_to_ptr.hbm [resolvable:$true] %s350
          %s352 = sshll.u32 %s344, 4
          %s353 = int_to_ptr.vmem [resolvable:$true] %s352
          %355 = dma.hbm_to_vmem [thread:$0]  %s351, 128, %s353, %s341
        $region52: #{tpu_custom_call.1} parent=47 // pred_fallthru
          _
      $region48: #{tpu_custom_call.1} parent=5 // pred_fallthru
        _
      %p356 = scmp.le.s32.totalorder 1, %s32
      %p357 = scmp.lt.s32.totalorder %s32, 3
      %p358 = pnand %p356, %p357
      %p359 = pneg %p358
      // Predicated region
      $region53: #{tpu_custom_call.1} parent=5 // pred_check
        _
      $region54: #{tpu_custom_call.1} parent=5 // pred_check_branch
        %361 = sbr.rel (%p358) target = $region56
      $region55: #{tpu_custom_call.1} parent=5 // pred_region
        %s362 = ssub.s32 %s32, 1
        %s363 = sand.u32 %s45, 1
        %s364 = scalar_lea.sflag [#allocation6], %s363
        %s365 = sand.u32 %s45, 1
        %s366 = smul.addr %s365, 8
        %s367 = scalar_lea.vmem [#allocation5], %s366
        // Predicated region
        $region57: #{tpu_custom_call.1} parent=55 // pred_check
          %p368 = pneg %p58
        $region58: #{tpu_custom_call.1} parent=55 // pred_check_branch
          %370 = sbr.rel (%p368) target = $region60
        $region59: #{tpu_custom_call.1} parent=55 // pred_region
          %372 = dma.done %s364, 128
        $region60: #{tpu_custom_call.1} parent=55 // pred_fallthru
          _
        // Predicated region
        $region61: #{tpu_custom_call.1} parent=55 // pred_check
          %p373 = pneg %p79
        $region62: #{tpu_custom_call.1} parent=55 // pred_check_branch
          %375 = sbr.rel (%p373) target = $region64
        $region63: #{tpu_custom_call.1} parent=55 // pred_region
          %377 = dma.done [#allocation9], 128
        $region64: #{tpu_custom_call.1} parent=55 // pred_fallthru
          _
        // Predicated region
        $region65: #{tpu_custom_call.1} parent=55 // pred_check
          %p378 = pneg %p100
        $region66: #{tpu_custom_call.1} parent=55 // pred_check_branch
          %380 = sbr.rel (%p378) target = $region68
        $region67: #{tpu_custom_call.1} parent=55 // pred_region
          %382 = dma.done [#allocation9], 16
        $region68: #{tpu_custom_call.1} parent=55 // pred_fallthru
          _
        // Predicated region
        $region69: #{tpu_custom_call.1} parent=55 // pred_check
          %p383 = pneg %p121
        $region70: #{tpu_custom_call.1} parent=55 // pred_check_branch
          %385 = sbr.rel (%p383) target = $region72
        $region71: #{tpu_custom_call.1} parent=55 // pred_region
          %387 = dma.done [#allocation12], 640
        $region72: #{tpu_custom_call.1} parent=55 // pred_fallthru
          _
        // Predicated region
        $region73: #{tpu_custom_call.1} parent=55 // pred_check
          %p388 = pneg %p163
        $region74: #{tpu_custom_call.1} parent=55 // pred_check_branch
          %390 = sbr.rel (%p388) target = $region76
        $region75: #{tpu_custom_call.1} parent=55 // pred_region
          %392 = dma.done [#allocation12], 640
        $region76: #{tpu_custom_call.1} parent=55 // pred_fallthru
          _
        %s393 = sand.u32 %s45, 1
        %s394 = scalar_lea.sflag [#allocation6], %s393
        %s395 = sand.u32 %s45, 1
        %s396 = smul.addr %s395, 8
        %s397 = scalar_lea.vmem [#allocation5], %s396
        %p398 = pneg %p58
        %p399 = pneg %p55
        %p400 = pneg %p79
        %p401 = pneg %p76
        %p402 = pneg %p100
        %p403 = pneg %p97
        %p404 = pneg %p121
        %p405 = pneg %p118
        %p406 = pneg %p142
        %p407 = pneg %p139
        %p408 = pneg %p163
        %p409 = pneg %p160
        %p410 = pneg %p184
        %p411 = pneg %p181
        %p412 = pneg %p205
        %p413 = pneg %p202
        %p414 = pneg %p226
        %p415 = pneg %p223
        %p416 = pneg %p252
        %p417 = pneg %p249
        %s418 = sand.u32 %s239, 1
        %s419 = scalar_lea.sflag [#allocation7], %s418
        %s420 = sand.u32 %s239, 1
        %s421 = smul.addr %s420, 8
        %s422 = scalar_lea.vmem [#allocation14], %s421
        %v424 = vld [vmem:[%s367] sm:$0xff]
        %v425 = vpack.c.bf16 %v424, %v424
        %v426 = vld [vmem:[#allocation8] sm:$0xf]
        %v427 = vld [vmem:[#allocation8 + $0x4] sm:$0xf]
        %v428 = vld [vmem:[#allocation10] sm:$0x1]
        %v430 = vperm.slane %v428, 0
        %v434 = vunpack.c.l.b16 %v426
        %v435 = vunpack.c.l.b16 %v427
        %v436 = vpack.c.b16 %v435, %v434
        %vm438 = vcmask 130048
        %v440 = vsel %vm438, %v425, 0
        %442 = vmatpush.bf16.msra.mxu0 0
        %443 = vmatpush.bf16.msra.mxu0 0
        %444 = vmatpush.bf16.msra.mxu0 0
        %445 = vmatpush.bf16.msra.mxu0 0
        %446 = vmatpush.bf16.msra.mxu0 0
        %447 = vmatpush.bf16.msra.mxu0 0
        %448 = vmatpush.bf16.msra.mxu0 0
        %449 = vmatpush.bf16.msra.mxu0 %v436
        %450 = vmatmul.bf16.gmra.mxu0 %v440
        %v451 = vpop.f32.mrf.mxu0
        %v452 = vadd.f32 %v430, %v451
        %v453 = vpop.f32.mrf.mxu0
        %454 = vdwg.mxu0
        %v455 = vmax.f32 %v452, 0.0
        %v456 = vlaneseq
        %v457 = vand.u32 %v456, 127
        %s458 = sld [smem:[#allocation4 + %s37]]
        %v459 = vstv %s458
        %vm460 = vcmp.lt.s32.totalorder %v457, %v459
        %v461 = vsel %vm460, 0.0, -1e+30
        %v462 = vpack.c.bf16 %v455, %v455
        %v463 = vld [vmem:[#allocation11] sm:$0xf]
        %v464 = vld [vmem:[#allocation11 + $0x4] sm:$0xf]
        %v465 = vld [vmem:[#allocation11 + $0x8] sm:$0xf]
        %v466 = vld [vmem:[#allocation11 + $0xc] sm:$0xf]
        %v467 = vld [vmem:[#allocation11 + $0x10] sm:$0xf]
        %v468 = vld [vmem:[%s5] sm:$0x1]
        %v470 = vperm.slane %v468, 0
        %v477 = vunpack.c.l.b16 %v463
        %v478 = vunpack.c.l.b16 %v464
        %v479 = vunpack.c.l.b16 %v465
        %v480 = vunpack.c.l.b16 %v466
        %v481 = vunpack.c.l.b16 %v467
        %v482 = vpack.c.b16 %v478, %v477
        %v483 = vpack.c.b16 %v480, %v479
        %v484 = vpack.c.b16 %v481, %v481
        %vm487 = vcmask 326656
        %v489 = vsel %vm487, %v462, 0
        %vm491 = vcmask 1043456
        %v493 = vsel %vm491, %v484, 0
        %495 = vmatpush.bf16.msra.mxu0 0
        %496 = vmatpush.bf16.msra.mxu0 0
        %497 = vmatpush.bf16.msra.mxu0 0
        %498 = vmatpush.bf16.msra.mxu0 0
        %499 = vmatpush.bf16.msra.mxu0 0
        %500 = vmatpush.bf16.msra.mxu0 %v493
        %501 = vmatpush.bf16.msra.mxu0 %v483
        %502 = vmatpush.bf16.msra.mxu0 %v482
        %503 = vmatmul.bf16.gmra.mxu0 %v489
        %v504 = vpop.f32.mrf.mxu0
        %v505 = vadd.f32 %v470, %v504
        %v506 = vpop.f32.mrf.mxu0
        %507 = vdwg.mxu0
        %509 = vrot.lane.b32.xlu0 %v505, 88
        %v510 = vpop.permute.xlu0 %509
        %vm511 = vcmask 31744
        %v512 = vsel %vm511, %v505, 0
        %v514 = vsel %vm511, %v510, 0
        %516 = vmatpush.xpose.msra.mxu0 0.0
        %517 = vmatpush.xpose.msra.mxu0 0.0
        %518 = vmatpush.xpose.msra.mxu0 0.0
        %519 = vmatpush.xpose.msra.mxu0 0.0
        %520 = vmatpush.xpose.msra.mxu0 0.0
        %521 = vmatpush.xpose.msra.mxu0 0.0
        %522 = vmatpush.xpose.msra.mxu0 0.0
        %523 = vmatpush.xpose.msra.mxu0 0.0
        %524 = vmatpush.xpose.msra.mxu0 0.0
        %525 = vmatpush.xpose.msra.mxu0 0.0
        %526 = vmatpush.xpose.msra.mxu0 0.0
        %527 = vmatpush.xpose.msra.mxu0 0.0
        %528 = vmatpush.xpose.msra.mxu0 0.0
        %529 = vmatpush.xpose.msra.mxu0 0.0
        %530 = vmatpush.xpose.msra.mxu0 0.0
        %531 = vmatpush.xpose.msra.mxu0 %v514
        %532 = vmatmul.f32.gmra.mxu0 %v512
        %v533 = vpop.f32.mrf.mxu0
        %v534 = vadd.f32 0.0, %v533
        %535 = vdwg.mxu0
        %v536 = vmul.f32 %v534, 0.5
        %v537 = vadd.f32 %v536, %v461
        %vm538 = vcmask 64512
        %v539 = vsel %vm538, %v537, -inf
        %540 = vmax.xlane.f32.xlu0 %v539
        %v541 = vpop.xlane.xlu0 %540
        %v542 = vsub.f32 %v537, %v541
        %v543 = vmul.f32 %v542, 1.442695
        %v544 = vpow.pop %v543
        %v545 = vsel %vm538, %v544, 0.0
        %546 = vadd.xlane.f32.xlu0 %v545
        %v547 = vpop.xlane.xlu0 %546
        %v548 = vrcp.pop %v547
        %v549 = vmul.f32 %v544, %v548
        %550 = vrot.lane.b32.xlu0 %v505, 48
        %v551 = vpop.permute.xlu0 %550
        %v554 = vsel %vm538, %v549, 0
        %556 = vmatpush.msra.mxu0 0.0
        %557 = vmatpush.msra.mxu0 0.0
        %558 = vmatpush.msra.mxu0 0.0
        %559 = vmatpush.msra.mxu0 0.0
        %560 = vmatpush.msra.mxu0 0.0
        %561 = vmatpush.msra.mxu0 0.0
        %562 = vmatpush.msra.mxu0 0.0
        %563 = vmatpush.msra.mxu0 0.0
        %564 = vmatpush.msra.mxu0 0.0
        %565 = vmatpush.msra.mxu0 0.0
        %566 = vmatpush.msra.mxu0 0.0
        %567 = vmatpush.msra.mxu0 0.0
        %568 = vmatpush.msra.mxu0 0.0
        %569 = vmatpush.msra.mxu0 0.0
        %570 = vmatpush.msra.mxu0 0.0
        %571 = vmatpush.msra.mxu0 %v551
        %572 = vmatmul.f32.gmra.mxu0 %v554
        %v573 = vpop.f32.mrf.mxu0
        %v574 = vadd.f32 0.0, %v573
        %575 = vdwg.mxu0
        %576 = vst.msk [vmem:[#allocation2] sm:$0xff] %vm511, %v574
        %577 = vrot.lane.b32.xlu0 %v505, 124
        %v578 = vpop.permute.xlu0 %577
        %579 = vrot.lane.b32.xlu0 %v505, 84
        %v580 = vpop.permute.xlu0 %579
        %v581 = vsel %vm511, %v578, 0
        %v583 = vsel %vm511, %v580, 0
        %585 = vmatpush.xpose.msra.mxu0 0.0
        %586 = vmatpush.xpose.msra.mxu0 0.0
        %587 = vmatpush.xpose.msra.mxu0 0.0
        %588 = vmatpush.xpose.msra.mxu0 0.0
        %589 = vmatpush.xpose.msra.mxu0 0.0
        %590 = vmatpush.xpose.msra.mxu0 0.0
        %591 = vmatpush.xpose.msra.mxu0 0.0
        %592 = vmatpush.xpose.msra.mxu0 0.0
        %593 = vmatpush.xpose.msra.mxu0 0.0
        %594 = vmatpush.xpose.msra.mxu0 0.0
        %595 = vmatpush.xpose.msra.mxu0 0.0
        %596 = vmatpush.xpose.msra.mxu0 0.0
        %597 = vmatpush.xpose.msra.mxu0 0.0
        %598 = vmatpush.xpose.msra.mxu0 0.0
        %599 = vmatpush.xpose.msra.mxu0 0.0
        %600 = vmatpush.xpose.msra.mxu0 %v583
        %601 = vmatmul.f32.gmra.mxu0 %v581
        %v602 = vpop.f32.mrf.mxu0
        %v603 = vadd.f32 0.0, %v602
        %604 = vdwg.mxu0
        %v605 = vmul.f32 %v603, 0.5
        %v606 = vadd.f32 %v605, %v461
        %v607 = vsel %vm538, %v606, -inf
        %608 = vmax.xlane.f32.xlu0 %v607
        %v609 = vpop.xlane.xlu0 %608
        %v610 = vsub.f32 %v606, %v609
        %v611 = vmul.f32 %v610, 1.442695
        %v612 = vpow.pop %v611
        %v613 = vsel %vm538, %v612, 0.0
        %614 = vadd.xlane.f32.xlu0 %v613
        %v615 = vpop.xlane.xlu0 %614
        %v616 = vrcp.pop %v615
        %v617 = vmul.f32 %v612, %v616
        %618 = vrot.lane.b32.xlu0 %v505, 44
        %v619 = vpop.permute.xlu0 %618
        %v622 = vsel %vm538, %v617, 0
        %624 = vmatpush.msra.mxu0 0.0
        %625 = vmatpush.msra.mxu0 0.0
        %626 = vmatpush.msra.mxu0 0.0
        %627 = vmatpush.msra.mxu0 0.0
        %628 = vmatpush.msra.mxu0 0.0
        %629 = vmatpush.msra.mxu0 0.0
        %630 = vmatpush.msra.mxu0 0.0
        %631 = vmatpush.msra.mxu0 0.0
        %632 = vmatpush.msra.mxu0 0.0
        %633 = vmatpush.msra.mxu0 0.0
        %634 = vmatpush.msra.mxu0 0.0
        %635 = vmatpush.msra.mxu0 0.0
        %636 = vmatpush.msra.mxu0 0.0
        %637 = vmatpush.msra.mxu0 0.0
        %638 = vmatpush.msra.mxu0 0.0
        %639 = vmatpush.msra.mxu0 %v619
        %640 = vmatmul.f32.gmra.mxu0 %v622
        %v641 = vpop.f32.mrf.mxu0
        %v642 = vadd.f32 0.0, %v641
        %643 = vdwg.mxu0
        %645 = vrot.lane.b32.xlu0 %v642, 4
        %v646 = vpop.permute.xlu0 %645
        %vm648 = vcmask 64544
        %649 = vst.msk [vmem:[#allocation2] sm:$0xff] %vm648, %v646
        %650 = vrot.lane.b32.xlu0 %v505, 120
        %v651 = vpop.permute.xlu0 %650
        %652 = vrot.lane.b32.xlu0 %v505, 80
        %v653 = vpop.permute.xlu0 %652
        %v654 = vsel %vm511, %v651, 0
        %v656 = vsel %vm511, %v653, 0
        %658 = vmatpush.xpose.msra.mxu0 0.0
        %659 = vmatpush.xpose.msra.mxu0 0.0
        %660 = vmatpush.xpose.msra.mxu0 0.0
        %661 = vmatpush.xpose.msra.mxu0 0.0
        %662 = vmatpush.xpose.msra.mxu0 0.0
        %663 = vmatpush.xpose.msra.mxu0 0.0
        %664 = vmatpush.xpose.msra.mxu0 0.0
        %665 = vmatpush.xpose.msra.mxu0 0.0
        %666 = vmatpush.xpose.msra.mxu0 0.0
        %667 = vmatpush.xpose.msra.mxu0 0.0
        %668 = vmatpush.xpose.msra.mxu0 0.0
        %669 = vmatpush.xpose.msra.mxu0 0.0
        %670 = vmatpush.xpose.msra.mxu0 0.0
        %671 = vmatpush.xpose.msra.mxu0 0.0
        %672 = vmatpush.xpose.msra.mxu0 0.0
        %673 = vmatpush.xpose.msra.mxu0 %v656
        %674 = vmatmul.f32.gmra.mxu0 %v654
        %v675 = vpop.f32.mrf.mxu0
        %v676 = vadd.f32 0.0, %v675
        %677 = vdwg.mxu0
        %v678 = vmul.f32 %v676, 0.5
        %v679 = vadd.f32 %v678, %v461
        %v680 = vsel %vm538, %v679, -inf
        %681 = vmax.xlane.f32.xlu0 %v680
        %v682 = vpop.xlane.xlu0 %681
        %v683 = vsub.f32 %v679, %v682
        %v684 = vmul.f32 %v683, 1.442695
        %v685 = vpow.pop %v684
        %v686 = vsel %vm538, %v685, 0.0
        %687 = vadd.xlane.f32.xlu0 %v686
        %v688 = vpop.xlane.xlu0 %687
        %v689 = vrcp.pop %v688
        %v690 = vmul.f32 %v685, %v689
        %691 = vrot.lane.b32.xlu0 %v505, 40
        %v692 = vpop.permute.xlu0 %691
        %v695 = vsel %vm538, %v690, 0
        %697 = vmatpush.msra.mxu0 0.0
        %698 = vmatpush.msra.mxu0 0.0
        %699 = vmatpush.msra.mxu0 0.0
        %700 = vmatpush.msra.mxu0 0.0
        %701 = vmatpush.msra.mxu0 0.0
        %702 = vmatpush.msra.mxu0 0.0
        %703 = vmatpush.msra.mxu0 0.0
        %704 = vmatpush.msra.mxu0 0.0
        %705 = vmatpush.msra.mxu0 0.0
        %706 = vmatpush.msra.mxu0 0.0
        %707 = vmatpush.msra.mxu0 0.0
        %708 = vmatpush.msra.mxu0 0.0
        %709 = vmatpush.msra.mxu0 0.0
        %710 = vmatpush.msra.mxu0 0.0
        %711 = vmatpush.msra.mxu0 0.0
        %712 = vmatpush.msra.mxu0 %v692
        %713 = vmatmul.f32.gmra.mxu0 %v695
        %v714 = vpop.f32.mrf.mxu0
        %v715 = vadd.f32 0.0, %v714
        %716 = vdwg.mxu0
        %718 = vrot.lane.b32.xlu0 %v715, 8
        %v719 = vpop.permute.xlu0 %718
        %vm721 = vcmask 97344
        %722 = vst.msk [vmem:[#allocation2] sm:$0xff] %vm721, %v719
        %723 = vrot.lane.b32.xlu0 %v505, 116
        %v724 = vpop.permute.xlu0 %723
        %725 = vrot.lane.b32.xlu0 %v505, 76
        %v726 = vpop.permute.xlu0 %725
        %v727 = vsel %vm511, %v724, 0
        %v729 = vsel %vm511, %v726, 0
        %731 = vmatpush.xpose.msra.mxu0 0.0
        %732 = vmatpush.xpose.msra.mxu0 0.0
        %733 = vmatpush.xpose.msra.mxu0 0.0
        %734 = vmatpush.xpose.msra.mxu0 0.0
        %735 = vmatpush.xpose.msra.mxu0 0.0
        %736 = vmatpush.xpose.msra.mxu0 0.0
        %737 = vmatpush.xpose.msra.mxu0 0.0
        %738 = vmatpush.xpose.msra.mxu0 0.0
        %739 = vmatpush.xpose.msra.mxu0 0.0
        %740 = vmatpush.xpose.msra.mxu0 0.0
        %741 = vmatpush.xpose.msra.mxu0 0.0
        %742 = vmatpush.xpose.msra.mxu0 0.0
        %743 = vmatpush.xpose.msra.mxu0 0.0
        %744 = vmatpush.xpose.msra.mxu0 0.0
        %745 = vmatpush.xpose.msra.mxu0 0.0
        %746 = vmatpush.xpose.msra.mxu0 %v729
        %747 = vmatmul.f32.gmra.mxu0 %v727
        %v748 = vpop.f32.mrf.mxu0
        %v749 = vadd.f32 0.0, %v748
        %750 = vdwg.mxu0
        %v751 = vmul.f32 %v749, 0.5
        %v752 = vadd.f32 %v751, %v461
        %v753 = vsel %vm538, %v752, -inf
        %754 = vmax.xlane.f32.xlu0 %v753
        %v755 = vpop.xlane.xlu0 %754
        %v756 = vsub.f32 %v752, %v755
        %v757 = vmul.f32 %v756, 1.442695
        %v758 = vpow.pop %v757
        %v759 = vsel %vm538, %v758, 0.0
        %760 = vadd.xlane.f32.xlu0 %v759
        %v761 = vpop.xlane.xlu0 %760
        %v762 = vrcp.pop %v761
        %v763 = vmul.f32 %v758, %v762
        %764 = vrot.lane.b32.xlu0 %v505, 36
        %v765 = vpop.permute.xlu0 %764
        %v768 = vsel %vm538, %v763, 0
        %770 = vmatpush.msra.mxu0 0.0
        %771 = vmatpush.msra.mxu0 0.0
        %772 = vmatpush.msra.mxu0 0.0
        %773 = vmatpush.msra.mxu0 0.0
        %774 = vmatpush.msra.mxu0 0.0
        %775 = vmatpush.msra.mxu0 0.0
        %776 = vmatpush.msra.mxu0 0.0
        %777 = vmatpush.msra.mxu0 0.0
        %778 = vmatpush.msra.mxu0 0.0
        %779 = vmatpush.msra.mxu0 0.0
        %780 = vmatpush.msra.mxu0 0.0
        %781 = vmatpush.msra.mxu0 0.0
        %782 = vmatpush.msra.mxu0 0.0
        %783 = vmatpush.msra.mxu0 0.0
        %784 = vmatpush.msra.mxu0 0.0
        %785 = vmatpush.msra.mxu0 %v765
        %786 = vmatmul.f32.gmra.mxu0 %v768
        %v787 = vpop.f32.mrf.mxu0
        %v788 = vadd.f32 0.0, %v787
        %789 = vdwg.mxu0
        %791 = vrot.lane.b32.xlu0 %v788, 12
        %v792 = vpop.permute.xlu0 %791
        %vm794 = vcmask 130144
        %795 = vst.msk [vmem:[#allocation2] sm:$0xff] %vm794, %v792
        %796 = vrot.lane.b32.xlu0 %v505, 112
        %v797 = vpop.permute.xlu0 %796
        %798 = vrot.lane.b32.xlu0 %v505, 72
        %v799 = vpop.permute.xlu0 %798
        %v800 = vsel %vm511, %v797, 0
        %v802 = vsel %vm511, %v799, 0
        %804 = vmatpush.xpose.msra.mxu0 0.0
        %805 = vmatpush.xpose.msra.mxu0 0.0
        %806 = vmatpush.xpose.msra.mxu0 0.0
        %807 = vmatpush.xpose.msra.mxu0 0.0
        %808 = vmatpush.xpose.msra.mxu0 0.0
        %809 = vmatpush.xpose.msra.mxu0 0.0
        %810 = vmatpush.xpose.msra.mxu0 0.0
        %811 = vmatpush.xpose.msra.mxu0 0.0
        %812 = vmatpush.xpose.msra.mxu0 0.0
        %813 = vmatpush.xpose.msra.mxu0 0.0
        %814 = vmatpush.xpose.msra.mxu0 0.0
        %815 = vmatpush.xpose.msra.mxu0 0.0
        %816 = vmatpush.xpose.msra.mxu0 0.0
        %817 = vmatpush.xpose.msra.mxu0 0.0
        %818 = vmatpush.xpose.msra.mxu0 0.0
        %819 = vmatpush.xpose.msra.mxu0 %v802
        %820 = vmatmul.f32.gmra.mxu0 %v800
        %v821 = vpop.f32.mrf.mxu0
        %v822 = vadd.f32 0.0, %v821
        %823 = vdwg.mxu0
        %v824 = vmul.f32 %v822, 0.5
        %v825 = vadd.f32 %v824, %v461
        %v826 = vsel %vm538, %v825, -inf
        %827 = vmax.xlane.f32.xlu0 %v826
        %v828 = vpop.xlane.xlu0 %827
        %v829 = vsub.f32 %v825, %v828
        %v830 = vmul.f32 %v829, 1.442695
        %v831 = vpow.pop %v830
        %v832 = vsel %vm538, %v831, 0.0
        %833 = vadd.xlane.f32.xlu0 %v832
        %v834 = vpop.xlane.xlu0 %833
        %v835 = vrcp.pop %v834
        %v836 = vmul.f32 %v831, %v835
        %837 = vrot.lane.b32.xlu0 %v505, 32
        %v838 = vpop.permute.xlu0 %837
        %v841 = vsel %vm538, %v836, 0
        %843 = vmatpush.msra.mxu0 0.0
        %844 = vmatpush.msra.mxu0 0.0
        %845 = vmatpush.msra.mxu0 0.0
        %846 = vmatpush.msra.mxu0 0.0
        %847 = vmatpush.msra.mxu0 0.0
        %848 = vmatpush.msra.mxu0 0.0
        %849 = vmatpush.msra.mxu0 0.0
        %850 = vmatpush.msra.mxu0 0.0
        %851 = vmatpush.msra.mxu0 0.0
        %852 = vmatpush.msra.mxu0 0.0
        %853 = vmatpush.msra.mxu0 0.0
        %854 = vmatpush.msra.mxu0 0.0
        %855 = vmatpush.msra.mxu0 0.0
        %856 = vmatpush.msra.mxu0 0.0
        %857 = vmatpush.msra.mxu0 0.0
        %858 = vmatpush.msra.mxu0 %v838
        %859 = vmatmul.f32.gmra.mxu0 %v841
        %v860 = vpop.f32.mrf.mxu0
        %v861 = vadd.f32 0.0, %v860
        %862 = vdwg.mxu0
        %864 = vrot.lane.b32.xlu0 %v861, 16
        %v865 = vpop.permute.xlu0 %864
        %vm867 = vcmask 162944
        %868 = vst.msk [vmem:[#allocation2] sm:$0xff] %vm867, %v865
        %869 = vrot.lane.b32.xlu0 %v505, 108
        %v870 = vpop.permute.xlu0 %869
        %871 = vrot.lane.b32.xlu0 %v505, 68
        %v872 = vpop.permute.xlu0 %871
        %v873 = vsel %vm511, %v870, 0
        %v875 = vsel %vm511, %v872, 0
        %877 = vmatpush.xpose.msra.mxu0 0.0
        %878 = vmatpush.xpose.msra.mxu0 0.0
        %879 = vmatpush.xpose.msra.mxu0 0.0
        %880 = vmatpush.xpose.msra.mxu0 0.0
        %881 = vmatpush.xpose.msra.mxu0 0.0
        %882 = vmatpush.xpose.msra.mxu0 0.0
        %883 = vmatpush.xpose.msra.mxu0 0.0
        %884 = vmatpush.xpose.msra.mxu0 0.0
        %885 = vmatpush.xpose.msra.mxu0 0.0
        %886 = vmatpush.xpose.msra.mxu0 0.0
        %887 = vmatpush.xpose.msra.mxu0 0.0
        %888 = vmatpush.xpose.msra.mxu0 0.0
        %889 = vmatpush.xpose.msra.mxu0 0.0
        %890 = vmatpush.xpose.msra.mxu0 0.0
        %891 = vmatpush.xpose.msra.mxu0 0.0
        %892 = vmatpush.xpose.msra.mxu0 %v875
        %893 = vmatmul.f32.gmra.mxu0 %v873
        %v894 = vpop.f32.mrf.mxu0
        %v895 = vadd.f32 0.0, %v894
        %896 = vdwg.mxu0
        %v897 = vmul.f32 %v895, 0.5
        %v898 = vadd.f32 %v897, %v461
        %v899 = vsel %vm538, %v898, -inf
        %900 = vmax.xlane.f32.xlu0 %v899
        %v901 = vpop.xlane.xlu0 %900
        %v902 = vsub.f32 %v898, %v901
        %v903 = vmul.f32 %v902, 1.442695
        %v904 = vpow.pop %v903
        %v905 = vsel %vm538, %v904, 0.0
        %906 = vadd.xlane.f32.xlu0 %v905
        %v907 = vpop.xlane.xlu0 %906
        %v908 = vrcp.pop %v907
        %v909 = vmul.f32 %v904, %v908
        %910 = vrot.lane.b32.xlu0 %v505, 28
        %v911 = vpop.permute.xlu0 %910
        %v914 = vsel %vm538, %v909, 0
        %916 = vmatpush.msra.mxu0 0.0
        %917 = vmatpush.msra.mxu0 0.0
        %918 = vmatpush.msra.mxu0 0.0
        %919 = vmatpush.msra.mxu0 0.0
        %920 = vmatpush.msra.mxu0 0.0
        %921 = vmatpush.msra.mxu0 0.0
        %922 = vmatpush.msra.mxu0 0.0
        %923 = vmatpush.msra.mxu0 0.0
        %924 = vmatpush.msra.mxu0 0.0
        %925 = vmatpush.msra.mxu0 0.0
        %926 = vmatpush.msra.mxu0 0.0
        %927 = vmatpush.msra.mxu0 0.0
        %928 = vmatpush.msra.mxu0 0.0
        %929 = vmatpush.msra.mxu0 0.0
        %930 = vmatpush.msra.mxu0 0.0
        %931 = vmatpush.msra.mxu0 %v911
        %932 = vmatmul.f32.gmra.mxu0 %v914
        %v933 = vpop.f32.mrf.mxu0
        %v934 = vadd.f32 0.0, %v933
        %935 = vdwg.mxu0
        %937 = vrot.lane.b32.xlu0 %v934, 20
        %v938 = vpop.permute.xlu0 %937
        %vm940 = vcmask 195744
        %941 = vst.msk [vmem:[#allocation2] sm:$0xff] %vm940, %v938
        %942 = vrot.lane.b32.xlu0 %v505, 104
        %v943 = vpop.permute.xlu0 %942
        %944 = vrot.lane.b32.xlu0 %v505, 64
        %v945 = vpop.permute.xlu0 %944
        %v946 = vsel %vm511, %v943, 0
        %v948 = vsel %vm511, %v945, 0
        %950 = vmatpush.xpose.msra.mxu0 0.0
        %951 = vmatpush.xpose.msra.mxu0 0.0
        %952 = vmatpush.xpose.msra.mxu0 0.0
        %953 = vmatpush.xpose.msra.mxu0 0.0
        %954 = vmatpush.xpose.msra.mxu0 0.0
        %955 = vmatpush.xpose.msra.mxu0 0.0
        %956 = vmatpush.xpose.msra.mxu0 0.0
        %957 = vmatpush.xpose.msra.mxu0 0.0
        %958 = vmatpush.xpose.msra.mxu0 0.0
        %959 = vmatpush.xpose.msra.mxu0 0.0
        %960 = vmatpush.xpose.msra.mxu0 0.0
        %961 = vmatpush.xpose.msra.mxu0 0.0
        %962 = vmatpush.xpose.msra.mxu0 0.0
        %963 = vmatpush.xpose.msra.mxu0 0.0
        %964 = vmatpush.xpose.msra.mxu0 0.0
        %965 = vmatpush.xpose.msra.mxu0 %v948
        %966 = vmatmul.f32.gmra.mxu0 %v946
        %v967 = vpop.f32.mrf.mxu0
        %v968 = vadd.f32 0.0, %v967
        %969 = vdwg.mxu0
        %v970 = vmul.f32 %v968, 0.5
        %v971 = vadd.f32 %v970, %v461
        %v972 = vsel %vm538, %v971, -inf
        %973 = vmax.xlane.f32.xlu0 %v972
        %v974 = vpop.xlane.xlu0 %973
        %v975 = vsub.f32 %v971, %v974
        %v976 = vmul.f32 %v975, 1.442695
        %v977 = vpow.pop %v976
        %v978 = vsel %vm538, %v977, 0.0
        %979 = vadd.xlane.f32.xlu0 %v978
        %v980 = vpop.xlane.xlu0 %979
        %v981 = vrcp.pop %v980
        %v982 = vmul.f32 %v977, %v981
        %983 = vrot.lane.b32.xlu0 %v505, 24
        %v984 = vpop.permute.xlu0 %983
        %v987 = vsel %vm538, %v982, 0
        %989 = vmatpush.msra.mxu0 0.0
        %990 = vmatpush.msra.mxu0 0.0
        %991 = vmatpush.msra.mxu0 0.0
        %992 = vmatpush.msra.mxu0 0.0
        %993 = vmatpush.msra.mxu0 0.0
        %994 = vmatpush.msra.mxu0 0.0
        %995 = vmatpush.msra.mxu0 0.0
        %996 = vmatpush.msra.mxu0 0.0
        %997 = vmatpush.msra.mxu0 0.0
        %998 = vmatpush.msra.mxu0 0.0
        %999 = vmatpush.msra.mxu0 0.0
        %1000 = vmatpush.msra.mxu0 0.0
        %1001 = vmatpush.msra.mxu0 0.0
        %1002 = vmatpush.msra.mxu0 0.0
        %1003 = vmatpush.msra.mxu0 0.0
        %1004 = vmatpush.msra.mxu0 %v984
        %1005 = vmatmul.f32.gmra.mxu0 %v987
        %v1006 = vpop.f32.mrf.mxu0
        %v1007 = vadd.f32 0.0, %v1006
        %1008 = vdwg.mxu0
        %1010 = vrot.lane.b32.xlu0 %v1007, 24
        %v1011 = vpop.permute.xlu0 %1010
        %vm1013 = vcmask 228544
        %1014 = vst.msk [vmem:[#allocation2] sm:$0xff] %vm1013, %v1011
        %1015 = vrot.lane.b32.xlu0 %v505, 100
        %v1016 = vpop.permute.xlu0 %1015
        %1017 = vrot.lane.b32.xlu0 %v505, 60
        %v1018 = vpop.permute.xlu0 %1017
        %v1019 = vsel %vm511, %v1016, 0
        %v1021 = vsel %vm511, %v1018, 0
        %1023 = vmatpush.xpose.msra.mxu0 0.0
        %1024 = vmatpush.xpose.msra.mxu0 0.0
        %1025 = vmatpush.xpose.msra.mxu0 0.0
        %1026 = vmatpush.xpose.msra.mxu0 0.0
        %1027 = vmatpush.xpose.msra.mxu0 0.0
        %1028 = vmatpush.xpose.msra.mxu0 0.0
        %1029 = vmatpush.xpose.msra.mxu0 0.0
        %1030 = vmatpush.xpose.msra.mxu0 0.0
        %1031 = vmatpush.xpose.msra.mxu0 0.0
        %1032 = vmatpush.xpose.msra.mxu0 0.0
        %1033 = vmatpush.xpose.msra.mxu0 0.0
        %1034 = vmatpush.xpose.msra.mxu0 0.0
        %1035 = vmatpush.xpose.msra.mxu0 0.0
        %1036 = vmatpush.xpose.msra.mxu0 0.0
        %1037 = vmatpush.xpose.msra.mxu0 0.0
        %1038 = vmatpush.xpose.msra.mxu0 %v1021
        %1039 = vmatmul.f32.gmra.mxu0 %v1019
        %v1040 = vpop.f32.mrf.mxu0
        %v1041 = vadd.f32 0.0, %v1040
        %1042 = vdwg.mxu0
        %v1043 = vmul.f32 %v1041, 0.5
        %v1044 = vadd.f32 %v1043, %v461
        %v1045 = vsel %vm538, %v1044, -inf
        %1046 = vmax.xlane.f32.xlu0 %v1045
        %v1047 = vpop.xlane.xlu0 %1046
        %v1048 = vsub.f32 %v1044, %v1047
        %v1049 = vmul.f32 %v1048, 1.442695
        %v1050 = vpow.pop %v1049
        %v1051 = vsel %vm538, %v1050, 0.0
        %1052 = vadd.xlane.f32.xlu0 %v1051
        %v1053 = vpop.xlane.xlu0 %1052
        %v1054 = vrcp.pop %v1053
        %v1055 = vmul.f32 %v1050, %v1054
        %1056 = vrot.lane.b32.xlu0 %v505, 20
        %v1057 = vpop.permute.xlu0 %1056
        %v1060 = vsel %vm538, %v1055, 0
        %1062 = vmatpush.msra.mxu0 0.0
        %1063 = vmatpush.msra.mxu0 0.0
        %1064 = vmatpush.msra.mxu0 0.0
        %1065 = vmatpush.msra.mxu0 0.0
        %1066 = vmatpush.msra.mxu0 0.0
        %1067 = vmatpush.msra.mxu0 0.0
        %1068 = vmatpush.msra.mxu0 0.0
        %1069 = vmatpush.msra.mxu0 0.0
        %1070 = vmatpush.msra.mxu0 0.0
        %1071 = vmatpush.msra.mxu0 0.0
        %1072 = vmatpush.msra.mxu0 0.0
        %1073 = vmatpush.msra.mxu0 0.0
        %1074 = vmatpush.msra.mxu0 0.0
        %1075 = vmatpush.msra.mxu0 0.0
        %1076 = vmatpush.msra.mxu0 0.0
        %1077 = vmatpush.msra.mxu0 %v1057
        %1078 = vmatmul.f32.gmra.mxu0 %v1060
        %v1079 = vpop.f32.mrf.mxu0
        %v1080 = vadd.f32 0.0, %v1079
        %1081 = vdwg.mxu0
        %1083 = vrot.lane.b32.xlu0 %v1080, 28
        %v1084 = vpop.permute.xlu0 %1083
        %vm1086 = vcmask 261344
        %1087 = vst.msk [vmem:[#allocation2] sm:$0xff] %vm1086, %v1084
        %1088 = vrot.lane.b32.xlu0 %v505, 96
        %v1089 = vpop.permute.xlu0 %1088
        %1090 = vrot.lane.b32.xlu0 %v505, 56
        %v1091 = vpop.permute.xlu0 %1090
        %v1092 = vsel %vm511, %v1089, 0
        %v1094 = vsel %vm511, %v1091, 0
        %1096 = vmatpush.xpose.msra.mxu0 0.0
        %1097 = vmatpush.xpose.msra.mxu0 0.0
        %1098 = vmatpush.xpose.msra.mxu0 0.0
        %1099 = vmatpush.xpose.msra.mxu0 0.0
        %1100 = vmatpush.xpose.msra.mxu0 0.0
        %1101 = vmatpush.xpose.msra.mxu0 0.0
        %1102 = vmatpush.xpose.msra.mxu0 0.0
        %1103 = vmatpush.xpose.msra.mxu0 0.0
        %1104 = vmatpush.xpose.msra.mxu0 0.0
        %1105 = vmatpush.xpose.msra.mxu0 0.0
        %1106 = vmatpush.xpose.msra.mxu0 0.0
        %1107 = vmatpush.xpose.msra.mxu0 0.0
        %1108 = vmatpush.xpose.msra.mxu0 0.0
        %1109 = vmatpush.xpose.msra.mxu0 0.0
        %1110 = vmatpush.xpose.msra.mxu0 0.0
        %1111 = vmatpush.xpose.msra.mxu0 %v1094
        %1112 = vmatmul.f32.gmra.mxu0 %v1092
        %v1113 = vpop.f32.mrf.mxu0
        %v1114 = vadd.f32 0.0, %v1113
        %1115 = vdwg.mxu0
        %v1116 = vmul.f32 %v1114, 0.5
        %v1117 = vadd.f32 %v1116, %v461
        %v1118 = vsel %vm538, %v1117, -inf
        %1119 = vmax.xlane.f32.xlu0 %v1118
        %v1120 = vpop.xlane.xlu0 %1119
        %v1121 = vsub.f32 %v1117, %v1120
        %v1122 = vmul.f32 %v1121, 1.442695
        %v1123 = vpow.pop %v1122
        %v1124 = vsel %vm538, %v1123, 0.0
        %1125 = vadd.xlane.f32.xlu0 %v1124
        %v1126 = vpop.xlane.xlu0 %1125
        %v1127 = vrcp.pop %v1126
        %v1128 = vmul.f32 %v1123, %v1127
        %1129 = vrot.lane.b32.xlu0 %v505, 16
        %v1130 = vpop.permute.xlu0 %1129
        %v1133 = vsel %vm538, %v1128, 0
        %1135 = vmatpush.msra.mxu0 0.0
        %1136 = vmatpush.msra.mxu0 0.0
        %1137 = vmatpush.msra.mxu0 0.0
        %1138 = vmatpush.msra.mxu0 0.0
        %1139 = vmatpush.msra.mxu0 0.0
        %1140 = vmatpush.msra.mxu0 0.0
        %1141 = vmatpush.msra.mxu0 0.0
        %1142 = vmatpush.msra.mxu0 0.0
        %1143 = vmatpush.msra.mxu0 0.0
        %1144 = vmatpush.msra.mxu0 0.0
        %1145 = vmatpush.msra.mxu0 0.0
        %1146 = vmatpush.msra.mxu0 0.0
        %1147 = vmatpush.msra.mxu0 0.0
        %1148 = vmatpush.msra.mxu0 0.0
        %1149 = vmatpush.msra.mxu0 0.0
        %1150 = vmatpush.msra.mxu0 %v1130
        %1151 = vmatmul.f32.gmra.mxu0 %v1133
        %v1152 = vpop.f32.mrf.mxu0
        %v1153 = vadd.f32 0.0, %v1152
        %1154 = vdwg.mxu0
        %1156 = vrot.lane.b32.xlu0 %v1153, 32
        %v1157 = vpop.permute.xlu0 %1156
        %vm1159 = vcmask 294144
        %1160 = vst.msk [vmem:[#allocation2] sm:$0xff] %vm1159, %v1157
        %1161 = vrot.lane.b32.xlu0 %v505, 92
        %v1162 = vpop.permute.xlu0 %1161
        %1163 = vrot.lane.b32.xlu0 %v505, 52
        %v1164 = vpop.permute.xlu0 %1163
        %v1165 = vsel %vm511, %v1162, 0
        %v1167 = vsel %vm511, %v1164, 0
        %1169 = vmatpush.xpose.msra.mxu0 0.0
        %1170 = vmatpush.xpose.msra.mxu0 0.0
        %1171 = vmatpush.xpose.msra.mxu0 0.0
        %1172 = vmatpush.xpose.msra.mxu0 0.0
        %1173 = vmatpush.xpose.msra.mxu0 0.0
        %1174 = vmatpush.xpose.msra.mxu0 0.0
        %1175 = vmatpush.xpose.msra.mxu0 0.0
        %1176 = vmatpush.xpose.msra.mxu0 0.0
        %1177 = vmatpush.xpose.msra.mxu0 0.0
        %1178 = vmatpush.xpose.msra.mxu0 0.0
        %1179 = vmatpush.xpose.msra.mxu0 0.0
        %1180 = vmatpush.xpose.msra.mxu0 0.0
        %1181 = vmatpush.xpose.msra.mxu0 0.0
        %1182 = vmatpush.xpose.msra.mxu0 0.0
        %1183 = vmatpush.xpose.msra.mxu0 0.0
        %1184 = vmatpush.xpose.msra.mxu0 %v1167
        %1185 = vmatmul.f32.gmra.mxu0 %v1165
        %v1186 = vpop.f32.mrf.mxu0
        %v1187 = vadd.f32 0.0, %v1186
        %1188 = vdwg.mxu0
        %v1189 = vmul.f32 %v1187, 0.5
        %v1190 = vadd.f32 %v1189, %v461
        %v1191 = vsel %vm538, %v1190, -inf
        %1192 = vmax.xlane.f32.xlu0 %v1191
        %v1193 = vpop.xlane.xlu0 %1192
        %v1194 = vsub.f32 %v1190, %v1193
        %v1195 = vmul.f32 %v1194, 1.442695
        %v1196 = vpow.pop %v1195
        %v1197 = vsel %vm538, %v1196, 0.0
        %1198 = vadd.xlane.f32.xlu0 %v1197
        %v1199 = vpop.xlane.xlu0 %1198
        %v1200 = vrcp.pop %v1199
        %v1201 = vmul.f32 %v1196, %v1200
        %1202 = vrot.lane.b32.xlu0 %v505, 12
        %v1203 = vpop.permute.xlu0 %1202
        %v1206 = vsel %vm538, %v1201, 0
        %1208 = vmatpush.msra.mxu0 0.0
        %1209 = vmatpush.msra.mxu0 0.0
        %1210 = vmatpush.msra.mxu0 0.0
        %1211 = vmatpush.msra.mxu0 0.0
        %1212 = vmatpush.msra.mxu0 0.0
        %1213 = vmatpush.msra.mxu0 0.0
        %1214 = vmatpush.msra.mxu0 0.0
        %1215 = vmatpush.msra.mxu0 0.0
        %1216 = vmatpush.msra.mxu0 0.0
        %1217 = vmatpush.msra.mxu0 0.0
        %1218 = vmatpush.msra.mxu0 0.0
        %1219 = vmatpush.msra.mxu0 0.0
        %1220 = vmatpush.msra.mxu0 0.0
        %1221 = vmatpush.msra.mxu0 0.0
        %1222 = vmatpush.msra.mxu0 0.0
        %1223 = vmatpush.msra.mxu0 %v1203
        %1224 = vmatmul.f32.gmra.mxu0 %v1206
        %v1225 = vpop.f32.mrf.mxu0
        %v1226 = vadd.f32 0.0, %v1225
        %1227 = vdwg.mxu0
        %1229 = vrot.lane.b32.xlu0 %v1226, 36
        %v1230 = vpop.permute.xlu0 %1229
        %vm1232 = vcmask 326944
        %1233 = vst.msk [vmem:[#allocation2] sm:$0xff] %vm1232, %v1230
        %v1234 = vld [vmem:[#allocation2] sm:$0xff]
        %v1235 = vpack.c.bf16 %v1234, %v1234
        %v1236 = vld [vmem:[#allocation13] sm:$0xf]
        %v1237 = vld [vmem:[#allocation13 + $0x4] sm:$0xf]
        %v1238 = vld [vmem:[#allocation13 + $0x8] sm:$0xf]
        %v1239 = vld [vmem:[#allocation13 + $0xc] sm:$0xf]
        %v1240 = vld [vmem:[#allocation13 + $0x10] sm:$0xf]
        %v1241 = vld [vmem:[%s7] sm:$0x1]
        %v1243 = vperm.slane %v1241, 0
        %v1250 = vunpack.c.l.b16 %v1236
        %v1251 = vunpack.c.l.b16 %v1237
        %v1252 = vunpack.c.l.b16 %v1238
        %v1253 = vunpack.c.l.b16 %v1239
        %v1254 = vunpack.c.l.b16 %v1240
        %v1255 = vpack.c.b16 %v1251, %v1250
        %v1256 = vpack.c.b16 %v1253, %v1252
        %v1257 = vpack.c.b16 %v1254, %v1254
        %v1261 = vsel %vm487, %v1235, 0
        %v1264 = vsel %vm491, %v1257, 0
        %1266 = vmatpush.bf16.msra.mxu0 0
        %1267 = vmatpush.bf16.msra.mxu0 0
        %1268 = vmatpush.bf16.msra.mxu0 0
        %1269 = vmatpush.bf16.msra.mxu0 0
        %1270 = vmatpush.bf16.msra.mxu0 0
        %1271 = vmatpush.bf16.msra.mxu0 %v1264
        %1272 = vmatpush.bf16.msra.mxu0 %v1256
        %1273 = vmatpush.bf16.msra.mxu0 %v1255
        %1274 = vmatmul.bf16.gmra.mxu0 %v1261
        %v1275 = vpop.f32.mrf.mxu0
        %v1276 = vadd.f32 %v1243, %v1275
        %v1277 = vpop.f32.mrf.mxu0
        %1278 = vdwg.mxu0
        %v1279 = vadd.f32 %v455, %v1276
        %v1280 = vsel %vm487, %v1279, 0.0
        %1281 = vadd.xlane.f32.xlu0 %v1280
        %v1282 = vpop.xlane.xlu0 %1281
        %v1283 = vrot.slane %v1282, 4
        %v1284 = vadd.f32 %v1282, %v1283
        %v1285 = vrot.slane %v1284, 2
        %v1286 = vadd.f32 %v1284, %v1285
        %v1287 = vrot.slane %v1286, 1
        %v1288 = vadd.f32 %v1286, %v1287
        %s1289 = vtos %v1288
        %s1290 = smul.f32 %s1289, 0.003125
        %v1291 = vstv %s1290
        %v1292 = vsub.f32 %v1279, %v1291
        %v1293 = vmul.f32 %v1292, %v1292
        %v1294 = vsel %vm487, %v1293, 0.0
        %1295 = vadd.xlane.f32.xlu0 %v1294
        %v1296 = vpop.xlane.xlu0 %1295
        %v1297 = vrot.slane %v1296, 4
        %v1298 = vadd.f32 %v1296, %v1297
        %v1299 = vrot.slane %v1298, 2
        %v1300 = vadd.f32 %v1298, %v1299
        %v1301 = vrot.slane %v1300, 1
        %v1302 = vadd.f32 %v1300, %v1301
        %s1303 = vtos %v1302
        %s1304 = smul.f32 %s1303, 0.003125
        %s1305 = sadd.f32 %s1304, 1e-05
        %v1306 = vstv %s1305
        %v1307 = vrsqrt.pop %v1306
        %v1308 = vmul.f32 %v1307, %v1306
        %v1309 = vmul.f32 %v1308, %v1307
        %v1310 = vmul.f32 0.5, %v1309
        %v1311 = vsub.f32 1.5, %v1310
        %v1312 = vmul.f32 %v1307, %v1311
        %vm1313 = vweird.f32 %v1306
        %vm1314 = vweird.f32 %v1307
        %vm1315 = vmor %vm1313, %vm1314
        %v1316 = vsel %vm1315, %v1307, %v1312
        %s1317 = vtos %v1316
        %v1318 = vstv %s1317
        %v1319 = vmul.f32 %v1292, %v1318
        %v1320 = vld [vmem:[%s8] sm:$0x1]
        %v1322 = vperm.slane %v1320, 0
        %v1324 = vmul.f32 %v1319, %v1322
        %v1325 = vld [vmem:[%s9] sm:$0x1]
        %v1327 = vperm.slane %v1325, 0
        %v1329 = vadd.f32 %v1324, %v1327
        %v1330 = vpack.c.bf16 %v1329, %v1329
        %s1331 = scalar_lea.vmem [#allocation11], 20
        %v1332 = vld [vmem:[%s1331] sm:$0xf]
        %v1333 = vld [vmem:[%s1331 + $0x4] sm:$0xf]
        %v1334 = vld [vmem:[%s1331 + $0x8] sm:$0xf]
        %v1335 = vld [vmem:[%s1331 + $0xc] sm:$0xf]
        %v1336 = vld [vmem:[%s1331 + $0x10] sm:$0xf]
        %s1337 = scalar_lea.vmem %s5, 1
        %v1338 = vld [vmem:[%s1337] sm:$0x1]
        %v1340 = vperm.slane %v1338, 0
        %v1347 = vunpack.c.l.b16 %v1332
        %v1348 = vunpack.c.l.b16 %v1333
        %v1349 = vunpack.c.l.b16 %v1334
        %v1350 = vunpack.c.l.b16 %v1335
        %v1351 = vunpack.c.l.b16 %v1336
        %v1352 = vpack.c.b16 %v1348, %v1347
        %v1353 = vpack.c.b16 %v1350, %v1349
        %v1354 = vpack.c.b16 %v1351, %v1351
        %v1358 = vsel %vm487, %v1330, 0
        %v1361 = vsel %vm491, %v1354, 0
        %1363 = vmatpush.bf16.msra.mxu0 0
        %1364 = vmatpush.bf16.msra.mxu0 0
        %1365 = vmatpush.bf16.msra.mxu0 0
        %1366 = vmatpush.bf16.msra.mxu0 0
        %1367 = vmatpush.bf16.msra.mxu0 0
        %1368 = vmatpush.bf16.msra.mxu0 %v1361
        %1369 = vmatpush.bf16.msra.mxu0 %v1353
        %1370 = vmatpush.bf16.msra.mxu0 %v1352
        %1371 = vmatmul.bf16.gmra.mxu0 %v1358
        %v1372 = vpop.f32.mrf.mxu0
        %v1373 = vadd.f32 %v1340, %v1372
        %v1374 = vpop.f32.mrf.mxu0
        %1375 = vdwg.mxu0
        %1377 = vrot.lane.b32.xlu0 %v1373, 88
        %v1378 = vpop.permute.xlu0 %1377
        %v1379 = vsel %vm511, %v1373, 0
        %v1381 = vsel %vm511, %v1378, 0
        %1383 = vmatpush.xpose.msra.mxu0 0.0
        %1384 = vmatpush.xpose.msra.mxu0 0.0
        %1385 = vmatpush.xpose.msra.mxu0 0.0
        %1386 = vmatpush.xpose.msra.mxu0 0.0
        %1387 = vmatpush.xpose.msra.mxu0 0.0
        %1388 = vmatpush.xpose.msra.mxu0 0.0
        %1389 = vmatpush.xpose.msra.mxu0 0.0
        %1390 = vmatpush.xpose.msra.mxu0 0.0
        %1391 = vmatpush.xpose.msra.mxu0 0.0
        %1392 = vmatpush.xpose.msra.mxu0 0.0
        %1393 = vmatpush.xpose.msra.mxu0 0.0
        %1394 = vmatpush.xpose.msra.mxu0 0.0
        %1395 = vmatpush.xpose.msra.mxu0 0.0
        %1396 = vmatpush.xpose.msra.mxu0 0.0
        %1397 = vmatpush.xpose.msra.mxu0 0.0
        %1398 = vmatpush.xpose.msra.mxu0 %v1381
        %1399 = vmatmul.f32.gmra.mxu0 %v1379
        %v1400 = vpop.f32.mrf.mxu0
        %v1401 = vadd.f32 0.0, %v1400
        %1402 = vdwg.mxu0
        %v1403 = vmul.f32 %v1401, 0.5
        %v1404 = vadd.f32 %v1403, %v461
        %v1405 = vsel %vm538, %v1404, -inf
        %1406 = vmax.xlane.f32.xlu0 %v1405
        %v1407 = vpop.xlane.xlu0 %1406
        %v1408 = vsub.f32 %v1404, %v1407
        %v1409 = vmul.f32 %v1408, 1.442695
        %v1410 = vpow.pop %v1409
        %v1411 = vsel %vm538, %v1410, 0.0
        %1412 = vadd.xlane.f32.xlu0 %v1411
        %v1413 = vpop.xlane.xlu0 %1412
        %v1414 = vrcp.pop %v1413
        %v1415 = vmul.f32 %v1410, %v1414
        %1416 = vrot.lane.b32.xlu0 %v1373, 48
        %v1417 = vpop.permute.xlu0 %1416
        %v1420 = vsel %vm538, %v1415, 0
        %1422 = vmatpush.msra.mxu0 0.0
        %1423 = vmatpush.msra.mxu0 0.0
        %1424 = vmatpush.msra.mxu0 0.0
        %1425 = vmatpush.msra.mxu0 0.0
        %1426 = vmatpush.msra.mxu0 0.0
        %1427 = vmatpush.msra.mxu0 0.0
        %1428 = vmatpush.msra.mxu0 0.0
        %1429 = vmatpush.msra.mxu0 0.0
        %1430 = vmatpush.msra.mxu0 0.0
        %1431 = vmatpush.msra.mxu0 0.0
        %1432 = vmatpush.msra.mxu0 0.0
        %1433 = vmatpush.msra.mxu0 0.0
        %1434 = vmatpush.msra.mxu0 0.0
        %1435 = vmatpush.msra.mxu0 0.0
        %1436 = vmatpush.msra.mxu0 0.0
        %1437 = vmatpush.msra.mxu0 %v1417
        %1438 = vmatmul.f32.gmra.mxu0 %v1420
        %v1439 = vpop.f32.mrf.mxu0
        %v1440 = vadd.f32 0.0, %v1439
        %1441 = vdwg.mxu0
        %1442 = vst.msk [vmem:[#allocation2] sm:$0xff] %vm511, %v1440
        %1443 = vrot.lane.b32.xlu0 %v1373, 124
        %v1444 = vpop.permute.xlu0 %1443
        %1445 = vrot.lane.b32.xlu0 %v1373, 84
        %v1446 = vpop.permute.xlu0 %1445
        %v1447 = vsel %vm511, %v1444, 0
        %v1449 = vsel %vm511, %v1446, 0
        %1451 = vmatpush.xpose.msra.mxu0 0.0
        %1452 = vmatpush.xpose.msra.mxu0 0.0
        %1453 = vmatpush.xpose.msra.mxu0 0.0
        %1454 = vmatpush.xpose.msra.mxu0 0.0
        %1455 = vmatpush.xpose.msra.mxu0 0.0
        %1456 = vmatpush.xpose.msra.mxu0 0.0
        %1457 = vmatpush.xpose.msra.mxu0 0.0
        %1458 = vmatpush.xpose.msra.mxu0 0.0
        %1459 = vmatpush.xpose.msra.mxu0 0.0
        %1460 = vmatpush.xpose.msra.mxu0 0.0
        %1461 = vmatpush.xpose.msra.mxu0 0.0
        %1462 = vmatpush.xpose.msra.mxu0 0.0
        %1463 = vmatpush.xpose.msra.mxu0 0.0
        %1464 = vmatpush.xpose.msra.mxu0 0.0
        %1465 = vmatpush.xpose.msra.mxu0 0.0
        %1466 = vmatpush.xpose.msra.mxu0 %v1449
        %1467 = vmatmul.f32.gmra.mxu0 %v1447
        %v1468 = vpop.f32.mrf.mxu0
        %v1469 = vadd.f32 0.0, %v1468
        %1470 = vdwg.mxu0
        %v1471 = vmul.f32 %v1469, 0.5
        %v1472 = vadd.f32 %v1471, %v461
        %v1473 = vsel %vm538, %v1472, -inf
        %1474 = vmax.xlane.f32.xlu0 %v1473
        %v1475 = vpop.xlane.xlu0 %1474
        %v1476 = vsub.f32 %v1472, %v1475
        %v1477 = vmul.f32 %v1476, 1.442695
        %v1478 = vpow.pop %v1477
        %v1479 = vsel %vm538, %v1478, 0.0
        %1480 = vadd.xlane.f32.xlu0 %v1479
        %v1481 = vpop.xlane.xlu0 %1480
        %v1482 = vrcp.pop %v1481
        %v1483 = vmul.f32 %v1478, %v1482
        %1484 = vrot.lane.b32.xlu0 %v1373, 44
        %v1485 = vpop.permute.xlu0 %1484
        %v1488 = vsel %vm538, %v1483, 0
        %1490 = vmatpush.msra.mxu0 0.0
        %1491 = vmatpush.msra.mxu0 0.0
        %1492 = vmatpush.msra.mxu0 0.0
        %1493 = vmatpush.msra.mxu0 0.0
        %1494 = vmatpush.msra.mxu0 0.0
        %1495 = vmatpush.msra.mxu0 0.0
        %1496 = vmatpush.msra.mxu0 0.0
        %1497 = vmatpush.msra.mxu0 0.0
        %1498 = vmatpush.msra.mxu0 0.0
        %1499 = vmatpush.msra.mxu0 0.0
        %1500 = vmatpush.msra.mxu0 0.0
        %1501 = vmatpush.msra.mxu0 0.0
        %1502 = vmatpush.msra.mxu0 0.0
        %1503 = vmatpush.msra.mxu0 0.0
        %1504 = vmatpush.msra.mxu0 0.0
        %1505 = vmatpush.msra.mxu0 %v1485
        %1506 = vmatmul.f32.gmra.mxu0 %v1488
        %v1507 = vpop.f32.mrf.mxu0
        %v1508 = vadd.f32 0.0, %v1507
        %1509 = vdwg.mxu0
        %1511 = vrot.lane.b32.xlu0 %v1508, 4
        %v1512 = vpop.permute.xlu0 %1511
        %1514 = vst.msk [vmem:[#allocation2] sm:$0xff] %vm648, %v1512
        %1515 = vrot.lane.b32.xlu0 %v1373, 120
        %v1516 = vpop.permute.xlu0 %1515
        %1517 = vrot.lane.b32.xlu0 %v1373, 80
        %v1518 = vpop.permute.xlu0 %1517
        %v1519 = vsel %vm511, %v1516, 0
        %v1521 = vsel %vm511, %v1518, 0
        %1523 = vmatpush.xpose.msra.mxu0 0.0
        %1524 = vmatpush.xpose.msra.mxu0 0.0
        %1525 = vmatpush.xpose.msra.mxu0 0.0
        %1526 = vmatpush.xpose.msra.mxu0 0.0
        %1527 = vmatpush.xpose.msra.mxu0 0.0
        %1528 = vmatpush.xpose.msra.mxu0 0.0
        %1529 = vmatpush.xpose.msra.mxu0 0.0
        %1530 = vmatpush.xpose.msra.mxu0 0.0
        %1531 = vmatpush.xpose.msra.mxu0 0.0
        %1532 = vmatpush.xpose.msra.mxu0 0.0
        %1533 = vmatpush.xpose.msra.mxu0 0.0
        %1534 = vmatpush.xpose.msra.mxu0 0.0
        %1535 = vmatpush.xpose.msra.mxu0 0.0
        %1536 = vmatpush.xpose.msra.mxu0 0.0
        %1537 = vmatpush.xpose.msra.mxu0 0.0
        %1538 = vmatpush.xpose.msra.mxu0 %v1521
        %1539 = vmatmul.f32.gmra.mxu0 %v1519
        %v1540 = vpop.f32.mrf.mxu0
        %v1541 = vadd.f32 0.0, %v1540
        %1542 = vdwg.mxu0
        %v1543 = vmul.f32 %v1541, 0.5
        %v1544 = vadd.f32 %v1543, %v461
        %v1545 = vsel %vm538, %v1544, -inf
        %1546 = vmax.xlane.f32.xlu0 %v1545
        %v1547 = vpop.xlane.xlu0 %1546
        %v1548 = vsub.f32 %v1544, %v1547
        %v1549 = vmul.f32 %v1548, 1.442695
        %v1550 = vpow.pop %v1549
        %v1551 = vsel %vm538, %v1550, 0.0
        %1552 = vadd.xlane.f32.xlu0 %v1551
        %v1553 = vpop.xlane.xlu0 %1552
        %v1554 = vrcp.pop %v1553
        %v1555 = vmul.f32 %v1550, %v1554
        %1556 = vrot.lane.b32.xlu0 %v1373, 40
        %v1557 = vpop.permute.xlu0 %1556
        %v1560 = vsel %vm538, %v1555, 0
        %1562 = vmatpush.msra.mxu0 0.0
        %1563 = vmatpush.msra.mxu0 0.0
        %1564 = vmatpush.msra.mxu0 0.0
        %1565 = vmatpush.msra.mxu0 0.0
        %1566 = vmatpush.msra.mxu0 0.0
        %1567 = vmatpush.msra.mxu0 0.0
        %1568 = vmatpush.msra.mxu0 0.0
        %1569 = vmatpush.msra.mxu0 0.0
        %1570 = vmatpush.msra.mxu0 0.0
        %1571 = vmatpush.msra.mxu0 0.0
        %1572 = vmatpush.msra.mxu0 0.0
        %1573 = vmatpush.msra.mxu0 0.0
        %1574 = vmatpush.msra.mxu0 0.0
        %1575 = vmatpush.msra.mxu0 0.0
        %1576 = vmatpush.msra.mxu0 0.0
        %1577 = vmatpush.msra.mxu0 %v1557
        %1578 = vmatmul.f32.gmra.mxu0 %v1560
        %v1579 = vpop.f32.mrf.mxu0
        %v1580 = vadd.f32 0.0, %v1579
        %1581 = vdwg.mxu0
        %1583 = vrot.lane.b32.xlu0 %v1580, 8
        %v1584 = vpop.permute.xlu0 %1583
        %1586 = vst.msk [vmem:[#allocation2] sm:$0xff] %vm721, %v1584
        %1587 = vrot.lane.b32.xlu0 %v1373, 116
        %v1588 = vpop.permute.xlu0 %1587
        %1589 = vrot.lane.b32.xlu0 %v1373, 76
        %v1590 = vpop.permute.xlu0 %1589
        %v1591 = vsel %vm511, %v1588, 0
        %v1593 = vsel %vm511, %v1590, 0
        %1595 = vmatpush.xpose.msra.mxu0 0.0
        %1596 = vmatpush.xpose.msra.mxu0 0.0
        %1597 = vmatpush.xpose.msra.mxu0 0.0
        %1598 = vmatpush.xpose.msra.mxu0 0.0
        %1599 = vmatpush.xpose.msra.mxu0 0.0
        %1600 = vmatpush.xpose.msra.mxu0 0.0
        %1601 = vmatpush.xpose.msra.mxu0 0.0
        %1602 = vmatpush.xpose.msra.mxu0 0.0
        %1603 = vmatpush.xpose.msra.mxu0 0.0
        %1604 = vmatpush.xpose.msra.mxu0 0.0
        %1605 = vmatpush.xpose.msra.mxu0 0.0
        %1606 = vmatpush.xpose.msra.mxu0 0.0
        %1607 = vmatpush.xpose.msra.mxu0 0.0
        %1608 = vmatpush.xpose.msra.mxu0 0.0
        %1609 = vmatpush.xpose.msra.mxu0 0.0
        %1610 = vmatpush.xpose.msra.mxu0 %v1593
        %1611 = vmatmul.f32.gmra.mxu0 %v1591
        %v1612 = vpop.f32.mrf.mxu0
        %v1613 = vadd.f32 0.0, %v1612
        %1614 = vdwg.mxu0
        %v1615 = vmul.f32 %v1613, 0.5
        %v1616 = vadd.f32 %v1615, %v461
        %v1617 = vsel %vm538, %v1616, -inf
        %1618 = vmax.xlane.f32.xlu0 %v1617
        %v1619 = vpop.xlane.xlu0 %1618
        %v1620 = vsub.f32 %v1616, %v1619
        %v1621 = vmul.f32 %v1620, 1.442695
        %v1622 = vpow.pop %v1621
        %v1623 = vsel %vm538, %v1622, 0.0
        %1624 = vadd.xlane.f32.xlu0 %v1623
        %v1625 = vpop.xlane.xlu0 %1624
        %v1626 = vrcp.pop %v1625
        %v1627 = vmul.f32 %v1622, %v1626
        %1628 = vrot.lane.b32.xlu0 %v1373, 36
        %v1629 = vpop.permute.xlu0 %1628
        %v1632 = vsel %vm538, %v1627, 0
        %1634 = vmatpush.msra.mxu0 0.0
        %1635 = vmatpush.msra.mxu0 0.0
        %1636 = vmatpush.msra.mxu0 0.0
        %1637 = vmatpush.msra.mxu0 0.0
        %1638 = vmatpush.msra.mxu0 0.0
        %1639 = vmatpush.msra.mxu0 0.0
        %1640 = vmatpush.msra.mxu0 0.0
        %1641 = vmatpush.msra.mxu0 0.0
        %1642 = vmatpush.msra.mxu0 0.0
        %1643 = vmatpush.msra.mxu0 0.0
        %1644 = vmatpush.msra.mxu0 0.0
        %1645 = vmatpush.msra.mxu0 0.0
        %1646 = vmatpush.msra.mxu0 0.0
        %1647 = vmatpush.msra.mxu0 0.0
        %1648 = vmatpush.msra.mxu0 0.0
        %1649 = vmatpush.msra.mxu0 %v1629
        %1650 = vmatmul.f32.gmra.mxu0 %v1632
        %v1651 = vpop.f32.mrf.mxu0
        %v1652 = vadd.f32 0.0, %v1651
        %1653 = vdwg.mxu0
        %1655 = vrot.lane.b32.xlu0 %v1652, 12
        %v1656 = vpop.permute.xlu0 %1655
        %1658 = vst.msk [vmem:[#allocation2] sm:$0xff] %vm794, %v1656
        %1659 = vrot.lane.b32.xlu0 %v1373, 112
        %v1660 = vpop.permute.xlu0 %1659
        %1661 = vrot.lane.b32.xlu0 %v1373, 72
        %v1662 = vpop.permute.xlu0 %1661
        %v1663 = vsel %vm511, %v1660, 0
        %v1665 = vsel %vm511, %v1662, 0
        %1667 = vmatpush.xpose.msra.mxu0 0.0
        %1668 = vmatpush.xpose.msra.mxu0 0.0
        %1669 = vmatpush.xpose.msra.mxu0 0.0
        %1670 = vmatpush.xpose.msra.mxu0 0.0
        %1671 = vmatpush.xpose.msra.mxu0 0.0
        %1672 = vmatpush.xpose.msra.mxu0 0.0
        %1673 = vmatpush.xpose.msra.mxu0 0.0
        %1674 = vmatpush.xpose.msra.mxu0 0.0
        %1675 = vmatpush.xpose.msra.mxu0 0.0
        %1676 = vmatpush.xpose.msra.mxu0 0.0
        %1677 = vmatpush.xpose.msra.mxu0 0.0
        %1678 = vmatpush.xpose.msra.mxu0 0.0
        %1679 = vmatpush.xpose.msra.mxu0 0.0
        %1680 = vmatpush.xpose.msra.mxu0 0.0
        %1681 = vmatpush.xpose.msra.mxu0 0.0
        %1682 = vmatpush.xpose.msra.mxu0 %v1665
        %1683 = vmatmul.f32.gmra.mxu0 %v1663
        %v1684 = vpop.f32.mrf.mxu0
        %v1685 = vadd.f32 0.0, %v1684
        %1686 = vdwg.mxu0
        %v1687 = vmul.f32 %v1685, 0.5
        %v1688 = vadd.f32 %v1687, %v461
        %v1689 = vsel %vm538, %v1688, -inf
        %1690 = vmax.xlane.f32.xlu0 %v1689
        %v1691 = vpop.xlane.xlu0 %1690
        %v1692 = vsub.f32 %v1688, %v1691
        %v1693 = vmul.f32 %v1692, 1.442695
        %v1694 = vpow.pop %v1693
        %v1695 = vsel %vm538, %v1694, 0.0
        %1696 = vadd.xlane.f32.xlu0 %v1695
        %v1697 = vpop.xlane.xlu0 %1696
        %v1698 = vrcp.pop %v1697
        %v1699 = vmul.f32 %v1694, %v1698
        %1700 = vrot.lane.b32.xlu0 %v1373, 32
        %v1701 = vpop.permute.xlu0 %1700
        %v1704 = vsel %vm538, %v1699, 0
        %1706 = vmatpush.msra.mxu0 0.0
        %1707 = vmatpush.msra.mxu0 0.0
        %1708 = vmatpush.msra.mxu0 0.0
        %1709 = vmatpush.msra.mxu0 0.0
        %1710 = vmatpush.msra.mxu0 0.0
        %1711 = vmatpush.msra.mxu0 0.0
        %1712 = vmatpush.msra.mxu0 0.0
        %1713 = vmatpush.msra.mxu0 0.0
        %1714 = vmatpush.msra.mxu0 0.0
        %1715 = vmatpush.msra.mxu0 0.0
        %1716 = vmatpush.msra.mxu0 0.0
        %1717 = vmatpush.msra.mxu0 0.0
        %1718 = vmatpush.msra.mxu0 0.0
        %1719 = vmatpush.msra.mxu0 0.0
        %1720 = vmatpush.msra.mxu0 0.0
        %1721 = vmatpush.msra.mxu0 %v1701
        %1722 = vmatmul.f32.gmra.mxu0 %v1704
        %v1723 = vpop.f32.mrf.mxu0
        %v1724 = vadd.f32 0.0, %v1723
        %1725 = vdwg.mxu0
        %1727 = vrot.lane.b32.xlu0 %v1724, 16
        %v1728 = vpop.permute.xlu0 %1727
        %1730 = vst.msk [vmem:[#allocation2] sm:$0xff] %vm867, %v1728
        %1731 = vrot.lane.b32.xlu0 %v1373, 108
        %v1732 = vpop.permute.xlu0 %1731
        %1733 = vrot.lane.b32.xlu0 %v1373, 68
        %v1734 = vpop.permute.xlu0 %1733
        %v1735 = vsel %vm511, %v1732, 0
        %v1737 = vsel %vm511, %v1734, 0
        %1739 = vmatpush.xpose.msra.mxu0 0.0
        %1740 = vmatpush.xpose.msra.mxu0 0.0
        %1741 = vmatpush.xpose.msra.mxu0 0.0
        %1742 = vmatpush.xpose.msra.mxu0 0.0
        %1743 = vmatpush.xpose.msra.mxu0 0.0
        %1744 = vmatpush.xpose.msra.mxu0 0.0
        %1745 = vmatpush.xpose.msra.mxu0 0.0
        %1746 = vmatpush.xpose.msra.mxu0 0.0
        %1747 = vmatpush.xpose.msra.mxu0 0.0
        %1748 = vmatpush.xpose.msra.mxu0 0.0
        %1749 = vmatpush.xpose.msra.mxu0 0.0
        %1750 = vmatpush.xpose.msra.mxu0 0.0
        %1751 = vmatpush.xpose.msra.mxu0 0.0
        %1752 = vmatpush.xpose.msra.mxu0 0.0
        %1753 = vmatpush.xpose.msra.mxu0 0.0
        %1754 = vmatpush.xpose.msra.mxu0 %v1737
        %1755 = vmatmul.f32.gmra.mxu0 %v1735
        %v1756 = vpop.f32.mrf.mxu0
        %v1757 = vadd.f32 0.0, %v1756
        %1758 = vdwg.mxu0
        %v1759 = vmul.f32 %v1757, 0.5
        %v1760 = vadd.f32 %v1759, %v461
        %v1761 = vsel %vm538, %v1760, -inf
        %1762 = vmax.xlane.f32.xlu0 %v1761
        %v1763 = vpop.xlane.xlu0 %1762
        %v1764 = vsub.f32 %v1760, %v1763
        %v1765 = vmul.f32 %v1764, 1.442695
        %v1766 = vpow.pop %v1765
        %v1767 = vsel %vm538, %v1766, 0.0
        %1768 = vadd.xlane.f32.xlu0 %v1767
        %v1769 = vpop.xlane.xlu0 %1768
        %v1770 = vrcp.pop %v1769
        %v1771 = vmul.f32 %v1766, %v1770
        %1772 = vrot.lane.b32.xlu0 %v1373, 28
        %v1773 = vpop.permute.xlu0 %1772
        %v1776 = vsel %vm538, %v1771, 0
        %1778 = vmatpush.msra.mxu0 0.0
        %1779 = vmatpush.msra.mxu0 0.0
        %1780 = vmatpush.msra.mxu0 0.0
        %1781 = vmatpush.msra.mxu0 0.0
        %1782 = vmatpush.msra.mxu0 0.0
        %1783 = vmatpush.msra.mxu0 0.0
        %1784 = vmatpush.msra.mxu0 0.0
        %1785 = vmatpush.msra.mxu0 0.0
        %1786 = vmatpush.msra.mxu0 0.0
        %1787 = vmatpush.msra.mxu0 0.0
        %1788 = vmatpush.msra.mxu0 0.0
        %1789 = vmatpush.msra.mxu0 0.0
        %1790 = vmatpush.msra.mxu0 0.0
        %1791 = vmatpush.msra.mxu0 0.0
        %1792 = vmatpush.msra.mxu0 0.0
        %1793 = vmatpush.msra.mxu0 %v1773
        %1794 = vmatmul.f32.gmra.mxu0 %v1776
        %v1795 = vpop.f32.mrf.mxu0
        %v1796 = vadd.f32 0.0, %v1795
        %1797 = vdwg.mxu0
        %1799 = vrot.lane.b32.xlu0 %v1796, 20
        %v1800 = vpop.permute.xlu0 %1799
        %1802 = vst.msk [vmem:[#allocation2] sm:$0xff] %vm940, %v1800
        %1803 = vrot.lane.b32.xlu0 %v1373, 104
        %v1804 = vpop.permute.xlu0 %1803
        %1805 = vrot.lane.b32.xlu0 %v1373, 64
        %v1806 = vpop.permute.xlu0 %1805
        %v1807 = vsel %vm511, %v1804, 0
        %v1809 = vsel %vm511, %v1806, 0
        %1811 = vmatpush.xpose.msra.mxu0 0.0
        %1812 = vmatpush.xpose.msra.mxu0 0.0
        %1813 = vmatpush.xpose.msra.mxu0 0.0
        %1814 = vmatpush.xpose.msra.mxu0 0.0
        %1815 = vmatpush.xpose.msra.mxu0 0.0
        %1816 = vmatpush.xpose.msra.mxu0 0.0
        %1817 = vmatpush.xpose.msra.mxu0 0.0
        %1818 = vmatpush.xpose.msra.mxu0 0.0
        %1819 = vmatpush.xpose.msra.mxu0 0.0
        %1820 = vmatpush.xpose.msra.mxu0 0.0
        %1821 = vmatpush.xpose.msra.mxu0 0.0
        %1822 = vmatpush.xpose.msra.mxu0 0.0
        %1823 = vmatpush.xpose.msra.mxu0 0.0
        %1824 = vmatpush.xpose.msra.mxu0 0.0
        %1825 = vmatpush.xpose.msra.mxu0 0.0
        %1826 = vmatpush.xpose.msra.mxu0 %v1809
        %1827 = vmatmul.f32.gmra.mxu0 %v1807
        %v1828 = vpop.f32.mrf.mxu0
        %v1829 = vadd.f32 0.0, %v1828
        %1830 = vdwg.mxu0
        %v1831 = vmul.f32 %v1829, 0.5
        %v1832 = vadd.f32 %v1831, %v461
        %v1833 = vsel %vm538, %v1832, -inf
        %1834 = vmax.xlane.f32.xlu0 %v1833
        %v1835 = vpop.xlane.xlu0 %1834
        %v1836 = vsub.f32 %v1832, %v1835
        %v1837 = vmul.f32 %v1836, 1.442695
        %v1838 = vpow.pop %v1837
        %v1839 = vsel %vm538, %v1838, 0.0
        %1840 = vadd.xlane.f32.xlu0 %v1839
        %v1841 = vpop.xlane.xlu0 %1840
        %v1842 = vrcp.pop %v1841
        %v1843 = vmul.f32 %v1838, %v1842
        %1844 = vrot.lane.b32.xlu0 %v1373, 24
        %v1845 = vpop.permute.xlu0 %1844
        %v1848 = vsel %vm538, %v1843, 0
        %1850 = vmatpush.msra.mxu0 0.0
        %1851 = vmatpush.msra.mxu0 0.0
        %1852 = vmatpush.msra.mxu0 0.0
        %1853 = vmatpush.msra.mxu0 0.0
        %1854 = vmatpush.msra.mxu0 0.0
        %1855 = vmatpush.msra.mxu0 0.0
        %1856 = vmatpush.msra.mxu0 0.0
        %1857 = vmatpush.msra.mxu0 0.0
        %1858 = vmatpush.msra.mxu0 0.0
        %1859 = vmatpush.msra.mxu0 0.0
        %1860 = vmatpush.msra.mxu0 0.0
        %1861 = vmatpush.msra.mxu0 0.0
        %1862 = vmatpush.msra.mxu0 0.0
        %1863 = vmatpush.msra.mxu0 0.0
        %1864 = vmatpush.msra.mxu0 0.0
        %1865 = vmatpush.msra.mxu0 %v1845
        %1866 = vmatmul.f32.gmra.mxu0 %v1848
        %v1867 = vpop.f32.mrf.mxu0
        %v1868 = vadd.f32 0.0, %v1867
        %1869 = vdwg.mxu0
        %1871 = vrot.lane.b32.xlu0 %v1868, 24
        %v1872 = vpop.permute.xlu0 %1871
        %1874 = vst.msk [vmem:[#allocation2] sm:$0xff] %vm1013, %v1872
        %1875 = vrot.lane.b32.xlu0 %v1373, 100
        %v1876 = vpop.permute.xlu0 %1875
        %1877 = vrot.lane.b32.xlu0 %v1373, 60
        %v1878 = vpop.permute.xlu0 %1877
        %v1879 = vsel %vm511, %v1876, 0
        %v1881 = vsel %vm511, %v1878, 0
        %1883 = vmatpush.xpose.msra.mxu0 0.0
        %1884 = vmatpush.xpose.msra.mxu0 0.0
        %1885 = vmatpush.xpose.msra.mxu0 0.0
        %1886 = vmatpush.xpose.msra.mxu0 0.0
        %1887 = vmatpush.xpose.msra.mxu0 0.0
        %1888 = vmatpush.xpose.msra.mxu0 0.0
        %1889 = vmatpush.xpose.msra.mxu0 0.0
        %1890 = vmatpush.xpose.msra.mxu0 0.0
        %1891 = vmatpush.xpose.msra.mxu0 0.0
        %1892 = vmatpush.xpose.msra.mxu0 0.0
        %1893 = vmatpush.xpose.msra.mxu0 0.0
        %1894 = vmatpush.xpose.msra.mxu0 0.0
        %1895 = vmatpush.xpose.msra.mxu0 0.0
        %1896 = vmatpush.xpose.msra.mxu0 0.0
        %1897 = vmatpush.xpose.msra.mxu0 0.0
        %1898 = vmatpush.xpose.msra.mxu0 %v1881
        %1899 = vmatmul.f32.gmra.mxu0 %v1879
        %v1900 = vpop.f32.mrf.mxu0
        %v1901 = vadd.f32 0.0, %v1900
        %1902 = vdwg.mxu0
        %v1903 = vmul.f32 %v1901, 0.5
        %v1904 = vadd.f32 %v1903, %v461
        %v1905 = vsel %vm538, %v1904, -inf
        %1906 = vmax.xlane.f32.xlu0 %v1905
        %v1907 = vpop.xlane.xlu0 %1906
        %v1908 = vsub.f32 %v1904, %v1907
        %v1909 = vmul.f32 %v1908, 1.442695
        %v1910 = vpow.pop %v1909
        %v1911 = vsel %vm538, %v1910, 0.0
        %1912 = vadd.xlane.f32.xlu0 %v1911
        %v1913 = vpop.xlane.xlu0 %1912
        %v1914 = vrcp.pop %v1913
        %v1915 = vmul.f32 %v1910, %v1914
        %1916 = vrot.lane.b32.xlu0 %v1373, 20
        %v1917 = vpop.permute.xlu0 %1916
        %v1920 = vsel %vm538, %v1915, 0
        %1922 = vmatpush.msra.mxu0 0.0
        %1923 = vmatpush.msra.mxu0 0.0
        %1924 = vmatpush.msra.mxu0 0.0
        %1925 = vmatpush.msra.mxu0 0.0
        %1926 = vmatpush.msra.mxu0 0.0
        %1927 = vmatpush.msra.mxu0 0.0
        %1928 = vmatpush.msra.mxu0 0.0
        %1929 = vmatpush.msra.mxu0 0.0
        %1930 = vmatpush.msra.mxu0 0.0
        %1931 = vmatpush.msra.mxu0 0.0
        %1932 = vmatpush.msra.mxu0 0.0
        %1933 = vmatpush.msra.mxu0 0.0
        %1934 = vmatpush.msra.mxu0 0.0
        %1935 = vmatpush.msra.mxu0 0.0
        %1936 = vmatpush.msra.mxu0 0.0
        %1937 = vmatpush.msra.mxu0 %v1917
        %1938 = vmatmul.f32.gmra.mxu0 %v1920
        %v1939 = vpop.f32.mrf.mxu0
        %v1940 = vadd.f32 0.0, %v1939
        %1941 = vdwg.mxu0
        %1943 = vrot.lane.b32.xlu0 %v1940, 28
        %v1944 = vpop.permute.xlu0 %1943
        %1946 = vst.msk [vmem:[#allocation2] sm:$0xff] %vm1086, %v1944
        %1947 = vrot.lane.b32.xlu0 %v1373, 96
        %v1948 = vpop.permute.xlu0 %1947
        %1949 = vrot.lane.b32.xlu0 %v1373, 56
        %v1950 = vpop.permute.xlu0 %1949
        %v1951 = vsel %vm511, %v1948, 0
        %v1953 = vsel %vm511, %v1950, 0
        %1955 = vmatpush.xpose.msra.mxu0 0.0
        %1956 = vmatpush.xpose.msra.mxu0 0.0
        %1957 = vmatpush.xpose.msra.mxu0 0.0
        %1958 = vmatpush.xpose.msra.mxu0 0.0
        %1959 = vmatpush.xpose.msra.mxu0 0.0
        %1960 = vmatpush.xpose.msra.mxu0 0.0
        %1961 = vmatpush.xpose.msra.mxu0 0.0
        %1962 = vmatpush.xpose.msra.mxu0 0.0
        %1963 = vmatpush.xpose.msra.mxu0 0.0
        %1964 = vmatpush.xpose.msra.mxu0 0.0
        %1965 = vmatpush.xpose.msra.mxu0 0.0
        %1966 = vmatpush.xpose.msra.mxu0 0.0
        %1967 = vmatpush.xpose.msra.mxu0 0.0
        %1968 = vmatpush.xpose.msra.mxu0 0.0
        %1969 = vmatpush.xpose.msra.mxu0 0.0
        %1970 = vmatpush.xpose.msra.mxu0 %v1953
        %1971 = vmatmul.f32.gmra.mxu0 %v1951
        %v1972 = vpop.f32.mrf.mxu0
        %v1973 = vadd.f32 0.0, %v1972
        %1974 = vdwg.mxu0
        %v1975 = vmul.f32 %v1973, 0.5
        %v1976 = vadd.f32 %v1975, %v461
        %v1977 = vsel %vm538, %v1976, -inf
        %1978 = vmax.xlane.f32.xlu0 %v1977
        %v1979 = vpop.xlane.xlu0 %1978
        %v1980 = vsub.f32 %v1976, %v1979
        %v1981 = vmul.f32 %v1980, 1.442695
        %v1982 = vpow.pop %v1981
        %v1983 = vsel %vm538, %v1982, 0.0
        %1984 = vadd.xlane.f32.xlu0 %v1983
        %v1985 = vpop.xlane.xlu0 %1984
        %v1986 = vrcp.pop %v1985
        %v1987 = vmul.f32 %v1982, %v1986
        %1988 = vrot.lane.b32.xlu0 %v1373, 16
        %v1989 = vpop.permute.xlu0 %1988
        %v1992 = vsel %vm538, %v1987, 0
        %1994 = vmatpush.msra.mxu0 0.0
        %1995 = vmatpush.msra.mxu0 0.0
        %1996 = vmatpush.msra.mxu0 0.0
        %1997 = vmatpush.msra.mxu0 0.0
        %1998 = vmatpush.msra.mxu0 0.0
        %1999 = vmatpush.msra.mxu0 0.0
        %2000 = vmatpush.msra.mxu0 0.0
        %2001 = vmatpush.msra.mxu0 0.0
        %2002 = vmatpush.msra.mxu0 0.0
        %2003 = vmatpush.msra.mxu0 0.0
        %2004 = vmatpush.msra.mxu0 0.0
        %2005 = vmatpush.msra.mxu0 0.0
        %2006 = vmatpush.msra.mxu0 0.0
        %2007 = vmatpush.msra.mxu0 0.0
        %2008 = vmatpush.msra.mxu0 0.0
        %2009 = vmatpush.msra.mxu0 %v1989
        %2010 = vmatmul.f32.gmra.mxu0 %v1992
        %v2011 = vpop.f32.mrf.mxu0
        %v2012 = vadd.f32 0.0, %v2011
        %2013 = vdwg.mxu0
        %2015 = vrot.lane.b32.xlu0 %v2012, 32
        %v2016 = vpop.permute.xlu0 %2015
        %2018 = vst.msk [vmem:[#allocation2] sm:$0xff] %vm1159, %v2016
        %2019 = vrot.lane.b32.xlu0 %v1373, 92
        %v2020 = vpop.permute.xlu0 %2019
        %2021 = vrot.lane.b32.xlu0 %v1373, 52
        %v2022 = vpop.permute.xlu0 %2021
        %v2023 = vsel %vm511, %v2020, 0
        %v2025 = vsel %vm511, %v2022, 0
        %2027 = vmatpush.xpose.msra.mxu0 0.0
        %2028 = vmatpush.xpose.msra.mxu0 0.0
        %2029 = vmatpush.xpose.msra.mxu0 0.0
        %2030 = vmatpush.xpose.msra.mxu0 0.0
        %2031 = vmatpush.xpose.msra.mxu0 0.0
        %2032 = vmatpush.xpose.msra.mxu0 0.0
        %2033 = vmatpush.xpose.msra.mxu0 0.0
        %2034 = vmatpush.xpose.msra.mxu0 0.0
        %2035 = vmatpush.xpose.msra.mxu0 0.0
        %2036 = vmatpush.xpose.msra.mxu0 0.0
        %2037 = vmatpush.xpose.msra.mxu0 0.0
        %2038 = vmatpush.xpose.msra.mxu0 0.0
        %2039 = vmatpush.xpose.msra.mxu0 0.0
        %2040 = vmatpush.xpose.msra.mxu0 0.0
        %2041 = vmatpush.xpose.msra.mxu0 0.0
        %2042 = vmatpush.xpose.msra.mxu0 %v2025
        %2043 = vmatmul.f32.gmra.mxu0 %v2023
        %v2044 = vpop.f32.mrf.mxu0
        %v2045 = vadd.f32 0.0, %v2044
        %2046 = vdwg.mxu0
        %v2047 = vmul.f32 %v2045, 0.5
        %v2048 = vadd.f32 %v2047, %v461
        %v2049 = vsel %vm538, %v2048, -inf
        %2050 = vmax.xlane.f32.xlu0 %v2049
        %v2051 = vpop.xlane.xlu0 %2050
        %v2052 = vsub.f32 %v2048, %v2051
        %v2053 = vmul.f32 %v2052, 1.442695
        %v2054 = vpow.pop %v2053
        %v2055 = vsel %vm538, %v2054, 0.0
        %2056 = vadd.xlane.f32.xlu0 %v2055
        %v2057 = vpop.xlane.xlu0 %2056
        %v2058 = vrcp.pop %v2057
        %v2059 = vmul.f32 %v2054, %v2058
        %2060 = vrot.lane.b32.xlu0 %v1373, 12
        %v2061 = vpop.permute.xlu0 %2060
        %v2064 = vsel %vm538, %v2059, 0
        %2066 = vmatpush.msra.mxu0 0.0
        %2067 = vmatpush.msra.mxu0 0.0
        %2068 = vmatpush.msra.mxu0 0.0
        %2069 = vmatpush.msra.mxu0 0.0
        %2070 = vmatpush.msra.mxu0 0.0
        %2071 = vmatpush.msra.mxu0 0.0
        %2072 = vmatpush.msra.mxu0 0.0
        %2073 = vmatpush.msra.mxu0 0.0
        %2074 = vmatpush.msra.mxu0 0.0
        %2075 = vmatpush.msra.mxu0 0.0
        %2076 = vmatpush.msra.mxu0 0.0
        %2077 = vmatpush.msra.mxu0 0.0
        %2078 = vmatpush.msra.mxu0 0.0
        %2079 = vmatpush.msra.mxu0 0.0
        %2080 = vmatpush.msra.mxu0 0.0
        %2081 = vmatpush.msra.mxu0 %v2061
        %2082 = vmatmul.f32.gmra.mxu0 %v2064
        %v2083 = vpop.f32.mrf.mxu0
        %v2084 = vadd.f32 0.0, %v2083
        %2085 = vdwg.mxu0
        %2087 = vrot.lane.b32.xlu0 %v2084, 36
        %v2088 = vpop.permute.xlu0 %2087
        %2090 = vst.msk [vmem:[#allocation2] sm:$0xff] %vm1232, %v2088
        %v2091 = vld [vmem:[#allocation2] sm:$0xff]
        %v2092 = vpack.c.bf16 %v2091, %v2091
        %s2093 = scalar_lea.vmem [#allocation13], 20
        %v2094 = vld [vmem:[%s2093] sm:$0xf]
        %v2095 = vld [vmem:[%s2093 + $0x4] sm:$0xf]
        %v2096 = vld [vmem:[%s2093 + $0x8] sm:$0xf]
        %v2097 = vld [vmem:[%s2093 + $0xc] sm:$0xf]
        %v2098 = vld [vmem:[%s2093 + $0x10] sm:$0xf]
        %s2099 = scalar_lea.vmem %s7, 1
        %v2100 = vld [vmem:[%s2099] sm:$0x1]
        %v2102 = vperm.slane %v2100, 0
        %v2109 = vunpack.c.l.b16 %v2094
        %v2110 = vunpack.c.l.b16 %v2095
        %v2111 = vunpack.c.l.b16 %v2096
        %v2112 = vunpack.c.l.b16 %v2097
        %v2113 = vunpack.c.l.b16 %v2098
        %v2114 = vpack.c.b16 %v2110, %v2109
        %v2115 = vpack.c.b16 %v2112, %v2111
        %v2116 = vpack.c.b16 %v2113, %v2113
        %v2120 = vsel %vm487, %v2092, 0
        %v2123 = vsel %vm491, %v2116, 0
        %2125 = vmatpush.bf16.msra.mxu0 0
        %2126 = vmatpush.bf16.msra.mxu0 0
        %2127 = vmatpush.bf16.msra.mxu0 0
        %2128 = vmatpush.bf16.msra.mxu0 0
        %2129 = vmatpush.bf16.msra.mxu0 0
        %2130 = vmatpush.bf16.msra.mxu0 %v2123
        %2131 = vmatpush.bf16.msra.mxu0 %v2115
        %2132 = vmatpush.bf16.msra.mxu0 %v2114
        %2133 = vmatmul.bf16.gmra.mxu0 %v2120
        %v2134 = vpop.f32.mrf.mxu0
        %v2135 = vadd.f32 %v2102, %v2134
        %v2136 = vpop.f32.mrf.mxu0
        %2137 = vdwg.mxu0
        %v2138 = vadd.f32 %v1329, %v2135
        %v2139 = vsel %vm487, %v2138, 0.0
        %2140 = vadd.xlane.f32.xlu0 %v2139
        %v2141 = vpop.xlane.xlu0 %2140
        %v2142 = vrot.slane %v2141, 4
        %v2143 = vadd.f32 %v2141, %v2142
        %v2144 = vrot.slane %v2143, 2
        %v2145 = vadd.f32 %v2143, %v2144
        %v2146 = vrot.slane %v2145, 1
        %v2147 = vadd.f32 %v2145, %v2146
        %s2148 = vtos %v2147
        %s2149 = smul.f32 %s2148, 0.003125
        %v2150 = vstv %s2149
        %v2151 = vsub.f32 %v2138, %v2150
        %v2152 = vmul.f32 %v2151, %v2151
        %v2153 = vsel %vm487, %v2152, 0.0
        %2154 = vadd.xlane.f32.xlu0 %v2153
        %v2155 = vpop.xlane.xlu0 %2154
        %v2156 = vrot.slane %v2155, 4
        %v2157 = vadd.f32 %v2155, %v2156
        %v2158 = vrot.slane %v2157, 2
        %v2159 = vadd.f32 %v2157, %v2158
        %v2160 = vrot.slane %v2159, 1
        %v2161 = vadd.f32 %v2159, %v2160
        %s2162 = vtos %v2161
        %s2163 = smul.f32 %s2162, 0.003125
        %s2164 = sadd.f32 %s2163, 1e-05
        %v2165 = vstv %s2164
        %v2166 = vrsqrt.pop %v2165
        %v2167 = vmul.f32 %v2166, %v2165
        %v2168 = vmul.f32 %v2167, %v2166
        %v2169 = vmul.f32 0.5, %v2168
        %v2170 = vsub.f32 1.5, %v2169
        %v2171 = vmul.f32 %v2166, %v2170
        %vm2172 = vweird.f32 %v2165
        %vm2173 = vweird.f32 %v2166
        %vm2174 = vmor %vm2172, %vm2173
        %v2175 = vsel %vm2174, %v2166, %v2171
        %s2176 = vtos %v2175
        %v2177 = vstv %s2176
        %v2178 = vmul.f32 %v2151, %v2177
        %s2179 = scalar_lea.vmem %s8, 1
        %v2180 = vld [vmem:[%s2179] sm:$0x1]
        %v2182 = vperm.slane %v2180, 0
        %v2184 = vmul.f32 %v2178, %v2182
        %s2185 = scalar_lea.vmem %s9, 1
        %v2186 = vld [vmem:[%s2185] sm:$0x1]
        %v2188 = vperm.slane %v2186, 0
        %v2190 = vadd.f32 %v2184, %v2188
        %v2191 = vtanh.pop %v2190
        %2192 = vst.msk [vmem:[%s422] sm:$0xff] %vm487, %v2191
        %s2193 = sand.u32 %s239, 1
        %s2194 = scalar_lea.sflag [#allocation7], %s2193
        %s2195 = sand.u32 %s239, 1
        %s2196 = smul.addr %s2195, 8
        %s2197 = scalar_lea.vmem [#allocation14], %s2196
        // Predicated region
        $region77: #{tpu_custom_call.1} parent=55 // pred_check
          %p2198 = pneg %p249
        $region78: #{tpu_custom_call.1} parent=55 // pred_check_branch
          %2200 = sbr.rel (%p2198) target = $region80
        $region79: #{tpu_custom_call.1} parent=55 // pred_region
          %2202 = vsyncadd %s2194, 0
          %s2203 = smul.addr %s37, 8
          %s2204 = scalar_lea.hbm %s10, %s2203
          %s2206 = sshll.u32 %s2197, 4
          %s2207 = int_to_ptr.vmem [resolvable:$true] %s2206
          %s2208 = sshll.u32 %s2204, 4
          %s2209 = int_to_ptr.hbm [resolvable:$true] %s2208
          %2211 = dma.vmem_to_hbm [thread:$0]  %s2207, 128, %s2209, %s2194
        $region80: #{tpu_custom_call.1} parent=55 // pred_fallthru
          _
      $region56: #{tpu_custom_call.1} parent=5 // pred_fallthru
        _
      %p2212 = scmp.le.s32.totalorder 2, %s32
      // Predicated region
      $region81: #{tpu_custom_call.1} parent=5 // pred_check
        %p2213 = pneg %p2212
      $region82: #{tpu_custom_call.1} parent=5 // pred_check_branch
        %2215 = sbr.rel (%p2213) target = $region84
      $region83: #{tpu_custom_call.1} parent=5 // pred_region
        %s2216 = ssub.s32 %s32, 2
        // Predicated region
        $region85: #{tpu_custom_call.1} parent=83 // pred_check
          %p2217 = pneg %p255
        $region86: #{tpu_custom_call.1} parent=83 // pred_check_branch
          %2219 = sbr.rel (%p2217) target = $region88
        $region87: #{tpu_custom_call.1} parent=83 // pred_region
          %s2220 = sand.u32 %s240, 1
          %s2221 = scalar_lea.sflag [#allocation7], %s2220
          %s2222 = sand.u32 %s240, 1
          %s2223 = smul.addr %s2222, 8
          %s2224 = scalar_lea.vmem [#allocation14], %s2223
          %2226 = dma.done %s2221, 128
        $region88: #{tpu_custom_call.1} parent=83 // pred_fallthru
          _
      $region84: #{tpu_custom_call.1} parent=5 // pred_fallthru
        _
    $region6: #{tpu_custom_call.1} parent=1 // loop_footer
      %s36 = sadd.s32 1, %s32
    $region7: #{tpu_custom_call.1} parent=1 // loop_footer_branch
      %31 = sbr.rel target = $region3
    $region8: #{tpu_custom_call.1} parent=1 // loop_exit
      _
    %2227 = vsyncpa [#allocation6], 1
    %s2228 = scalar_lea.sflag [#allocation6], 1
    %2229 = vsyncpa %s2228, 1
    %2230 = vsyncpa [#allocation9], 1
    %2231 = vsyncpa [#allocation12], 1
    %2232 = vsyncpa [#allocation7], 1
    %s2233 = scalar_lea.sflag [#allocation7], 1
    %2234 = vsyncpa %s2233, 1

</llo_original>
